<compile_context>
chip_gen: v7x
topology: tpu7x:2x2x1
jax: 0.10.0
libtpu: 0.0.40
codegen_flags: <defaults>
</compile_context>

<pallas_src>
import functools

import jax
import jax.numpy as jnp
from jax.experimental import pallas as pl
from jax.experimental.pallas import tpu as pltpu


def _round_up(x, m):
    return ((x + m - 1) // m) * m


@functools.lru_cache(maxsize=None)
def _sublane_roll_supported():
    """Probe pltpu.roll (XLU) on the sublane axis once; fall back to jnp.roll otherwise."""
    def probe(x_ref, o_ref):
        o_ref[...] = pltpu.roll(x_ref[...], shift=5, axis=0)

    try:
        x = jnp.arange(24 * 128, dtype=jnp.float32).reshape(24, 128)
        y = pl.pallas_call(probe, out_shape=jax.ShapeDtypeStruct((24, 128), jnp.float32))(x)
        return bool(jnp.array_equal(y, jnp.roll(x, 5, axis=0)))
    except Exception:
        return False


# ----------------------------------------------------------------------------
# Fused head kernel for one row tile (one (level, batch) segment, zero-padded):
# cls tower (n_cls masked convs + ReLU) -> vis_proj -> per-row L2 normalize -> cosine
# logits vs CLIP class features (logit_scale baked into clipT); reg tower (n_reg masked
# convs + ReLU) -> offset conv -> per-level Scale -> ReLU.
# ----------------------------------------------------------------------------
def _make_fused_head_kernel(K, n_cls, n_reg, use_tpu_roll):
    P = K // 2
    deltas = [k - P for k in range(K)]

    def kernel(*refs):
        scale_ref, x_ref, mask_ref = refs[0], refs[1], refs[2]
        pos = 3
        cls_wb = refs[pos:pos + 2 * n_cls]; pos += 2 * n_cls
        vis_w, vis_b = refs[pos], refs[pos + 1]; pos += 2
        clipT_ref = refs[pos]; pos += 1
        reg_wb = refs[pos:pos + 2 * n_reg]; pos += 2 * n_reg
        off_w, off_b = refs[pos], refs[pos + 1]; pos += 2
        cls_out_ref, off_out_ref = refs[pos], refs[pos + 1]

        TR = x_ref.shape[0]
        cdt = x_ref.dtype                    # MXU operand dtype (bf16 in production)
        mask = mask_ref[...]                 # (TR, 1) f32; 0 on separator / invalid rows

        def shift_rows(a32, d):
            # result[t] = a32[t + d].  Rows wrapped in from the tile edges are the zero
            # separator/pad rows, so this is exactly SAME zero padding of the segment.
            if d == 0:
                return a32
            if use_tpu_roll:
                return pltpu.roll(a32, shift=(-d) % TR, axis=0)
            return jnp.roll(a32, -d, axis=0)

        def taps(a32):
            return [shift_rows(a32, d) for d in deltas]

        def mconv(a_taps, w_ref, b_ref):
            # MaskedConv1D: K per-tap MXU contractions, f32 accumulate; (conv + bias) * mask.
            acc = jnp.dot(a_taps[0].astype(cdt), w_ref[0],
                          preferred_element_type=jnp.float32)
            for k in range(1, K):
                acc = acc + jnp.dot(a_taps[k].astype(cdt), w_ref[k],
                                    preferred_element_type=jnp.float32)
            return (acc + b_ref[...]) * mask

        x_taps = taps(x_ref[...].astype(jnp.float32))   # shared by both towers' first conv

        # --- classification tower -> vis_proj -> cosine logits ---
        t = x_taps
        for i in range(n_cls):
            c = jnp.maximum(mconv(t, cls_wb[2 * i], cls_wb[2 * i + 1]), 0.0)
            t = taps(c)
        v = mconv(t, vis_w, vis_b)                                          # (TR, F) f32
        inv = jax.lax.rsqrt(jnp.maximum(jnp.sum(v * v, axis=-1, keepdims=True), 1e-24))
        vn = (v * inv).astype(cdt)                                          # F.normalize(dim=C)
        logits = jnp.dot(vn, clipT_ref[...], preferred_element_type=jnp.float32)
        cls_out_ref[...] = (logits * mask).astype(cls_out_ref.dtype)

        # --- regression tower -> offset conv -> Scale -> ReLU ---
        t = x_taps
        for i in range(n_reg):
            r = jnp.maximum(mconv(t, reg_wb[2 * i], reg_wb[2 * i + 1]), 0.0)
            t = taps(r)
        off = mconv(t, off_w, off_b)                                        # (TR, OCp) f32
        sc = scale_ref[pl.program_id(0)]                                    # per-(level,batch) Scale()
        off_out_ref[...] = jnp.maximum(off * sc, 0.0).astype(off_out_ref.dtype)

    return kernel


# ----------------------------------------------------------------------------
# PtTransformer forward (head path).  Backbone outputs are taken as inputs.
# feats_V / feats_A: lists of (B, T_l, embd_dim); masks: list of (B, T_l, 1) bool.
# ----------------------------------------------------------------------------
def pt_transformer_forward(params, feats_V, feats_A, masks, task_id,
                           compute_dtype=jnp.bfloat16):
    # feats_AV = [torch.cat((V, A), 1)] -> channel concat in (B, T, C) layout
    feats_AV = [jnp.concatenate([V, A], axis=-1) for V, A in zip(feats_V, feats_A)]
    cls_p, reg_p = params["cls"], params["reg"]
    cdt = compute_dtype

    B = feats_AV[0].shape[0]
    L = len(feats_AV)
    Ts = [int(f.shape[1]) for f in feats_AV]
    Cin = feats_AV[0].shape[-1]
    K = cls_p["head"][0][0].shape[0]
    P = K // 2
    F_ = cls_p["vis_w"].shape[-1]
    n_cls, n_reg = len(cls_p["head"]), len(reg_p["head"])

    # --- CLIP class features: clip_proj Linear + F.normalize.  Tiny, once per forward. ---
    cf = params["clip_class_feature"][task_id].astype(jnp.float32)
    y = cf @ cls_p["clip_w"].astype(jnp.float32) + cls_p["clip_b"].astype(jnp.float32)
    clip_feat = y / jnp.maximum(jnp.linalg.norm(y, axis=-1, keepdims=True), 1e-12)   # (NC, F)
    NC = clip_feat.shape[0]
    ls = jnp.exp(cls_p["logit_scale"]).astype(jnp.float32)

    class_aware = params["class_aware"][task_id]
    n_classes = params["num_classes"][task_id]
    off_w_t = reg_p["off_w"][task_id]
    off_b_t = reg_p["off_b"][task_id]
    OC = off_w_t.shape[-1]

    # Lane-padded output widths -> unmasked full-lane stores; wrapper slices padding off.
    NCp = max(128, _round_up(NC, 128))
    OCp = max(128, _round_up(OC, 128))

    # --- pack: one (level, batch) segment per row tile, P zero rows on each side, so conv
    #     halos never cross tile edges and the grid can be fully "parallel".  One pad, one
    #     concat and one reshape total (no per-segment XLA ops). ---
    TR = _round_up(max(Ts) + 2 * P, 8)
    n_tiles = L * B
    x_lv, m_lv = [], []
    for l in range(L):
        pad = ((0, 0), (P, TR - Ts[l] - P), (0, 0))
        x_lv.append(jnp.pad(feats_AV[l].astype(cdt), pad))
        m_lv.append(jnp.pad(masks[l].astype(jnp.float32), pad))
    x_pack = jnp.concatenate(x_lv, axis=0).reshape(n_tiles * TR, Cin)
    m_pack = jnp.concatenate(m_lv, axis=0).reshape(n_tiles * TR, 1)
    # Per-tile Scale() parameter (tile i = l * B + b) -> scalar-prefetched into SMEM.
    scales = jnp.repeat(jnp.stack([s.astype(jnp.float32) for s in reg_p["scale"]]), B)

    # --- weights: per-tap (K, Cin, Cout) layout, biases (1, Cout) f32; narrow heads padded ---
    def wcast(w):
        return w.astype(cdt)

    def bias(b, width=None):
        b = b.reshape(1, -1).astype(jnp.float32)
        if width is not None and b.shape[-1] != width:
            b = jnp.zeros((1, width), jnp.float32).at[:, :b.shape[-1]].set(b)
        return b

    weight_args = []
    for w, b in cls_p["head"]:
        weight_args += [wcast(w), bias(b)]
    weight_args += [wcast(cls_p["vis_w"]), bias(cls_p["vis_b"])]
    clipT = jnp.zeros((F_, NCp), jnp.float32).at[:, :NC].set(ls * clip_feat.T).astype(cdt)
    weight_args.append(clipT)                      # logit_scale baked in -> no extra pass
    for w, b in reg_p["head"]:
        weight_args += [wcast(w), bias(b)]
    off_w_p = jnp.zeros((K, F_, OCp), jnp.float32).at[..., :OC].set(
        off_w_t.astype(jnp.float32)).astype(cdt)
    weight_args += [off_w_p, bias(off_b_t, OCp)]

    # --- BlockSpecs: x/mask/outputs stream one row tile per grid step; weights have a
    #     constant index_map so they are DMA'd once and stay VMEM-resident. ---
    def tile_map(i, _scales):
        return (i, 0)

    def const_map(ndim):
        zeros = (0,) * ndim
        def idx(i, _scales):
            return zeros
        return idx

    in_specs = [pl.BlockSpec((TR, Cin), tile_map),
                pl.BlockSpec((TR, 1), tile_map)]
    for w in weight_args:
        in_specs.append(pl.BlockSpec(w.shape, const_map(w.ndim)))
    out_specs = (pl.BlockSpec((TR, NCp), tile_map),
                 pl.BlockSpec((TR, OCp), tile_map))

    # --- cost estimate + VMEM sizing from the real per-tile footprint ---
    R_total = n_tiles * TR
    itemsize = jnp.dtype(cdt).itemsize
    flops = 2 * R_total * F_ * NCp
    ci = Cin
    for _ in range(n_cls):
        flops += 2 * R_total * K * ci * F_
        ci = F_
    flops += 2 * R_total * K * F_ * F_
    ci = Cin
    for _ in range(n_reg):
        flops += 2 * R_total * K * ci * F_
        ci = F_
    flops += 2 * R_total * K * F_ * OCp
    weight_bytes = sum(int(w.size) * w.dtype.itemsize for w in weight_args)
    io_bytes = (int(x_pack.size) * itemsize + int(m_pack.size) * 4 + int(scales.size) * 4
                + weight_bytes + R_total * (NCp + OCp) * 4)
    cost = pl.CostEstimate(flops=int(flops), transcendentals=int(R_total),
                           bytes_accessed=int(io_bytes))
    work_bytes = (K + 6) * TR * max(Cin, F_, NCp, OCp) * 4
    est = (weight_bytes + 2 * (TR * Cin * itemsize + TR * 4)
           + 2 * TR * (NCp + OCp) * 4 + work_bytes + (8 << 20))
    vmem_limit = int(min(max(est, 32 << 20), 96 << 20))

    kernel = _make_fused_head_kernel(K, n_cls, n_reg, _sublane_roll_supported())
    cls_full, off_full = pl.pallas_call(
        kernel,
        out_shape=(jax.ShapeDtypeStruct((R_total, NCp), jnp.float32),
                   jax.ShapeDtypeStruct((R_total, OCp), jnp.float32)),
        grid_spec=pltpu.PrefetchScalarGridSpec(
            num_scalar_prefetch=1,
            grid=(n_tiles,),
            in_specs=in_specs,
            out_specs=out_specs),
        compiler_params=pltpu.CompilerParams(
            dimension_semantics=("parallel",),
            vmem_limit_bytes=vmem_limit),
        cost_estimate=cost,
    )(scales, x_pack, m_pack, *weight_args)

    # --- unpack: one reshape + one slice per level (a level's segments are contiguous) ---
    cls_full = cls_full.reshape(L, B, TR, NCp)
    off_full = off_full.reshape(L, B, TR, OCp)
    out_cls_logits, out_offsets, fpn_masks = [], [], []
    for l in range(L):
        T_l = Ts[l]
        out_cls_logits.append(cls_full[l, :, P:P + T_l, :NC])               # (B, T_l, NC)
        off_lb = off_full[l, :, P:P + T_l, :OC]                             # (B, T_l, OC)
        if class_aware:
            # TODO(synk): verify (class-major, (start,end)-minor) ordering vs PyTorch .view.
            off_lb = off_lb.reshape(B, T_l, n_classes, -1)
        out_offsets.append(off_lb)
        fpn_masks.append(masks[l][..., 0])                                  # (B, T_l) bool

    # TODO(synk): training losses (sigmoid focal + ctr DIoU) and NMS inference omitted.
    return tuple(out_cls_logits), tuple(out_offsets), fpn_masks


# ----------------------------------------------------------------------------
# Pure-JAX reference (independent of the Pallas path) for a correctness check.
# ----------------------------------------------------------------------------
def _ref_masked_conv(x, mask_f, w, b, scale=1.0, relu=False):
    out = jax.lax.conv_general_dilated(
        x, w, window_strides=(1,), padding="SAME",
        dimension_numbers=("NHC", "HIO", "NHC"))
    out = (out + b) * mask_f * scale
    return jnp.maximum(out, 0.0) if relu else out


def _ref_forward(params, feats_V, feats_A, masks, task_id):
    feats_AV = [jnp.concatenate([V, A], axis=-1) for V, A in zip(feats_V, feats_A)]
    dtype = feats_AV[0].dtype
    cls_p, reg_p = params["cls"], params["reg"]
    cf = params["clip_class_feature"][task_id].astype(dtype)
    y = cf @ cls_p["clip_w"] + cls_p["clip_b"]
    y = y / jnp.maximum(jnp.linalg.norm(y, axis=-1, keepdims=True), 1e-12)
    ls = jnp.exp(cls_p["logit_scale"])
    out_cls, out_off = [], []
    for l, (x, m) in enumerate(zip(feats_AV, masks)):
        mf = m.astype(dtype)
        c = x
        for w, b in cls_p["head"]:
            c = _ref_masked_conv(c, mf, w, b, relu=True)
        c = _ref_masked_conv(c, mf, cls_p["vis_w"], cls_p["vis_b"])
        cn = c / jnp.maximum(jnp.linalg.norm(c, axis=-1, keepdims=True), 1e-12)
        out_cls.append((ls * cn @ y.T) * mf)
        r = x
        for w, b in reg_p["head"]:
            r = _ref_masked_conv(r, mf, w, b, relu=True)
        out_off.append(_ref_masked_conv(r, mf, reg_p["off_w"][task_id], reg_p["off_b"][task_id],
                                        scale=reg_p["scale"][l], relu=True))
    return out_cls, out_off


# ----------------------------------------------------------------------------
# Deterministic parameter / input construction and driver.
# ----------------------------------------------------------------------------
def make_params(key, *, in_dim, feat_dim, clip_dim, num_classes, num_layers, K, n_levels,
                task_id, class_aware):
    keys = iter(jax.random.split(key, 32))

    def nrm(shape, s=0.05):
        return (s * jax.random.normal(next(keys), shape)).astype(jnp.float32)

    cls_head, reg_head = [], []
    for idx in range(num_layers - 1):
        ci = in_dim if idx == 0 else feat_dim
        cls_head.append((nrm((K, ci, feat_dim)), nrm((feat_dim,))))
        reg_head.append((nrm((K, ci, feat_dim)), nrm((feat_dim,))))

    off_c = 2 * num_classes if class_aware else 2
    params = {
        "cls": {
            "head": cls_head,
            "vis_w": nrm((K, feat_dim, feat_dim)), "vis_b": nrm((feat_dim,)),
            "clip_w": nrm((clip_dim, feat_dim)), "clip_b": nrm((feat_dim,)),
            "logit_scale": jnp.asarray(jnp.log(1.0 / 0.07), jnp.float32),
        },
        "reg": {
            "head": reg_head,
            "off_w": {task_id: nrm((K, feat_dim, off_c))},
            "off_b": {task_id: nrm((off_c,))},
            # Scale() is learnable; use non-default values to exercise the per-level path.
            "scale": [jnp.asarray(1.0 + 0.25 * i, jnp.float32) for i in range(n_levels)],
        },
        "clip_class_feature": {task_id: nrm((num_classes, clip_dim), s=1.0)},
        "class_aware": {task_id: class_aware},
        "num_classes": {task_id: num_classes},
    }
    return params


if __name__ == "__main__":
    B = 2
    embd_dim = 32          # backbone embedding dim per modality -> AV concat dim = 64
    head_dim = 32
    clip_dim = 64
    num_classes = 10
    num_layers = 3
    K = 3
    Ts = [16, 8]           # 2 FPN levels (backbone_arch[-1] = 1, scale_factor = 2)
    task_id = "task_a"

    key = jax.random.PRNGKey(0)
    kp, kv, ka = jax.random.split(key, 3)
    params = make_params(kp, in_dim=2 * embd_dim, feat_dim=head_dim, clip_dim=clip_dim,
                         num_classes=num_classes, num_layers=num_layers, K=K,
                         n_levels=len(Ts), task_id=task_id, class_aware=False)

    # Synthetic backbone outputs, generated in the PyTorch NCT convention and transposed
    # to the kernel's (B, T, C) layout.
    feats_V, feats_A, masks = [], [], []
    valid_lens = [[16, 12], [8, 6]]
    for li, T in enumerate(Ts):
        kv, k1 = jax.random.split(kv)
        ka, k2 = jax.random.split(ka)
        v_nct = jax.random.normal(k1, (B, embd_dim, T), jnp.float32)
        a_nct = jax.random.normal(k2, (B, embd_dim, T), jnp.float32)
        feats_V.append(jnp.transpose(v_nct, (0, 2, 1)))                 # (B, T, C)
        feats_A.append(jnp.transpose(a_nct, (0, 2, 1)))
        lens = jnp.asarray(valid_lens[li])[:, None]                     # (B, 1)
        m = (jnp.arange(T)[None, :] < lens)[:, :, None]                 # (B, T, 1) bool
        masks.append(m)

    # f32 compute path: exact check against the pure-JAX reference.
    out_cls, out_off, fpn_masks = pt_transformer_forward(
        params, feats_V, feats_A, masks, task_id, compute_dtype=jnp.float32)
    jax.block_until_ready(out_cls)
    jax.block_until_ready(out_off)

    for li, T in enumerate(Ts):
        assert out_cls[li].shape == (B, T, num_classes)
        assert out_off[li].shape == (B, T, 2)
        assert fpn_masks[li].shape == (B, T)

    ref_cls, ref_off = _ref_forward(params, feats_V, feats_A, masks, task_id)
    for li in range(len(Ts)):
        assert jnp.allclose(out_cls[li], ref_cls[li], rtol=1e-4, atol=2e-4)
        assert jnp.allclose(out_off[li], ref_off[li], rtol=1e-4, atol=2e-4)

    # bf16 MXU-operand path (production setting): loose check vs the f32 reference.
    out_cls_bf, out_off_bf, _ = pt_transformer_forward(
        params, feats_V, feats_A, masks, task_id, compute_dtype=jnp.bfloat16)
    jax.block_until_ready(out_cls_bf)
    jax.block_until_ready(out_off_bf)
    for li in range(len(Ts)):
        assert jnp.allclose(out_cls_bf[li], ref_cls[li], rtol=0.05, atol=1.0)
        assert jnp.allclose(out_off_bf[li], ref_off[li], rtol=0.05, atol=0.25)

    print("KERNEL_OK")
</pallas_src>

<mosaic_0001>
module attributes {stable_mosaic.version = 11 : i64} {
  func.func @probe(%arg0: memref<24x128xf32, #tpu.memory_space<vmem>>, %arg1: memref<24x128xf32, #tpu.memory_space<vmem>>) attributes {dimension_semantics = [], scalar_prefetch = 0 : i64, scratch_operands = 0 : i64, tpu.core_type = #tpu.core_type<tc>} {
    %c0 = arith.constant 0 : index
    %c0_0 = arith.constant 0 : index
    %0 = vector.load %arg0[%c0, %c0_0] : memref<24x128xf32, #tpu.memory_space<vmem>>, vector<24x128xf32>
    %c5_i32 = arith.constant 5 : i32
    %1 = tpu.dynamic_rotate %0 by %c5_i32 dim 0 : vector<24x128xf32>, i32 -> vector<24x128xf32>
    %c0_1 = arith.constant 0 : index
    %c0_2 = arith.constant 0 : index
    %2 = vector.load %arg1[%c0_1, %c0_2] : memref<24x128xf32, #tpu.memory_space<vmem>>, vector<24x128xf32>
    tpu.vector_store %arg1[%c0_1, %c0_2], %1 {strides = array<i32>} : memref<24x128xf32, #tpu.memory_space<vmem>>, vector<24x128xf32>,
    return
  }
}

module attributes {stable_mosaic.version = 11 : i64} {
  func.func @kernel(%arg0: i32, %arg1: memref<4xf32, #tpu.memory_space<smem>>, %arg2: memref<24x64xf32, #tpu.memory_space<vmem>>, %arg3: memref<24x1xf32, #tpu.memory_space<vmem>>, %arg4: memref<3x64x32xf32, #tpu.memory_space<vmem>>, %arg5: memref<1x32xf32, #tpu.memory_space<vmem>>, %arg6: memref<3x32x32xf32, #tpu.memory_space<vmem>>, %arg7: memref<1x32xf32, #tpu.memory_space<vmem>>, %arg8: memref<3x32x32xf32, #tpu.memory_space<vmem>>, %arg9: memref<1x32xf32, #tpu.memory_space<vmem>>, %arg10: memref<32x128xf32, #tpu.memory_space<vmem>>, %arg11: memref<3x64x32xf32, #tpu.memory_space<vmem>>, %arg12: memref<1x32xf32, #tpu.memory_space<vmem>>, %arg13: memref<3x32x32xf32, #tpu.memory_space<vmem>>, %arg14: memref<1x32xf32, #tpu.memory_space<vmem>>, %arg15: memref<3x32x128xf32, #tpu.memory_space<vmem>>, %arg16: memref<1x128xf32, #tpu.memory_space<vmem>>, %arg17: memref<24x128xf32, #tpu.memory_space<vmem>>, %arg18: memref<24x128xf32, #tpu.memory_space<vmem>>) attributes {dimension_semantics = [#tpu.dimension_semantics<parallel>], iteration_bounds = array<i64: 4>, scalar_prefetch = 1 : i64, scratch_operands = 0 : i64, tpu.core_type = #tpu.core_type<tc>, window_params = [{transform_indices = @transform_0, window_bounds = array<i64: 24, 64>}, {transform_indices = @transform_1, window_bounds = array<i64: 24, 1>}, {pipeline_mode = #tpu.pipeline_mode<synchronous>, transform_indices = @transform_2, window_bounds = array<i64: 3, 64, 32>}, {pipeline_mode = #tpu.pipeline_mode<synchronous>, transform_indices = @transform_3, window_bounds = array<i64: 1, 32>}, {pipeline_mode = #tpu.pipeline_mode<synchronous>, transform_indices = @transform_4, window_bounds = array<i64: 3, 32, 32>}, {pipeline_mode = #tpu.pipeline_mode<synchronous>, transform_indices = @transform_5, window_bounds = array<i64: 1, 32>}, {pipeline_mode = #tpu.pipeline_mode<synchronous>, transform_indices = @transform_6, window_bounds = array<i64: 3, 32, 32>}, {pipeline_mode = #tpu.pipeline_mode<synchronous>, transform_indices = @transform_7, window_bounds = array<i64: 1, 32>}, {pipeline_mode = #tpu.pipeline_mode<synchronous>, transform_indices = @transform_8, window_bounds = array<i64: 32, 128>}, {pipeline_mode = #tpu.pipeline_mode<synchronous>, transform_indices = @transform_9, window_bounds = array<i64: 3, 64, 32>}, {pipeline_mode = #tpu.pipeline_mode<synchronous>, transform_indices = @transform_10, window_bounds = array<i64: 1, 32>}, {pipeline_mode = #tpu.pipeline_mode<synchronous>, transform_indices = @transform_11, window_bounds = array<i64: 3, 32, 32>}, {pipeline_mode = #tpu.pipeline_mode<synchronous>, transform_indices = @transform_12, window_bounds = array<i64: 1, 32>}, {pipeline_mode = #tpu.pipeline_mode<synchronous>, transform_indices = @transform_13, window_bounds = array<i64: 3, 32, 128>}, {pipeline_mode = #tpu.pipeline_mode<synchronous>, transform_indices = @transform_14, window_bounds = array<i64: 1, 128>}, {transform_indices = @transform_15, window_bounds = array<i64: 24, 128>}, {transform_indices = @transform_16, window_bounds = array<i64: 24, 128>}]} {
    %c0 = arith.constant 0 : index
    %c0_0 = arith.constant 0 : index
    %0 = vector.load %arg3[%c0, %c0_0] : memref<24x1xf32, #tpu.memory_space<vmem>>, vector<24x1xf32>
    %c0_1 = arith.constant 0 : index
    %c0_2 = arith.constant 0 : index
    %1 = vector.load %arg2[%c0_1, %c0_2] : memref<24x64xf32, #tpu.memory_space<vmem>>, vector<24x64xf32>
    %2 = vector.extract_strided_slice %1 {offsets = [23, 0], sizes = [1, 64], strides = [1, 1]} : vector<24x64xf32> to vector<1x64xf32>
    %3 = vector.extract_strided_slice %1 {offsets = [0, 0], sizes = [23, 64], strides = [1, 1]} : vector<24x64xf32> to vector<23x64xf32>
    %4 = tpu.concatenate %2, %3 in 0 : vector<1x64xf32>, vector<23x64xf32> -> vector<24x64xf32>
    %5 = vector.extract_strided_slice %1 {offsets = [1, 0], sizes = [23, 64], strides = [1, 1]} : vector<24x64xf32> to vector<23x64xf32>
    %6 = vector.extract_strided_slice %1 {offsets = [0, 0], sizes = [1, 64], strides = [1, 1]} : vector<24x64xf32> to vector<1x64xf32>
    %7 = tpu.concatenate %5, %6 in 0 : vector<23x64xf32>, vector<1x64xf32> -> vector<24x64xf32>
    %c0_3 = arith.constant 0 : index
    %c0_4 = arith.constant 0 : index
    %c0_5 = arith.constant 0 : index
    %8 = vector.load %arg4[%c0_3, %c0_4, %c0_5] : memref<3x64x32xf32, #tpu.memory_space<vmem>>, vector<1x64x32xf32>
    %9 = vector.shape_cast %8 : vector<1x64x32xf32> to vector<64x32xf32>
    %cst = arith.constant dense<0.000000e+00> : vector<24x32xf32>
    %10 = tpu.matmul %4, %9, %cst {dimension_numbers = #tpu.dot_dimension_numbers<[1], [0], [0], [1], [0, 0, 1, 1], [], []>} : vector<24x64xf32>, vector<64x32xf32>, vector<24x32xf32> -> vector<24x32xf32>
    %c1 = arith.constant 1 : index
    %c0_6 = arith.constant 0 : index
    %c0_7 = arith.constant 0 : index
    %11 = vector.load %arg4[%c1, %c0_6, %c0_7] : memref<3x64x32xf32, #tpu.memory_space<vmem>>, vector<1x64x32xf32>
    %12 = vector.shape_cast %11 : vector<1x64x32xf32> to vector<64x32xf32>
    %cst_8 = arith.constant dense<0.000000e+00> : vector<24x32xf32>
    %13 = tpu.matmul %1, %12, %cst_8 {dimension_numbers = #tpu.dot_dimension_numbers<[1], [0], [0], [1], [0, 0, 1, 1], [], []>} : vector<24x64xf32>, vector<64x32xf32>, vector<24x32xf32> -> vector<24x32xf32>
    %14 = arith.addf %10, %13 : vector<24x32xf32>
    %c2 = arith.constant 2 : index
    %c0_9 = arith.constant 0 : index
    %c0_10 = arith.constant 0 : index
    %15 = vector.load %arg4[%c2, %c0_9, %c0_10] : memref<3x64x32xf32, #tpu.memory_space<vmem>>, vector<1x64x32xf32>
    %16 = vector.shape_cast %15 : vector<1x64x32xf32> to vector<64x32xf32>
    %cst_11 = arith.constant dense<0.000000e+00> : vector<24x32xf32>
    %17 = tpu.matmul %7, %16, %cst_11 {dimension_numbers = #tpu.dot_dimension_numbers<[1], [0], [0], [1], [0, 0, 1, 1], [], []>} : vector<24x64xf32>, vector<64x32xf32>, vector<24x32xf32> -> vector<24x32xf32>
    %18 = arith.addf %14, %17 : vector<24x32xf32>
    %c0_12 = arith.constant 0 : index
    %c0_13 = arith.constant 0 : index
    %19 = vector.load %arg5[%c0_12, %c0_13] : memref<1x32xf32, #tpu.memory_space<vmem>>, vector<1x32xf32>
    %20 = vector.broadcast %19 : vector<1x32xf32> to vector<24x32xf32>
    %21 = arith.addf %18, %20 : vector<24x32xf32>
    %22 = vector.broadcast %0 : vector<24x1xf32> to vector<24x32xf32>
    %23 = arith.mulf %21, %22 : vector<24x32xf32>
    %cst_14 = arith.constant 0.000000e+00 : f32
    %24 = vector.broadcast %cst_14 : f32 to vector<24x32xf32>
    %25 = arith.maximumf %23, %24 : vector<24x32xf32>
    %26 = vector.extract_strided_slice %25 {offsets = [23, 0], sizes = [1, 32], strides = [1, 1]} : vector<24x32xf32> to vector<1x32xf32>
    %27 = vector.extract_strided_slice %25 {offsets = [0, 0], sizes = [23, 32], strides = [1, 1]} : vector<24x32xf32> to vector<23x32xf32>
    %28 = tpu.concatenate %26, %27 in 0 : vector<1x32xf32>, vector<23x32xf32> -> vector<24x32xf32>
    %29 = vector.extract_strided_slice %25 {offsets = [1, 0], sizes = [23, 32], strides = [1, 1]} : vector<24x32xf32> to vector<23x32xf32>
    %30 = vector.extract_strided_slice %25 {offsets = [0, 0], sizes = [1, 32], strides = [1, 1]} : vector<24x32xf32> to vector<1x32xf32>
    %31 = tpu.concatenate %29, %30 in 0 : vector<23x32xf32>, vector<1x32xf32> -> vector<24x32xf32>
    %c0_15 = arith.constant 0 : index
    %c0_16 = arith.constant 0 : index
    %c0_17 = arith.constant 0 : index
    %32 = vector.load %arg6[%c0_15, %c0_16, %c0_17] : memref<3x32x32xf32, #tpu.memory_space<vmem>>, vector<1x32x32xf32>
    %33 = vector.shape_cast %32 : vector<1x32x32xf32> to vector<32x32xf32>
    %cst_18 = arith.constant dense<0.000000e+00> : vector<24x32xf32>
    %34 = tpu.matmul %28, %33, %cst_18 {dimension_numbers = #tpu.dot_dimension_numbers<[1], [0], [0], [1], [0, 0, 1, 1], [], []>} : vector<24x32xf32>, vector<32x32xf32>, vector<24x32xf32> -> vector<24x32xf32>
    %c1_19 = arith.constant 1 : index
    %c0_20 = arith.constant 0 : index
    %c0_21 = arith.constant 0 : index
    %35 = vector.load %arg6[%c1_19, %c0_20, %c0_21] : memref<3x32x32xf32, #tpu.memory_space<vmem>>, vector<1x32x32xf32>
    %36 = vector.shape_cast %35 : vector<1x32x32xf32> to vector<32x32xf32>
    %cst_22 = arith.constant dense<0.000000e+00> : vector<24x32xf32>
    %37 = tpu.matmul %25, %36, %cst_22 {dimension_numbers = #tpu.dot_dimension_numbers<[1], [0], [0], [1], [0, 0, 1, 1], [], []>} : vector<24x32xf32>, vector<32x32xf32>, vector<24x32xf32> -> vector<24x32xf32>
    %38 = arith.addf %34, %37 : vector<24x32xf32>
    %c2_23 = arith.constant 2 : index
    %c0_24 = arith.constant 0 : index
    %c0_25 = arith.constant 0 : index
    %39 = vector.load %arg6[%c2_23, %c0_24, %c0_25] : memref<3x32x32xf32, #tpu.memory_space<vmem>>, vector<1x32x32xf32>
    %40 = vector.shape_cast %39 : vector<1x32x32xf32> to vector<32x32xf32>
    %cst_26 = arith.constant dense<0.000000e+00> : vector<24x32xf32>
    %41 = tpu.matmul %31, %40, %cst_26 {dimension_numbers = #tpu.dot_dimension_numbers<[1], [0], [0], [1], [0, 0, 1, 1], [], []>} : vector<24x32xf32>, vector<32x32xf32>, vector<24x32xf32> -> vector<24x32xf32>
    %42 = arith.addf %38, %41 : vector<24x32xf32>
    %c0_27 = arith.constant 0 : index
    %c0_28 = arith.constant 0 : index
    %43 = vector.load %arg7[%c0_27, %c0_28] : memref<1x32xf32, #tpu.memory_space<vmem>>, vector<1x32xf32>
    %44 = vector.broadcast %43 : vector<1x32xf32> to vector<24x32xf32>
    %45 = arith.addf %42, %44 : vector<24x32xf32>
    %46 = vector.broadcast %0 : vector<24x1xf32> to vector<24x32xf32>
    %47 = arith.mulf %45, %46 : vector<24x32xf32>
    %cst_29 = arith.constant 0.000000e+00 : f32
    %48 = vector.broadcast %cst_29 : f32 to vector<24x32xf32>
    %49 = arith.maximumf %47, %48 : vector<24x32xf32>
    %50 = vector.extract_strided_slice %49 {offsets = [23, 0], sizes = [1, 32], strides = [1, 1]} : vector<24x32xf32> to vector<1x32xf32>
    %51 = vector.extract_strided_slice %49 {offsets = [0, 0], sizes = [23, 32], strides = [1, 1]} : vector<24x32xf32> to vector<23x32xf32>
    %52 = tpu.concatenate %50, %51 in 0 : vector<1x32xf32>, vector<23x32xf32> -> vector<24x32xf32>
    %53 = vector.extract_strided_slice %49 {offsets = [1, 0], sizes = [23, 32], strides = [1, 1]} : vector<24x32xf32> to vector<23x32xf32>
    %54 = vector.extract_strided_slice %49 {offsets = [0, 0], sizes = [1, 32], strides = [1, 1]} : vector<24x32xf32> to vector<1x32xf32>
    %55 = tpu.concatenate %53, %54 in 0 : vector<23x32xf32>, vector<1x32xf32> -> vector<24x32xf32>
    %c0_30 = arith.constant 0 : index
    %c0_31 = arith.constant 0 : index
    %c0_32 = arith.constant 0 : index
    %56 = vector.load %arg8[%c0_30, %c0_31, %c0_32] : memref<3x32x32xf32, #tpu.memory_space<vmem>>, vector<1x32x32xf32>
    %57 = vector.shape_cast %56 : vector<1x32x32xf32> to vector<32x32xf32>
    %cst_33 = arith.constant dense<0.000000e+00> : vector<24x32xf32>
    %58 = tpu.matmul %52, %57, %cst_33 {dimension_numbers = #tpu.dot_dimension_numbers<[1], [0], [0], [1], [0, 0, 1, 1], [], []>} : vector<24x32xf32>, vector<32x32xf32>, vector<24x32xf32> -> vector<24x32xf32>
    %c1_34 = arith.constant 1 : index
    %c0_35 = arith.constant 0 : index
    %c0_36 = arith.constant 0 : index
    %59 = vector.load %arg8[%c1_34, %c0_35, %c0_36] : memref<3x32x32xf32, #tpu.memory_space<vmem>>, vector<1x32x32xf32>
    %60 = vector.shape_cast %59 : vector<1x32x32xf32> to vector<32x32xf32>
    %cst_37 = arith.constant dense<0.000000e+00> : vector<24x32xf32>
    %61 = tpu.matmul %49, %60, %cst_37 {dimension_numbers = #tpu.dot_dimension_numbers<[1], [0], [0], [1], [0, 0, 1, 1], [], []>} : vector<24x32xf32>, vector<32x32xf32>, vector<24x32xf32> -> vector<24x32xf32>
    %62 = arith.addf %58, %61 : vector<24x32xf32>
    %c2_38 = arith.constant 2 : index
    %c0_39 = arith.constant 0 : index
    %c0_40 = arith.constant 0 : index
    %63 = vector.load %arg8[%c2_38, %c0_39, %c0_40] : memref<3x32x32xf32, #tpu.memory_space<vmem>>, vector<1x32x32xf32>
    %64 = vector.shape_cast %63 : vector<1x32x32xf32> to vector<32x32xf32>
    %cst_41 = arith.constant dense<0.000000e+00> : vector<24x32xf32>
    %65 = tpu.matmul %55, %64, %cst_41 {dimension_numbers = #tpu.dot_dimension_numbers<[1], [0], [0], [1], [0, 0, 1, 1], [], []>} : vector<24x32xf32>, vector<32x32xf32>, vector<24x32xf32> -> vector<24x32xf32>
    %66 = arith.addf %62, %65 : vector<24x32xf32>
    %c0_42 = arith.constant 0 : index
    %c0_43 = arith.constant 0 : index
    %67 = vector.load %arg9[%c0_42, %c0_43] : memref<1x32xf32, #tpu.memory_space<vmem>>, vector<1x32xf32>
    %68 = vector.broadcast %67 : vector<1x32xf32> to vector<24x32xf32>
    %69 = arith.addf %66, %68 : vector<24x32xf32>
    %70 = vector.broadcast %0 : vector<24x1xf32> to vector<24x32xf32>
    %71 = arith.mulf %69, %70 : vector<24x32xf32>
    %72 = arith.mulf %71, %71 : vector<24x32xf32>
    %cst_44 = arith.constant dense<0.000000e+00> : vector<24xf32>
    %73 = vector.multi_reduction <add>, %72, %cst_44 [1] : vector<24x32xf32> to vector<24xf32>
    %74 = vector.shape_cast %73 : vector<24xf32> to vector<24x1xf32>
    %cst_45 = arith.constant 1.000000e-24 : f32
    %75 = vector.broadcast %cst_45 : f32 to vector<24x1xf32>
    %76 = arith.maximumf %74, %75 : vector<24x1xf32>
    %77 = math.rsqrt %76 : vector<24x1xf32>
    %78 = vector.broadcast %77 : vector<24x1xf32> to vector<24x32xf32>
    %79 = arith.mulf %71, %78 : vector<24x32xf32>
    %c0_46 = arith.constant 0 : index
    %c0_47 = arith.constant 0 : index
    %80 = vector.load %arg10[%c0_46, %c0_47] : memref<32x128xf32, #tpu.memory_space<vmem>>, vector<32x128xf32>
    %cst_48 = arith.constant dense<0.000000e+00> : vector<24x128xf32>
    %81 = tpu.matmul %79, %80, %cst_48 {dimension_numbers = #tpu.dot_dimension_numbers<[1], [0], [0], [1], [0, 0, 1, 1], [], []>} : vector<24x32xf32>, vector<32x128xf32>, vector<24x128xf32> -> vector<24x128xf32>
    %82 = vector.broadcast %0 : vector<24x1xf32> to vector<24x128xf32>
    %83 = arith.mulf %81, %82 : vector<24x128xf32>
    %c0_49 = arith.constant 0 : index
    %c0_50 = arith.constant 0 : index
    %84 = vector.load %arg17[%c0_49, %c0_50] : memref<24x128xf32, #tpu.memory_space<vmem>>, vector<24x128xf32>
    tpu.vector_store %arg17[%c0_49, %c0_50], %83 {strides = array<i32>} : memref<24x128xf32, #tpu.memory_space<vmem>>, vector<24x128xf32>,
    %c0_51 = arith.constant 0 : index
    %c0_52 = arith.constant 0 : index
    %c0_53 = arith.constant 0 : index
    %85 = vector.load %arg11[%c0_51, %c0_52, %c0_53] : memref<3x64x32xf32, #tpu.memory_space<vmem>>, vector<1x64x32xf32>
    %86 = vector.shape_cast %85 : vector<1x64x32xf32> to vector<64x32xf32>
    %cst_54 = arith.constant dense<0.000000e+00> : vector<24x32xf32>
    %87 = tpu.matmul %4, %86, %cst_54 {dimension_numbers = #tpu.dot_dimension_numbers<[1], [0], [0], [1], [0, 0, 1, 1], [], []>} : vector<24x64xf32>, vector<64x32xf32>, vector<24x32xf32> -> vector<24x32xf32>
    %c1_55 = arith.constant 1 : index
    %c0_56 = arith.constant 0 : index
    %c0_57 = arith.constant 0 : index
    %88 = vector.load %arg11[%c1_55, %c0_56, %c0_57] : memref<3x64x32xf32, #tpu.memory_space<vmem>>, vector<1x64x32xf32>
    %89 = vector.shape_cast %88 : vector<1x64x32xf32> to vector<64x32xf32>
    %cst_58 = arith.constant dense<0.000000e+00> : vector<24x32xf32>
    %90 = tpu.matmul %1, %89, %cst_58 {dimension_numbers = #tpu.dot_dimension_numbers<[1], [0], [0], [1], [0, 0, 1, 1], [], []>} : vector<24x64xf32>, vector<64x32xf32>, vector<24x32xf32> -> vector<24x32xf32>
    %91 = arith.addf %87, %90 : vector<24x32xf32>
    %c2_59 = arith.constant 2 : index
    %c0_60 = arith.constant 0 : index
    %c0_61 = arith.constant 0 : index
    %92 = vector.load %arg11[%c2_59, %c0_60, %c0_61] : memref<3x64x32xf32, #tpu.memory_space<vmem>>, vector<1x64x32xf32>
    %93 = vector.shape_cast %92 : vector<1x64x32xf32> to vector<64x32xf32>
    %cst_62 = arith.constant dense<0.000000e+00> : vector<24x32xf32>
    %94 = tpu.matmul %7, %93, %cst_62 {dimension_numbers = #tpu.dot_dimension_numbers<[1], [0], [0], [1], [0, 0, 1, 1], [], []>} : vector<24x64xf32>, vector<64x32xf32>, vector<24x32xf32> -> vector<24x32xf32>
    %95 = arith.addf %91, %94 : vector<24x32xf32>
    %c0_63 = arith.constant 0 : index
    %c0_64 = arith.constant 0 : index
    %96 = vector.load %arg12[%c0_63, %c0_64] : memref<1x32xf32, #tpu.memory_space<vmem>>, vector<1x32xf32>
    %97 = vector.broadcast %96 : vector<1x32xf32> to vector<24x32xf32>
    %98 = arith.addf %95, %97 : vector<24x32xf32>
    %99 = vector.broadcast %0 : vector<24x1xf32> to vector<24x32xf32>
    %100 = arith.mulf %98, %99 : vector<24x32xf32>
    %cst_65 = arith.constant 0.000000e+00 : f32
    %101 = vector.broadcast %cst_65 : f32 to vector<24x32xf32>
    %102 = arith.maximumf %100, %101 : vector<24x32xf32>
    %103 = vector.extract_strided_slice %102 {offsets = [23, 0], sizes = [1, 32], strides = [1, 1]} : vector<24x32xf32> to vector<1x32xf32>
    %104 = vector.extract_strided_slice %102 {offsets = [0, 0], sizes = [23, 32], strides = [1, 1]} : vector<24x32xf32> to vector<23x32xf32>
    %105 = tpu.concatenate %103, %104 in 0 : vector<1x32xf32>, vector<23x32xf32> -> vector<24x32xf32>
    %106 = vector.extract_strided_slice %102 {offsets = [1, 0], sizes = [23, 32], strides = [1, 1]} : vector<24x32xf32> to vector<23x32xf32>
    %107 = vector.extract_strided_slice %102 {offsets = [0, 0], sizes = [1, 32], strides = [1, 1]} : vector<24x32xf32> to vector<1x32xf32>
    %108 = tpu.concatenate %106, %107 in 0 : vector<23x32xf32>, vector<1x32xf32> -> vector<24x32xf32>
    %c0_66 = arith.constant 0 : index
    %c0_67 = arith.constant 0 : index
    %c0_68 = arith.constant 0 : index
    %109 = vector.load %arg13[%c0_66, %c0_67, %c0_68] : memref<3x32x32xf32, #tpu.memory_space<vmem>>, vector<1x32x32xf32>
    %110 = vector.shape_cast %109 : vector<1x32x32xf32> to vector<32x32xf32>
    %cst_69 = arith.constant dense<0.000000e+00> : vector<24x32xf32>
    %111 = tpu.matmul %105, %110, %cst_69 {dimension_numbers = #tpu.dot_dimension_numbers<[1], [0], [0], [1], [0, 0, 1, 1], [], []>} : vector<24x32xf32>, vector<32x32xf32>, vector<24x32xf32> -> vector<24x32xf32>
    %c1_70 = arith.constant 1 : index
    %c0_71 = arith.constant 0 : index
    %c0_72 = arith.constant 0 : index
    %112 = vector.load %arg13[%c1_70, %c0_71, %c0_72] : memref<3x32x32xf32, #tpu.memory_space<vmem>>, vector<1x32x32xf32>
    %113 = vector.shape_cast %112 : vector<1x32x32xf32> to vector<32x32xf32>
    %cst_73 = arith.constant dense<0.000000e+00> : vector<24x32xf32>
    %114 = tpu.matmul %102, %113, %cst_73 {dimension_numbers = #tpu.dot_dimension_numbers<[1], [0], [0], [1], [0, 0, 1, 1], [], []>} : vector<24x32xf32>, vector<32x32xf32>, vector<24x32xf32> -> vector<24x32xf32>
    %115 = arith.addf %111, %114 : vector<24x32xf32>
    %c2_74 = arith.constant 2 : index
    %c0_75 = arith.constant 0 : index
    %c0_76 = arith.constant 0 : index
    %116 = vector.load %arg13[%c2_74, %c0_75, %c0_76] : memref<3x32x32xf32, #tpu.memory_space<vmem>>, vector<1x32x32xf32>
    %117 = vector.shape_cast %116 : vector<1x32x32xf32> to vector<32x32xf32>
    %cst_77 = arith.constant dense<0.000000e+00> : vector<24x32xf32>
    %118 = tpu.matmul %108, %117, %cst_77 {dimension_numbers = #tpu.dot_dimension_numbers<[1], [0], [0], [1], [0, 0, 1, 1], [], []>} : vector<24x32xf32>, vector<32x32xf32>, vector<24x32xf32> -> vector<24x32xf32>
    %119 = arith.addf %115, %118 : vector<24x32xf32>
    %c0_78 = arith.constant 0 : index
    %c0_79 = arith.constant 0 : index
    %120 = vector.load %arg14[%c0_78, %c0_79] : memref<1x32xf32, #tpu.memory_space<vmem>>, vector<1x32xf32>
    %121 = vector.broadcast %120 : vector<1x32xf32> to vector<24x32xf32>
    %122 = arith.addf %119, %121 : vector<24x32xf32>
    %123 = vector.broadcast %0 : vector<24x1xf32> to vector<24x32xf32>
    %124 = arith.mulf %122, %123 : vector<24x32xf32>
    %cst_80 = arith.constant 0.000000e+00 : f32
    %125 = vector.broadcast %cst_80 : f32 to vector<24x32xf32>
    %126 = arith.maximumf %124, %125 : vector<24x32xf32>
    %127 = vector.extract_strided_slice %126 {offsets = [23, 0], sizes = [1, 32], strides = [1, 1]} : vector<24x32xf32> to vector<1x32xf32>
    %128 = vector.extract_strided_slice %126 {offsets = [0, 0], sizes = [23, 32], strides = [1, 1]} : vector<24x32xf32> to vector<23x32xf32>
    %129 = tpu.concatenate %127, %128 in 0 : vector<1x32xf32>, vector<23x32xf32> -> vector<24x32xf32>
    %130 = vector.extract_strided_slice %126 {offsets = [1, 0], sizes = [23, 32], strides = [1, 1]} : vector<24x32xf32> to vector<23x32xf32>
    %131 = vector.extract_strided_slice %126 {offsets = [0, 0], sizes = [1, 32], strides = [1, 1]} : vector<24x32xf32> to vector<1x32xf32>
    %132 = tpu.concatenate %130, %131 in 0 : vector<23x32xf32>, vector<1x32xf32> -> vector<24x32xf32>
    %c0_81 = arith.constant 0 : index
    %c0_82 = arith.constant 0 : index
    %c0_83 = arith.constant 0 : index
    %133 = vector.load %arg15[%c0_81, %c0_82, %c0_83] : memref<3x32x128xf32, #tpu.memory_space<vmem>>, vector<1x32x128xf32>
    %134 = vector.shape_cast %133 : vector<1x32x128xf32> to vector<32x128xf32>
    %cst_84 = arith.constant dense<0.000000e+00> : vector<24x128xf32>
    %135 = tpu.matmul %129, %134, %cst_84 {dimension_numbers = #tpu.dot_dimension_numbers<[1], [0], [0], [1], [0, 0, 1, 1], [], []>} : vector<24x32xf32>, vector<32x128xf32>, vector<24x128xf32> -> vector<24x128xf32>
    %c1_85 = arith.constant 1 : index
    %c0_86 = arith.constant 0 : index
    %c0_87 = arith.constant 0 : index
    %136 = vector.load %arg15[%c1_85, %c0_86, %c0_87] : memref<3x32x128xf32, #tpu.memory_space<vmem>>, vector<1x32x128xf32>
    %137 = vector.shape_cast %136 : vector<1x32x128xf32> to vector<32x128xf32>
    %cst_88 = arith.constant dense<0.000000e+00> : vector<24x128xf32>
    %138 = tpu.matmul %126, %137, %cst_88 {dimension_numbers = #tpu.dot_dimension_numbers<[1], [0], [0], [1], [0, 0, 1, 1], [], []>} : vector<24x32xf32>, vector<32x128xf32>, vector<24x128xf32> -> vector<24x128xf32>
    %139 = arith.addf %135, %138 : vector<24x128xf32>
    %c2_89 = arith.constant 2 : index
    %c0_90 = arith.constant 0 : index
    %c0_91 = arith.constant 0 : index
    %140 = vector.load %arg15[%c2_89, %c0_90, %c0_91] : memref<3x32x128xf32, #tpu.memory_space<vmem>>, vector<1x32x128xf32>
    %141 = vector.shape_cast %140 : vector<1x32x128xf32> to vector<32x128xf32>
    %cst_92 = arith.constant dense<0.000000e+00> : vector<24x128xf32>
    %142 = tpu.matmul %132, %141, %cst_92 {dimension_numbers = #tpu.dot_dimension_numbers<[1], [0], [0], [1], [0, 0, 1, 1], [], []>} : vector<24x32xf32>, vector<32x128xf32>, vector<24x128xf32> -> vector<24x128xf32>
    %143 = arith.addf %139, %142 : vector<24x128xf32>
    %c0_93 = arith.constant 0 : index
    %c0_94 = arith.constant 0 : index
    %144 = vector.load %arg16[%c0_93, %c0_94] : memref<1x128xf32, #tpu.memory_space<vmem>>, vector<1x128xf32>
    %145 = vector.broadcast %144 : vector<1x128xf32> to vector<24x128xf32>
    %146 = arith.addf %143, %145 : vector<24x128xf32>
    %147 = vector.broadcast %0 : vector<24x1xf32> to vector<24x128xf32>
    %148 = arith.mulf %146, %147 : vector<24x128xf32>
    %149 = arith.index_cast %arg0 : i32 to index
    %150 = memref.load %arg1[%149] : memref<4xf32, #tpu.memory_space<smem>>
    %151 = vector.broadcast %150 : f32 to vector<24x128xf32>
    %152 = arith.mulf %148, %151 : vector<24x128xf32>
    %cst_95 = arith.constant 0.000000e+00 : f32
    %153 = vector.broadcast %cst_95 : f32 to vector<24x128xf32>
    %154 = arith.maximumf %152, %153 : vector<24x128xf32>
    %c0_96 = arith.constant 0 : index
    %c0_97 = arith.constant 0 : index
    %155 = vector.load %arg18[%c0_96, %c0_97] : memref<24x128xf32, #tpu.memory_space<vmem>>, vector<24x128xf32>
    tpu.vector_store %arg18[%c0_96, %c0_97], %154 {strides = array<i32>} : memref<24x128xf32, #tpu.memory_space<vmem>>, vector<24x128xf32>,
    return
  }
  func.func @transform_0(%arg0: i32, %arg1: memref<4xf32, #tpu.memory_space<smem>>) -> (i32, i32) {
    %c0_i32 = arith.constant 0 : i32
    %c0_i32_0 = arith.constant 0 : i32
    return %arg0, %c0_i32 : i32, i32
  }
  func.func @transform_1(%arg0: i32, %arg1: memref<4xf32, #tpu.memory_space<smem>>) -> (i32, i32) {
    %c0_i32 = arith.constant 0 : i32
    %c0_i32_0 = arith.constant 0 : i32
    return %arg0, %c0_i32 : i32, i32
  }
  func.func @transform_2(%arg0: i32, %arg1: memref<4xf32, #tpu.memory_space<smem>>) -> (i32, i32, i32) {
    %c0_i32 = arith.constant 0 : i32
    %c0_i32_0 = arith.constant 0 : i32
    %c0_i32_1 = arith.constant 0 : i32
    %c0_i32_2 = arith.constant 0 : i32
    return %c0_i32, %c0_i32_0, %c0_i32_1 : i32, i32, i32
  }
  func.func @transform_3(%arg0: i32, %arg1: memref<4xf32, #tpu.memory_space<smem>>) -> (i32, i32) {
    %c0_i32 = arith.constant 0 : i32
    %c0_i32_0 = arith.constant 0 : i32
    %c0_i32_1 = arith.constant 0 : i32
    return %c0_i32, %c0_i32_0 : i32, i32
  }
  func.func @transform_4(%arg0: i32, %arg1: memref<4xf32, #tpu.memory_space<smem>>) -> (i32, i32, i32) {
    %c0_i32 = arith.constant 0 : i32
    %c0_i32_0 = arith.constant 0 : i32
    %c0_i32_1 = arith.constant 0 : i32
    %c0_i32_2 = arith.constant 0 : i32
    return %c0_i32, %c0_i32_0, %c0_i32_1 : i32, i32, i32
  }
  func.func @transform_5(%arg0: i32, %arg1: memref<4xf32, #tpu.memory_space<smem>>) -> (i32, i32) {
    %c0_i32 = arith.constant 0 : i32
    %c0_i32_0 = arith.constant 0 : i32
    %c0_i32_1 = arith.constant 0 : i32
    return %c0_i32, %c0_i32_0 : i32, i32
  }
  func.func @transform_6(%arg0: i32, %arg1: memref<4xf32, #tpu.memory_space<smem>>) -> (i32, i32, i32) {
    %c0_i32 = arith.constant 0 : i32
    %c0_i32_0 = arith.constant 0 : i32
    %c0_i32_1 = arith.constant 0 : i32
    %c0_i32_2 = arith.constant 0 : i32
    return %c0_i32, %c0_i32_0, %c0_i32_1 : i32, i32, i32
  }
  func.func @transform_7(%arg0: i32, %arg1: memref<4xf32, #tpu.memory_space<smem>>) -> (i32, i32) {
    %c0_i32 = arith.constant 0 : i32
    %c0_i32_0 = arith.constant 0 : i32
    %c0_i32_1 = arith.constant 0 : i32
    return %c0_i32, %c0_i32_0 : i32, i32
  }
  func.func @transform_8(%arg0: i32, %arg1: memref<4xf32, #tpu.memory_space<smem>>) -> (i32, i32) {
    %c0_i32 = arith.constant 0 : i32
    %c0_i32_0 = arith.constant 0 : i32
    %c0_i32_1 = arith.constant 0 : i32
    return %c0_i32, %c0_i32_0 : i32, i32
  }
  func.func @transform_9(%arg0: i32, %arg1: memref<4xf32, #tpu.memory_space<smem>>) -> (i32, i32, i32) {
    %c0_i32 = arith.constant 0 : i32
    %c0_i32_0 = arith.constant 0 : i32
    %c0_i32_1 = arith.constant 0 : i32
    %c0_i32_2 = arith.constant 0 : i32
    return %c0_i32, %c0_i32_0, %c0_i32_1 : i32, i32, i32
  }
  func.func @transform_10(%arg0: i32, %arg1: memref<4xf32, #tpu.memory_space<smem>>) -> (i32, i32) {
    %c0_i32 = arith.constant 0 : i32
    %c0_i32_0 = arith.constant 0 : i32
    %c0_i32_1 = arith.constant 0 : i32
    return %c0_i32, %c0_i32_0 : i32, i32
  }
  func.func @transform_11(%arg0: i32, %arg1: memref<4xf32, #tpu.memory_space<smem>>) -> (i32, i32, i32) {
    %c0_i32 = arith.constant 0 : i32
    %c0_i32_0 = arith.constant 0 : i32
    %c0_i32_1 = arith.constant 0 : i32
    %c0_i32_2 = arith.constant 0 : i32
    return %c0_i32, %c0_i32_0, %c0_i32_1 : i32, i32, i32
  }
  func.func @transform_12(%arg0: i32, %arg1: memref<4xf32, #tpu.memory_space<smem>>) -> (i32, i32) {
    %c0_i32 = arith.constant 0 : i32
    %c0_i32_0 = arith.constant 0 : i32
    %c0_i32_1 = arith.constant 0 : i32
    return %c0_i32, %c0_i32_0 : i32, i32
  }
  func.func @transform_13(%arg0: i32, %arg1: memref<4xf32, #tpu.memory_space<smem>>) -> (i32, i32, i32) {
    %c0_i32 = arith.constant 0 : i32
    %c0_i32_0 = arith.constant 0 : i32
    %c0_i32_1 = arith.constant 0 : i32
    %c0_i32_2 = arith.constant 0 : i32
    return %c0_i32, %c0_i32_0, %c0_i32_1 : i32, i32, i32
  }
  func.func @transform_14(%arg0: i32, %arg1: memref<4xf32, #tpu.memory_space<smem>>) -> (i32, i32) {
    %c0_i32 = arith.constant 0 : i32
    %c0_i32_0 = arith.constant 0 : i32
    %c0_i32_1 = arith.constant 0 : i32
    return %c0_i32, %c0_i32_0 : i32, i32
  }
  func.func @transform_15(%arg0: i32, %arg1: memref<4xf32, #tpu.memory_space<smem>>) -> (i32, i32) {
    %c0_i32 = arith.constant 0 : i32
    %c0_i32_0 = arith.constant 0 : i32
    return %arg0, %c0_i32 : i32, i32
  }
  func.func @transform_16(%arg0: i32, %arg1: memref<4xf32, #tpu.memory_space<smem>>) -> (i32, i32) {
    %c0_i32 = arith.constant 0 : i32
    %c0_i32_0 = arith.constant 0 : i32
    return %arg0, %c0_i32 : i32, i32
  }
}

</mosaic_0001>

<llo_original>
// kernel: tpu_custom_call.1
$region0: #{tpu_custom_call.1}
  #allocation0 [shape = 'u32[]', space=smem, size = 0x4, offset = 0x4, fixed_abs, tag = 'smem constant byte address 0x4 - core index']
  #allocation1 [shape = 'u32[144,128]{1,0:T(1,128)}', space=vmem, size = 0x12000, scoped, tag = 'internal scratch']
  %s0 = inlined_call_operand.hbm [shape: f32[24,128], index: 0, kind: input, shape index: {}]
  %s1 = inlined_call_operand.hbm [shape: f32[24,128], index: 1, kind: output, shape index: {}]
  %s2 = sld [smem:[#allocation0]]
  $region18: #{tpu_custom_call.1} parent=0
    _
  %s4 = ssub.s32 1, %s2
  %s5 = scalar_select 0, %s4, %s2
  $region1: #{tpu_custom_call.1} parent=0
    #allocation2 [shape = 'u8[12288]{0}', space=vmem, size = 0x3000, scoped, tag = 'input window, operand 0, single buffered']
    #allocation3 [shape = 's32[1]{0}', space=sflag, size = 0x4, scoped, tag = 'scoped memory for tpu_custom_call.1']
    #allocation4 [shape = 's32[1]{0}', space=sflag, size = 0x4, scoped, tag = 'scoped memory for tpu_custom_call.1']
    #allocation5 [shape = 'u8[12288]{0}', space=vmem, size = 0x3000, scoped, tag = 'output window, operand 0, single buffered']
    %6 = vsyncpa [#allocation3], 0
    %7 = vsyncpa [#allocation4], 0
    // Predicated region
    $region2: #{tpu_custom_call.1} parent=1 // pred_check
      _
    $region3: #{tpu_custom_call.1} parent=1 // pred_check_branch
      %9 = sbr.rel (0) target = $region5
    $region4: #{tpu_custom_call.1} parent=1 // pred_region
      %s11 = ssub.s32 384, 384
      %12 = vsyncadd [#allocation3], %s11
      %s13 = sshll.u32 [#allocation2], 4
      %s14 = int_to_ptr.vmem [resolvable:$true] %s13
      %19 = dma.hbm_to_vmem [thread:$0]  %s0, 384, %s14, [#allocation3], 128, 128, 8
    $region5: #{tpu_custom_call.1} parent=1 // pred_fallthru
      _
    // Predicated region
    $region6: #{tpu_custom_call.1} parent=1 // pred_check
      _
    $region7: #{tpu_custom_call.1} parent=1 // pred_check_branch
      %21 = sbr.rel (0) target = $region9
    $region8: #{tpu_custom_call.1} parent=1 // pred_region
      %22 = dma.done [#allocation3], 384
    $region9: #{tpu_custom_call.1} parent=1 // pred_fallthru
      _
    %v23 = vld [vmem:[#allocation2] sm:$0xff]
    %v24 = vld [vmem:[#allocation2 + $0x8] sm:$0xff]
    %v25 = vld [vmem:[#allocation2 + $0x10] sm:$0xff]
    %v26 = vrot.slane %v23, 3
    %v27 = vrot.slane %v24, 3
    %v28 = vrot.slane %v25, 3
    %v29 = vlaneseq
    %v30 = vshrl.u32 %v29, 7
    %vm31 = vcmp.lt.s32.totalorder %v30, 5
    %v32 = vsel %vm31, %v27, %v28
    %v33 = vsel %vm31, %v26, %v27
    %v34 = vsel %vm31, %v28, %v26
    %35 = vst [vmem:[#allocation5] sm:$0xff] %v34
    %36 = vst [vmem:[#allocation5 + $0x8] sm:$0xff] %v33
    %37 = vst [vmem:[#allocation5 + $0x10] sm:$0xff] %v32
    // Predicated region
    $region10: #{tpu_custom_call.1} parent=1 // pred_check
      _
    $region11: #{tpu_custom_call.1} parent=1 // pred_check_branch
      %39 = sbr.rel (0) target = $region13
    $region12: #{tpu_custom_call.1} parent=1 // pred_region
      %s41 = ssub.s32 384, 384
      %42 = vsyncadd [#allocation4], %s41
      %s43 = sshll.u32 [#allocation5], 4
      %s44 = int_to_ptr.vmem [resolvable:$true] %s43
      %49 = dma.vmem_to_hbm [thread:$0]  %s44, 384, %s1, [#allocation4], 128, 128, 8
    $region13: #{tpu_custom_call.1} parent=1 // pred_fallthru
      _
    // Predicated region
    $region14: #{tpu_custom_call.1} parent=1 // pred_check
      _
    $region15: #{tpu_custom_call.1} parent=1 // pred_check_branch
      %51 = sbr.rel (0) target = $region17
    $region16: #{tpu_custom_call.1} parent=1 // pred_region
      %52 = dma.done [#allocation4], 384
    $region17: #{tpu_custom_call.1} parent=1 // pred_fallthru
      _
    %53 = vsyncpa [#allocation3], 1
    %54 = vsyncpa [#allocation4], 1

// kernel: tpu_custom_call.1
$region0: #{tpu_custom_call.1}
  #allocation0 [shape = 'u32[]', space=smem, size = 0x4, offset = 0x4, fixed_abs, tag = 'smem constant byte address 0x4 - core index']
  #allocation1 [shape = 'u32[144,128]{1,0:T(1,128)}', space=vmem, size = 0x12000, scoped, tag = 'internal scratch']
  #allocation2 [shape = 's32[1]{0}', space=sflag, size = 0x4, scoped, tag = 'scoped memory for tpu_custom_call.1']
  #allocation3 [shape = 'u8[512]{0}', space=smem, size = 0x200, scoped, tag = 'prefetched SMEM operand 0']
  %s0 = inlined_call_operand.vmem [shape: f32[4], index: 0, kind: input, shape index: {}]
  %s1 = inlined_call_operand.vmem [shape: f32[96,64], index: 1, kind: input, shape index: {}]
  %s2 = inlined_call_operand.vmem [shape: f32[96,1], index: 2, kind: input, shape index: {}]
  %s3 = inlined_call_operand.vmem [shape: f32[3,64,32], index: 3, kind: input, shape index: {}]
  %s4 = inlined_call_operand.vmem [shape: f32[1,32], index: 4, kind: input, shape index: {}]
  %s5 = inlined_call_operand.vmem [shape: f32[3,32,32], index: 5, kind: input, shape index: {}]
  %s6 = inlined_call_operand.vmem [shape: f32[1,32], index: 6, kind: input, shape index: {}]
  %s7 = inlined_call_operand.vmem [shape: f32[3,32,32], index: 7, kind: input, shape index: {}]
  %s8 = inlined_call_operand.vmem [shape: f32[1,32], index: 8, kind: input, shape index: {}]
  %s9 = inlined_call_operand.vmem [shape: f32[32,128], index: 9, kind: input, shape index: {}]
  %s10 = inlined_call_operand.vmem [shape: f32[3,64,32], index: 10, kind: input, shape index: {}]
  %s11 = inlined_call_operand.vmem [shape: f32[1,32], index: 11, kind: input, shape index: {}]
  %s12 = inlined_call_operand.vmem [shape: f32[3,32,32], index: 12, kind: input, shape index: {}]
  %s13 = inlined_call_operand.vmem [shape: f32[1,32], index: 13, kind: input, shape index: {}]
  %s14 = inlined_call_operand.vmem [shape: f32[3,32,128], index: 14, kind: input, shape index: {}]
  %s15 = inlined_call_operand.vmem [shape: f32[1,128], index: 15, kind: input, shape index: {}]
  %s16 = inlined_call_operand.hbm [shape: f32[96,128], index: 16, kind: output, shape index: {0}]
  %s17 = inlined_call_operand.hbm [shape: f32[96,128], index: 17, kind: output, shape index: {1}]
  %18 = xla_tuple %s16, %s17
  %s19 = sld [smem:[#allocation0]]
  $region101: #{tpu_custom_call.1} parent=0
    _
  %s21 = ssub.s32 1, %s19
  %s22 = scalar_select 0, %s21, %s19
  %s23 = sshll.u32 %s0, 4
  %s24 = int_to_ptr.vmem [resolvable:$true] %s23
  %26 = dma.vmem_to_smem %s24, 16, [#allocation3], [#allocation2]
  %27 = dma.done [#allocation2], 16
  %28 = sfence
  $region1: #{tpu_custom_call.1} parent=0
    #allocation4 [shape = 'u8[24576]{0}', space=vmem, size = 0x6000, scoped, tag = 'output window, operand 0']
    #allocation5 [shape = 's32[2]{0}', space=sflag, size = 0x8, scoped, tag = 'scoped memory for tpu_custom_call.1']
    #allocation6 [shape = 'u8[24576]{0}', space=vmem, size = 0x6000, scoped, tag = 'output window, operand 1']
    #allocation7 [shape = 's32[2]{0}', space=sflag, size = 0x8, scoped, tag = 'scoped memory for tpu_custom_call.1']
    %29 = vsyncpa [#allocation5], 0
    %s30 = scalar_lea.sflag [#allocation5], 1
    %31 = vsyncpa %s30, 0
    %32 = vsyncpa [#allocation7], 0
    %s33 = scalar_lea.sflag [#allocation7], 1
    %34 = vsyncpa %s33, 0
    loop: start=0, step=1, limit=6
    $region2: #{tpu_custom_call.1} parent=1 // loop_pre_header
      _
    $region3: #{tpu_custom_call.1} parent=1 // loop_header
      %s36 = sphi 0, %s40
      %p37 = scmp.ge.s32.totalorder %s36, 6
      %s46 = sphi 0, %s48
      %s49 = sphi 0, %s46
      %s50 = sphi 0, %s49
      %s66 = sphi 0, %s50
      %s72 = sphi 0, %s74
      %s75 = sphi 0, %s72
      %s76 = sphi 0, %s75
      %s92 = sphi 0, %s76
      %s96 = sphi 0, %s96
      %s98 = sphi 0, %s96
      %s99 = sphi 0, %s98
      %s113 = sphi 0, %s99
      %s117 = sphi 0, %s117
      %s119 = sphi 0, %s117
      %s120 = sphi 0, %s119
      %s134 = sphi 0, %s120
      %s138 = sphi 0, %s138
      %s140 = sphi 0, %s138
      %s141 = sphi 0, %s140
      %s155 = sphi 0, %s141
      %s159 = sphi 0, %s159
      %s161 = sphi 0, %s159
      %s162 = sphi 0, %s161
      %s176 = sphi 0, %s162
      %s180 = sphi 0, %s180
      %s182 = sphi 0, %s180
      %s183 = sphi 0, %s182
      %s197 = sphi 0, %s183
      %s201 = sphi 0, %s201
      %s203 = sphi 0, %s201
      %s204 = sphi 0, %s203
      %s218 = sphi 0, %s204
      %s222 = sphi 0, %s222
      %s224 = sphi 0, %s222
      %s225 = sphi 0, %s224
      %s239 = sphi 0, %s225
      %s243 = sphi 0, %s243
      %s245 = sphi 0, %s243
      %s246 = sphi 0, %s245
      %s260 = sphi 0, %s246
      %s264 = sphi 0, %s264
      %s266 = sphi 0, %s264
      %s267 = sphi 0, %s266
      %s281 = sphi 0, %s267
      %s285 = sphi 0, %s285
      %s287 = sphi 0, %s285
      %s288 = sphi 0, %s287
      %s302 = sphi 0, %s288
      %s306 = sphi 0, %s306
      %s308 = sphi 0, %s306
      %s309 = sphi 0, %s308
      %s323 = sphi 0, %s309
      %s327 = sphi 0, %s327
      %s329 = sphi 0, %s327
      %s330 = sphi 0, %s329
      %s344 = sphi 0, %s330
      %s348 = sphi 0, %s348
      %s350 = sphi 0, %s348
      %s351 = sphi 0, %s350
      %s365 = sphi 0, %s351
      %s371 = sphi 0, %s373
      %s374 = sphi 0, %s371
      %s375 = sphi 0, %s374
      %s391 = sphi 0, %s375
      %s397 = sphi 0, %s399
      %s400 = sphi 0, %s397
      %s401 = sphi 0, %s400
      %s417 = sphi 0, %s401
    $region4: #{tpu_custom_call.1} parent=1 // loop_header_branch
      %39 = sbr.rel (%p37) target = $region8
    $region5: #{tpu_custom_call.1} parent=1 // loop_body
      %s41 = ssub.s32 %s36, 1
      %s42 = ssub.s32 %s36, 2
      %s43 = sadd.s32 %s36, 1
      %s44 = ssub.s32 %s36, %s43
      %p45 = scmp.eq.s32.totalorder %s44, 0
      %s47 = sadd.s32 %s46, 1
      %s48 = scalar_select %p45, %s46, %s47
      %p51 = pneg %p45
      %p52 = scmp.eq.s32.totalorder %s36, 3
      %p53 = por %p51, %p52
      %p54 = scmp.ne.s32.totalorder %s46, %s49
      %p55 = scmp.eq.s32.totalorder %s36, 0
      %p56 = por %p54, %p55
      %p57 = scmp.ne.s32.totalorder %s46, %s49
      %p58 = scmp.eq.s32.totalorder %s41, 3
      %p59 = por %p57, %p58
      %p60 = scmp.ne.s32.totalorder %s49, %s50
      %p61 = scmp.eq.s32.totalorder %s41, 0
      %p62 = por %p60, %p61
      %p63 = scmp.ne.s32.totalorder %s49, %s50
      %p64 = scmp.eq.s32.totalorder %s42, 3
      %p65 = por %p63, %p64
      %p67 = scmp.ne.s32.totalorder %s50, %s66
      %p68 = scmp.eq.s32.totalorder %s42, 0
      %p69 = por %p67, %p68
      %s70 = ssub.s32 %s36, %s43
      %p71 = scmp.eq.s32.totalorder %s70, 0
      %s73 = sadd.s32 %s72, 1
      %s74 = scalar_select %p71, %s72, %s73
      %p77 = pneg %p71
      %p78 = scmp.eq.s32.totalorder %s36, 3
      %p79 = por %p77, %p78
      %p80 = scmp.ne.s32.totalorder %s72, %s75
      %p81 = scmp.eq.s32.totalorder %s36, 0
      %p82 = por %p80, %p81
      %p83 = scmp.ne.s32.totalorder %s72, %s75
      %p84 = scmp.eq.s32.totalorder %s41, 3
      %p85 = por %p83, %p84
      %p86 = scmp.ne.s32.totalorder %s75, %s76
      %p87 = scmp.eq.s32.totalorder %s41, 0
      %p88 = por %p86, %p87
      %p89 = scmp.ne.s32.totalorder %s75, %s76
      %p90 = scmp.eq.s32.totalorder %s42, 3
      %p91 = por %p89, %p90
      %p93 = scmp.ne.s32.totalorder %s76, %s92
      %p94 = scmp.eq.s32.totalorder %s42, 0
      %p95 = por %p93, %p94
      %s97 = sadd.s32 %s96, 1
      %p100 = scmp.eq.s32.totalorder %s36, 3
      %p101 = scmp.ne.s32.totalorder %s96, %s98
      %p102 = scmp.eq.s32.totalorder %s36, 0
      %p103 = por %p101, %p102
      %p104 = scmp.ne.s32.totalorder %s96, %s98
      %p105 = scmp.eq.s32.totalorder %s41, 3
      %p106 = por %p104, %p105
      %p107 = scmp.ne.s32.totalorder %s98, %s99
      %p108 = scmp.eq.s32.totalorder %s41, 0
      %p109 = por %p107, %p108
      %p110 = scmp.ne.s32.totalorder %s98, %s99
      %p111 = scmp.eq.s32.totalorder %s42, 3
      %p112 = por %p110, %p111
      %p114 = scmp.ne.s32.totalorder %s99, %s113
      %p115 = scmp.eq.s32.totalorder %s42, 0
      %p116 = por %p114, %p115
      %s118 = sadd.s32 %s117, 1
      %p121 = scmp.eq.s32.totalorder %s36, 3
      %p122 = scmp.ne.s32.totalorder %s117, %s119
      %p123 = scmp.eq.s32.totalorder %s36, 0
      %p124 = por %p122, %p123
      %p125 = scmp.ne.s32.totalorder %s117, %s119
      %p126 = scmp.eq.s32.totalorder %s41, 3
      %p127 = por %p125, %p126
      %p128 = scmp.ne.s32.totalorder %s119, %s120
      %p129 = scmp.eq.s32.totalorder %s41, 0
      %p130 = por %p128, %p129
      %p131 = scmp.ne.s32.totalorder %s119, %s120
      %p132 = scmp.eq.s32.totalorder %s42, 3
      %p133 = por %p131, %p132
      %p135 = scmp.ne.s32.totalorder %s120, %s134
      %p136 = scmp.eq.s32.totalorder %s42, 0
      %p137 = por %p135, %p136
      %s139 = sadd.s32 %s138, 1
      %p142 = scmp.eq.s32.totalorder %s36, 3
      %p143 = scmp.ne.s32.totalorder %s138, %s140
      %p144 = scmp.eq.s32.totalorder %s36, 0
      %p145 = por %p143, %p144
      %p146 = scmp.ne.s32.totalorder %s138, %s140
      %p147 = scmp.eq.s32.totalorder %s41, 3
      %p148 = por %p146, %p147
      %p149 = scmp.ne.s32.totalorder %s140, %s141
      %p150 = scmp.eq.s32.totalorder %s41, 0
      %p151 = por %p149, %p150
      %p152 = scmp.ne.s32.totalorder %s140, %s141
      %p153 = scmp.eq.s32.totalorder %s42, 3
      %p154 = por %p152, %p153
      %p156 = scmp.ne.s32.totalorder %s141, %s155
      %p157 = scmp.eq.s32.totalorder %s42, 0
      %p158 = por %p156, %p157
      %s160 = sadd.s32 %s159, 1
      %p163 = scmp.eq.s32.totalorder %s36, 3
      %p164 = scmp.ne.s32.totalorder %s159, %s161
      %p165 = scmp.eq.s32.totalorder %s36, 0
      %p166 = por %p164, %p165
      %p167 = scmp.ne.s32.totalorder %s159, %s161
      %p168 = scmp.eq.s32.totalorder %s41, 3
      %p169 = por %p167, %p168
      %p170 = scmp.ne.s32.totalorder %s161, %s162
      %p171 = scmp.eq.s32.totalorder %s41, 0
      %p172 = por %p170, %p171
      %p173 = scmp.ne.s32.totalorder %s161, %s162
      %p174 = scmp.eq.s32.totalorder %s42, 3
      %p175 = por %p173, %p174
      %p177 = scmp.ne.s32.totalorder %s162, %s176
      %p178 = scmp.eq.s32.totalorder %s42, 0
      %p179 = por %p177, %p178
      %s181 = sadd.s32 %s180, 1
      %p184 = scmp.eq.s32.totalorder %s36, 3
      %p185 = scmp.ne.s32.totalorder %s180, %s182
      %p186 = scmp.eq.s32.totalorder %s36, 0
      %p187 = por %p185, %p186
      %p188 = scmp.ne.s32.totalorder %s180, %s182
      %p189 = scmp.eq.s32.totalorder %s41, 3
      %p190 = por %p188, %p189
      %p191 = scmp.ne.s32.totalorder %s182, %s183
      %p192 = scmp.eq.s32.totalorder %s41, 0
      %p193 = por %p191, %p192
      %p194 = scmp.ne.s32.totalorder %s182, %s183
      %p195 = scmp.eq.s32.totalorder %s42, 3
      %p196 = por %p194, %p195
      %p198 = scmp.ne.s32.totalorder %s183, %s197
      %p199 = scmp.eq.s32.totalorder %s42, 0
      %p200 = por %p198, %p199
      %s202 = sadd.s32 %s201, 1
      %p205 = scmp.eq.s32.totalorder %s36, 3
      %p206 = scmp.ne.s32.totalorder %s201, %s203
      %p207 = scmp.eq.s32.totalorder %s36, 0
      %p208 = por %p206, %p207
      %p209 = scmp.ne.s32.totalorder %s201, %s203
      %p210 = scmp.eq.s32.totalorder %s41, 3
      %p211 = por %p209, %p210
      %p212 = scmp.ne.s32.totalorder %s203, %s204
      %p213 = scmp.eq.s32.totalorder %s41, 0
      %p214 = por %p212, %p213
      %p215 = scmp.ne.s32.totalorder %s203, %s204
      %p216 = scmp.eq.s32.totalorder %s42, 3
      %p217 = por %p215, %p216
      %p219 = scmp.ne.s32.totalorder %s204, %s218
      %p220 = scmp.eq.s32.totalorder %s42, 0
      %p221 = por %p219, %p220
      %s223 = sadd.s32 %s222, 1
      %p226 = scmp.eq.s32.totalorder %s36, 3
      %p227 = scmp.ne.s32.totalorder %s222, %s224
      %p228 = scmp.eq.s32.totalorder %s36, 0
      %p229 = por %p227, %p228
      %p230 = scmp.ne.s32.totalorder %s222, %s224
      %p231 = scmp.eq.s32.totalorder %s41, 3
      %p232 = por %p230, %p231
      %p233 = scmp.ne.s32.totalorder %s224, %s225
      %p234 = scmp.eq.s32.totalorder %s41, 0
      %p235 = por %p233, %p234
      %p236 = scmp.ne.s32.totalorder %s224, %s225
      %p237 = scmp.eq.s32.totalorder %s42, 3
      %p238 = por %p236, %p237
      %p240 = scmp.ne.s32.totalorder %s225, %s239
      %p241 = scmp.eq.s32.totalorder %s42, 0
      %p242 = por %p240, %p241
      %s244 = sadd.s32 %s243, 1
      %p247 = scmp.eq.s32.totalorder %s36, 3
      %p248 = scmp.ne.s32.totalorder %s243, %s245
      %p249 = scmp.eq.s32.totalorder %s36, 0
      %p250 = por %p248, %p249
      %p251 = scmp.ne.s32.totalorder %s243, %s245
      %p252 = scmp.eq.s32.totalorder %s41, 3
      %p253 = por %p251, %p252
      %p254 = scmp.ne.s32.totalorder %s245, %s246
      %p255 = scmp.eq.s32.totalorder %s41, 0
      %p256 = por %p254, %p255
      %p257 = scmp.ne.s32.totalorder %s245, %s246
      %p258 = scmp.eq.s32.totalorder %s42, 3
      %p259 = por %p257, %p258
      %p261 = scmp.ne.s32.totalorder %s246, %s260
      %p262 = scmp.eq.s32.totalorder %s42, 0
      %p263 = por %p261, %p262
      %s265 = sadd.s32 %s264, 1
      %p268 = scmp.eq.s32.totalorder %s36, 3
      %p269 = scmp.ne.s32.totalorder %s264, %s266
      %p270 = scmp.eq.s32.totalorder %s36, 0
      %p271 = por %p269, %p270
      %p272 = scmp.ne.s32.totalorder %s264, %s266
      %p273 = scmp.eq.s32.totalorder %s41, 3
      %p274 = por %p272, %p273
      %p275 = scmp.ne.s32.totalorder %s266, %s267
      %p276 = scmp.eq.s32.totalorder %s41, 0
      %p277 = por %p275, %p276
      %p278 = scmp.ne.s32.totalorder %s266, %s267
      %p279 = scmp.eq.s32.totalorder %s42, 3
      %p280 = por %p278, %p279
      %p282 = scmp.ne.s32.totalorder %s267, %s281
      %p283 = scmp.eq.s32.totalorder %s42, 0
      %p284 = por %p282, %p283
      %s286 = sadd.s32 %s285, 1
      %p289 = scmp.eq.s32.totalorder %s36, 3
      %p290 = scmp.ne.s32.totalorder %s285, %s287
      %p291 = scmp.eq.s32.totalorder %s36, 0
      %p292 = por %p290, %p291
      %p293 = scmp.ne.s32.totalorder %s285, %s287
      %p294 = scmp.eq.s32.totalorder %s41, 3
      %p295 = por %p293, %p294
      %p296 = scmp.ne.s32.totalorder %s287, %s288
      %p297 = scmp.eq.s32.totalorder %s41, 0
      %p298 = por %p296, %p297
      %p299 = scmp.ne.s32.totalorder %s287, %s288
      %p300 = scmp.eq.s32.totalorder %s42, 3
      %p301 = por %p299, %p300
      %p303 = scmp.ne.s32.totalorder %s288, %s302
      %p304 = scmp.eq.s32.totalorder %s42, 0
      %p305 = por %p303, %p304
      %s307 = sadd.s32 %s306, 1
      %p310 = scmp.eq.s32.totalorder %s36, 3
      %p311 = scmp.ne.s32.totalorder %s306, %s308
      %p312 = scmp.eq.s32.totalorder %s36, 0
      %p313 = por %p311, %p312
      %p314 = scmp.ne.s32.totalorder %s306, %s308
      %p315 = scmp.eq.s32.totalorder %s41, 3
      %p316 = por %p314, %p315
      %p317 = scmp.ne.s32.totalorder %s308, %s309
      %p318 = scmp.eq.s32.totalorder %s41, 0
      %p319 = por %p317, %p318
      %p320 = scmp.ne.s32.totalorder %s308, %s309
      %p321 = scmp.eq.s32.totalorder %s42, 3
      %p322 = por %p320, %p321
      %p324 = scmp.ne.s32.totalorder %s309, %s323
      %p325 = scmp.eq.s32.totalorder %s42, 0
      %p326 = por %p324, %p325
      %s328 = sadd.s32 %s327, 1
      %p331 = scmp.eq.s32.totalorder %s36, 3
      %p332 = scmp.ne.s32.totalorder %s327, %s329
      %p333 = scmp.eq.s32.totalorder %s36, 0
      %p334 = por %p332, %p333
      %p335 = scmp.ne.s32.totalorder %s327, %s329
      %p336 = scmp.eq.s32.totalorder %s41, 3
      %p337 = por %p335, %p336
      %p338 = scmp.ne.s32.totalorder %s329, %s330
      %p339 = scmp.eq.s32.totalorder %s41, 0
      %p340 = por %p338, %p339
      %p341 = scmp.ne.s32.totalorder %s329, %s330
      %p342 = scmp.eq.s32.totalorder %s42, 3
      %p343 = por %p341, %p342
      %p345 = scmp.ne.s32.totalorder %s330, %s344
      %p346 = scmp.eq.s32.totalorder %s42, 0
      %p347 = por %p345, %p346
      %s349 = sadd.s32 %s348, 1
      %p352 = scmp.eq.s32.totalorder %s36, 3
      %p353 = scmp.ne.s32.totalorder %s348, %s350
      %p354 = scmp.eq.s32.totalorder %s36, 0
      %p355 = por %p353, %p354
      %p356 = scmp.ne.s32.totalorder %s348, %s350
      %p357 = scmp.eq.s32.totalorder %s41, 3
      %p358 = por %p356, %p357
      %p359 = scmp.ne.s32.totalorder %s350, %s351
      %p360 = scmp.eq.s32.totalorder %s41, 0
      %p361 = por %p359, %p360
      %p362 = scmp.ne.s32.totalorder %s350, %s351
      %p363 = scmp.eq.s32.totalorder %s42, 3
      %p364 = por %p362, %p363
      %p366 = scmp.ne.s32.totalorder %s351, %s365
      %p367 = scmp.eq.s32.totalorder %s42, 0
      %p368 = por %p366, %p367
      %s369 = ssub.s32 %s36, %s43
      %p370 = scmp.eq.s32.totalorder %s369, 0
      %s372 = sadd.s32 %s371, 1
      %s373 = scalar_select %p370, %s371, %s372
      %p376 = pneg %p370
      %p377 = scmp.eq.s32.totalorder %s36, 3
      %p378 = por %p376, %p377
      %p379 = scmp.ne.s32.totalorder %s371, %s374
      %p380 = scmp.eq.s32.totalorder %s36, 0
      %p381 = por %p379, %p380
      %p382 = scmp.ne.s32.totalorder %s371, %s374
      %p383 = scmp.eq.s32.totalorder %s41, 3
      %p384 = por %p382, %p383
      %p385 = scmp.ne.s32.totalorder %s374, %s375
      %p386 = scmp.eq.s32.totalorder %s41, 0
      %p387 = por %p385, %p386
      %p388 = scmp.ne.s32.totalorder %s374, %s375
      %p389 = scmp.eq.s32.totalorder %s42, 3
      %p390 = por %p388, %p389
      %p392 = scmp.ne.s32.totalorder %s375, %s391
      %p393 = scmp.eq.s32.totalorder %s42, 0
      %p394 = por %p392, %p393
      %s395 = ssub.s32 %s36, %s43
      %p396 = scmp.eq.s32.totalorder %s395, 0
      %s398 = sadd.s32 %s397, 1
      %s399 = scalar_select %p396, %s397, %s398
      %p402 = pneg %p396
      %p403 = scmp.eq.s32.totalorder %s36, 3
      %p404 = por %p402, %p403
      %p405 = scmp.ne.s32.totalorder %s397, %s400
      %p406 = scmp.eq.s32.totalorder %s36, 0
      %p407 = por %p405, %p406
      %p408 = scmp.ne.s32.totalorder %s397, %s400
      %p409 = scmp.eq.s32.totalorder %s41, 3
      %p410 = por %p408, %p409
      %p411 = scmp.ne.s32.totalorder %s400, %s401
      %p412 = scmp.eq.s32.totalorder %s41, 0
      %p413 = por %p411, %p412
      %p414 = scmp.ne.s32.totalorder %s400, %s401
      %p415 = scmp.eq.s32.totalorder %s42, 3
      %p416 = por %p414, %p415
      %p418 = scmp.ne.s32.totalorder %s401, %s417
      %p419 = scmp.eq.s32.totalorder %s42, 0
      %p420 = por %p418, %p419
      %p421 = scmp.le.s32.totalorder 1, %s36
      %p422 = scmp.lt.s32.totalorder %s36, 5
      %p423 = pnand %p421, %p422
      %p424 = pneg %p423
      // Predicated region
      $region9: #{tpu_custom_call.1} parent=5 // pred_check
        _
      $region10: #{tpu_custom_call.1} parent=5 // pred_check_branch
        %426 = sbr.rel (%p423) target = $region12
      $region11: #{tpu_custom_call.1} parent=5 // pred_region
        %s427 = ssub.s32 %s36, 1
        // Predicated region
        $region13: #{tpu_custom_call.1} parent=11 // pred_check
          %p428 = pneg %p109
        $region14: #{tpu_custom_call.1} parent=11 // pred_check_branch
          %430 = sbr.rel (%p428) target = $region16
        $region15: #{tpu_custom_call.1} parent=11 // pred_region
          _
        $region16: #{tpu_custom_call.1} parent=11 // pred_fallthru
          _
        // Predicated region
        $region17: #{tpu_custom_call.1} parent=11 // pred_check
          %p431 = pneg %p130
        $region18: #{tpu_custom_call.1} parent=11 // pred_check_branch
          %433 = sbr.rel (%p431) target = $region20
        $region19: #{tpu_custom_call.1} parent=11 // pred_region
          _
        $region20: #{tpu_custom_call.1} parent=11 // pred_fallthru
          _
        // Predicated region
        $region21: #{tpu_custom_call.1} parent=11 // pred_check
          %p434 = pneg %p151
        $region22: #{tpu_custom_call.1} parent=11 // pred_check_branch
          %436 = sbr.rel (%p434) target = $region24
        $region23: #{tpu_custom_call.1} parent=11 // pred_region
          _
        $region24: #{tpu_custom_call.1} parent=11 // pred_fallthru
          _
        // Predicated region
        $region25: #{tpu_custom_call.1} parent=11 // pred_check
          %p437 = pneg %p172
        $region26: #{tpu_custom_call.1} parent=11 // pred_check_branch
          %439 = sbr.rel (%p437) target = $region28
        $region27: #{tpu_custom_call.1} parent=11 // pred_region
          _
        $region28: #{tpu_custom_call.1} parent=11 // pred_fallthru
          _
        // Predicated region
        $region29: #{tpu_custom_call.1} parent=11 // pred_check
          %p440 = pneg %p193
        $region30: #{tpu_custom_call.1} parent=11 // pred_check_branch
          %442 = sbr.rel (%p440) target = $region32
        $region31: #{tpu_custom_call.1} parent=11 // pred_region
          _
        $region32: #{tpu_custom_call.1} parent=11 // pred_fallthru
          _
        // Predicated region
        $region33: #{tpu_custom_call.1} parent=11 // pred_check
          %p443 = pneg %p214
        $region34: #{tpu_custom_call.1} parent=11 // pred_check_branch
          %445 = sbr.rel (%p443) target = $region36
        $region35: #{tpu_custom_call.1} parent=11 // pred_region
          _
        $region36: #{tpu_custom_call.1} parent=11 // pred_fallthru
          _
        // Predicated region
        $region37: #{tpu_custom_call.1} parent=11 // pred_check
          %p446 = pneg %p235
        $region38: #{tpu_custom_call.1} parent=11 // pred_check_branch
          %448 = sbr.rel (%p446) target = $region40
        $region39: #{tpu_custom_call.1} parent=11 // pred_region
          _
        $region40: #{tpu_custom_call.1} parent=11 // pred_fallthru
          _
        // Predicated region
        $region41: #{tpu_custom_call.1} parent=11 // pred_check
          %p449 = pneg %p256
        $region42: #{tpu_custom_call.1} parent=11 // pred_check_branch
          %451 = sbr.rel (%p449) target = $region44
        $region43: #{tpu_custom_call.1} parent=11 // pred_region
          _
        $region44: #{tpu_custom_call.1} parent=11 // pred_fallthru
          _
        // Predicated region
        $region45: #{tpu_custom_call.1} parent=11 // pred_check
          %p452 = pneg %p277
        $region46: #{tpu_custom_call.1} parent=11 // pred_check_branch
          %454 = sbr.rel (%p452) target = $region48
        $region47: #{tpu_custom_call.1} parent=11 // pred_region
          _
        $region48: #{tpu_custom_call.1} parent=11 // pred_fallthru
          _
        // Predicated region
        $region49: #{tpu_custom_call.1} parent=11 // pred_check
          %p455 = pneg %p298
        $region50: #{tpu_custom_call.1} parent=11 // pred_check_branch
          %457 = sbr.rel (%p455) target = $region52
        $region51: #{tpu_custom_call.1} parent=11 // pred_region
          _
        $region52: #{tpu_custom_call.1} parent=11 // pred_fallthru
          _
        // Predicated region
        $region53: #{tpu_custom_call.1} parent=11 // pred_check
          %p458 = pneg %p319
        $region54: #{tpu_custom_call.1} parent=11 // pred_check_branch
          %460 = sbr.rel (%p458) target = $region56
        $region55: #{tpu_custom_call.1} parent=11 // pred_region
          _
        $region56: #{tpu_custom_call.1} parent=11 // pred_fallthru
          _
        // Predicated region
        $region57: #{tpu_custom_call.1} parent=11 // pred_check
          %p461 = pneg %p340
        $region58: #{tpu_custom_call.1} parent=11 // pred_check_branch
          %463 = sbr.rel (%p461) target = $region60
        $region59: #{tpu_custom_call.1} parent=11 // pred_region
          _
        $region60: #{tpu_custom_call.1} parent=11 // pred_fallthru
          _
        // Predicated region
        $region61: #{tpu_custom_call.1} parent=11 // pred_check
          %p464 = pneg %p361
        $region62: #{tpu_custom_call.1} parent=11 // pred_check_branch
          %466 = sbr.rel (%p464) target = $region64
        $region63: #{tpu_custom_call.1} parent=11 // pred_region
          _
        $region64: #{tpu_custom_call.1} parent=11 // pred_fallthru
          _
      $region12: #{tpu_custom_call.1} parent=5 // pred_fallthru
        _
      %p467 = scmp.lt.s32.totalorder %s36, 4
      // Predicated region
      $region65: #{tpu_custom_call.1} parent=5 // pred_check
        %p468 = pneg %p467
      $region66: #{tpu_custom_call.1} parent=5 // pred_check_branch
        %470 = sbr.rel (%p468) target = $region68
      $region67: #{tpu_custom_call.1} parent=5 // pred_region
        // Predicated region
        $region69: #{tpu_custom_call.1} parent=67 // pred_check
          %p471 = pneg %p56
        $region70: #{tpu_custom_call.1} parent=67 // pred_check_branch
          %473 = sbr.rel (%p471) target = $region72
        $region71: #{tpu_custom_call.1} parent=67 // pred_region
          %s474 = smul.u32 3, %s36
          %p475 = scmp.lt.s32.totalorder %s474, 11
          %s476 = scalar_select %p475, %s474, 11
          %s477 = smul.addr %s476, 8
          %s478 = scalar_lea.vmem %s1, %s477
          %s479 = smul.u32 3, %s36
        $region72: #{tpu_custom_call.1} parent=67 // pred_fallthru
          _
        // Predicated region
        $region73: #{tpu_custom_call.1} parent=67 // pred_check
          %p480 = pneg %p82
        $region74: #{tpu_custom_call.1} parent=67 // pred_check_branch
          %482 = sbr.rel (%p480) target = $region76
        $region75: #{tpu_custom_call.1} parent=67 // pred_region
          %s483 = smul.u32 3, %s36
          %p484 = scmp.lt.s32.totalorder %s483, 11
          %s485 = scalar_select %p484, %s483, 11
          %s486 = smul.addr %s485, 8
          %s487 = scalar_lea.vmem %s2, %s486
          %s488 = smul.u32 3, %s36
        $region76: #{tpu_custom_call.1} parent=67 // pred_fallthru
          _
      $region68: #{tpu_custom_call.1} parent=5 // pred_fallthru
        _
      %p489 = scmp.le.s32.totalorder 1, %s36
      %p490 = scmp.lt.s32.totalorder %s36, 5
      %p491 = pnand %p489, %p490
      %p492 = pneg %p491
      // Predicated region
      $region77: #{tpu_custom_call.1} parent=5 // pred_check
        _
      $region78: #{tpu_custom_call.1} parent=5 // pred_check_branch
        %494 = sbr.rel (%p491) target = $region80
      $region79: #{tpu_custom_call.1} parent=5 // pred_region
        %s495 = ssub.s32 %s36, 1
        %s496 = smul.u32 3, %s41
        %p497 = scmp.lt.s32.totalorder %s496, 11
        %s498 = scalar_select %p497, %s496, 11
        %s499 = smul.addr %s498, 8
        %s500 = scalar_lea.vmem %s1, %s499
        %p501 = pneg %p62
        %p502 = pneg %p59
        %s503 = smul.u32 3, %s41
        %p504 = scmp.lt.s32.totalorder %s503, 11
        %s505 = scalar_select %p504, %s503, 11
        %s506 = smul.addr %s505, 8
        %s507 = scalar_lea.vmem %s2, %s506
        %p508 = pneg %p88
        %p509 = pneg %p85
        %p510 = pneg %p109
        %p511 = pneg %p106
        %p512 = pneg %p130
        %p513 = pneg %p127
        %p514 = pneg %p151
        %p515 = pneg %p148
        %p516 = pneg %p172
        %p517 = pneg %p169
        %p518 = pneg %p193
        %p519 = pneg %p190
        %p520 = pneg %p214
        %p521 = pneg %p211
        %p522 = pneg %p235
        %p523 = pneg %p232
        %p524 = pneg %p256
        %p525 = pneg %p253
        %p526 = pneg %p277
        %p527 = pneg %p274
        %p528 = pneg %p298
        %p529 = pneg %p295
        %p530 = pneg %p319
        %p531 = pneg %p316
        %p532 = pneg %p340
        %p533 = pneg %p337
        %p534 = pneg %p361
        %p535 = pneg %p358
        %p536 = pneg %p387
        %p537 = pneg %p384
        %s538 = sand.u32 %s374, 1
        %s539 = scalar_lea.sflag [#allocation5], %s538
        %s540 = sand.u32 %s374, 1
        %s541 = smul.addr %s540, 24
        %s542 = scalar_lea.vmem [#allocation4], %s541
        %p543 = pneg %p413
        %p544 = pneg %p410
        %s545 = sand.u32 %s400, 1
        %s546 = scalar_lea.sflag [#allocation7], %s545
        %s547 = sand.u32 %s400, 1
        %s548 = smul.addr %s547, 24
        %s549 = scalar_lea.vmem [#allocation6], %s548
        %s550 = smul.u32 3, %s41
        %p551 = scmp.lt.s32.totalorder %s550, 11
        %s552 = scalar_select %p551, %s550, 11
        %s553 = smul.addr %s552, 8
        %s554 = scalar_lea.vmem %s1, %s553
        %s555 = smul.u32 3, %s41
        %s556 = smul.u32 3, %s41
        %p557 = scmp.lt.s32.totalorder %s556, 11
        %s558 = scalar_select %p557, %s556, 11
        %s559 = smul.addr %s558, 8
        %s560 = scalar_lea.vmem %s2, %s559
        %s561 = smul.u32 3, %s41
        %s562 = smul.u32 3, %s41
        %s563 = smul.u32 3, %s41
        %v564 = vld [vmem:[%s560] sm:$0xff]
        %v565 = vld [vmem:[%s560 + $0x8] sm:$0xff]
        %v566 = vld [vmem:[%s560 + $0x10] sm:$0xff]
        %v567 = vld [vmem:[%s554] sm:$0xff]
        %v568 = vld [vmem:[%s554 + $0x8] sm:$0xff]
        %v569 = vld [vmem:[%s554 + $0x10] sm:$0xff]
        %v571 = vrot.slane %v569, 7
        %vm575 = vcmask 1040384
        %v576 = vrot.slane %v567, 7
        %v577 = vrot.slane %v568, 7
        %v578 = vsel %vm575, %v576, %v577
        %v579 = vsel %vm575, %v577, %v571
        %v581 = vsel %vm575, %v571, %v576
        %vm582 = vcmask 1046528
        %v583 = vrot.slane %v567, 1
        %v584 = vrot.slane %v568, 1
        %v585 = vsel %vm582, %v583, %v584
        %v586 = vrot.slane %v569, 1
        %v587 = vsel %vm582, %v584, %v586
        %v590 = vsel %vm582, %v586, %v583
        %v591 = vld [vmem:[%s3] sm:$0xff]
        %v592 = vld [vmem:[%s3 + $0x8] sm:$0xff]
        %v593 = vld [vmem:[%s3 + $0x10] sm:$0xff]
        %v594 = vld [vmem:[%s3 + $0x18] sm:$0xff]
        %v595 = vld [vmem:[%s3 + $0x20] sm:$0xff]
        %v596 = vld [vmem:[%s3 + $0x28] sm:$0xff]
        %v597 = vld [vmem:[%s3 + $0x30] sm:$0xff]
        %v598 = vld [vmem:[%s3 + $0x38] sm:$0xff]
        %s599 = scalar_lea.vmem %s3, 64
        %v600 = vld [vmem:[%s599] sm:$0xff]
        %v601 = vld [vmem:[%s599 + $0x8] sm:$0xff]
        %v602 = vld [vmem:[%s599 + $0x10] sm:$0xff]
        %v603 = vld [vmem:[%s599 + $0x18] sm:$0xff]
        %v604 = vld [vmem:[%s599 + $0x20] sm:$0xff]
        %v605 = vld [vmem:[%s599 + $0x28] sm:$0xff]
        %v606 = vld [vmem:[%s599 + $0x30] sm:$0xff]
        %v607 = vld [vmem:[%s599 + $0x38] sm:$0xff]
        %vm608 = vcmask 523264
        %v609 = vsel %vm608, %v567, 0
        %v611 = vsel %vm608, %v568, 0
        %v613 = vsel %vm608, %v569, 0
        %615 = vmatprep.subr.mxu0 0.0
        %616 = vmatpush1.msra.mxu0 %v600
        %617 = vmatprep.subr.mxu0 0.0
        %618 = vmatpush1.msra.mxu0 %v601
        %619 = vmatprep.subr.mxu0 0.0
        %620 = vmatpush1.msra.mxu0 %v602
        %621 = vmatprep.subr.mxu0 0.0
        %622 = vmatpush1.msra.mxu0 %v603
        %623 = vmatprep.subr.mxu0 0.0
        %624 = vmatpush1.msra.mxu0 %v604
        %625 = vmatprep.subr.mxu0 0.0
        %626 = vmatpush1.msra.mxu0 %v605
        %627 = vmatprep.subr.mxu0 0.0
        %628 = vmatpush1.msra.mxu0 %v606
        %629 = vmatprep.subr.mxu0 0.0
        %630 = vmatpush1.msra.mxu0 %v607
        %631 = vmatprep.subr.mxu0 0.0
        %632 = vmatpush1.msra.mxu0 0.0
        %633 = vmatprep.subr.mxu0 0.0
        %634 = vmatpush1.msra.mxu0 0.0
        %635 = vmatprep.subr.mxu0 0.0
        %636 = vmatpush1.msra.mxu0 0.0
        %637 = vmatprep.subr.mxu0 0.0
        %638 = vmatpush1.msra.mxu0 0.0
        %639 = vmatprep.subr.mxu0 0.0
        %640 = vmatpush1.msra.mxu0 0.0
        %641 = vmatprep.subr.mxu0 0.0
        %642 = vmatpush1.msra.mxu0 0.0
        %643 = vmatprep.subr.mxu0 0.0
        %644 = vmatpush1.msra.mxu0 0.0
        %645 = vmatprep.subr.mxu0 0.0
        %646 = vmatpush1.msra.mxu0 0.0
        %647 = vmatprep.subr.mxu0 0.0
        %648 = vmatpush1.msra.mxu0 0.0
        %649 = vmatprep.subr.mxu0 0.0
        %650 = vmatpush1.msra.mxu0 0.0
        %651 = vmatprep.subr.mxu0 0.0
        %652 = vmatpush1.msra.mxu0 0.0
        %653 = vmatprep.subr.mxu0 0.0
        %654 = vmatpush1.msra.mxu0 0.0
        %655 = vmatprep.subr.mxu0 0.0
        %656 = vmatpush1.msra.mxu0 0.0
        %657 = vmatprep.subr.mxu0 0.0
        %658 = vmatpush1.msra.mxu0 0.0
        %659 = vmatprep.subr.mxu0 0.0
        %660 = vmatpush1.msra.mxu0 0.0
        %661 = vmatprep.subr.mxu0 0.0
        %662 = vmatpush1.msra.mxu0 0.0
        %663 = vmatprep.subr.mxu0 0.0
        %664 = vmatpush1.msra.mxu0 0.0
        %665 = vmatprep.subr.mxu0 0.0
        %666 = vmatpush1.msra.mxu0 0.0
        %667 = vmatprep.subr.mxu0 0.0
        %668 = vmatpush1.msra.mxu0 0.0
        %669 = vmatprep.subr.mxu0 0.0
        %670 = vmatpush1.msra.mxu0 0.0
        %671 = vmatprep.subr.mxu0 0.0
        %672 = vmatpush1.msra.mxu0 0.0
        %673 = vmatprep.subr.mxu0 0.0
        %674 = vmatpush1.msra.mxu0 0.0
        %675 = vmatprep.subr.mxu0 0.0
        %676 = vmatpush1.msra.mxu0 0.0
        %677 = vmatprep.subr.mxu0 0.0
        %678 = vmatpush1.msra.mxu0 0.0
        %679 = vmatprep.mubr.f32.mxu0 0.0
        %680 = vmatmul.mubr.f32.gmra.mrb[0].mxu0 %v609
        %v681 = vpop.f32.mrb[0].mxu0
        %v682 = vadd.f32 0.0, %v681
        %v683 = vpop.f32.mrb[0].mxu0
        %684 = vmatprep.mubr.f32.mxu0 0.0
        %685 = vmatmul.mubr.f32.gmra.mrb[0].mxu0 %v611
        %v686 = vpop.f32.mrb[0].mxu0
        %v687 = vadd.f32 0.0, %v686
        %v688 = vpop.f32.mrb[0].mxu0
        %689 = vmatprep.mubr.f32.mxu0 0.0
        %690 = vmatmul.mubr.f32.gmra.mrb[0].mxu0 %v613
        %v691 = vpop.f32.mrb[0].mxu0
        %v692 = vadd.f32 0.0, %v691
        %v693 = vpop.f32.mrb[0].mxu0
        %694 = vdwg.mxu0
        %v696 = vsel %vm608, %v581, 0
        %v698 = vsel %vm608, %v578, 0
        %v700 = vsel %vm608, %v579, 0
        %702 = vmatprep.subr.mxu0 0.0
        %703 = vmatpush1.msra.mxu0 %v591
        %704 = vmatprep.subr.mxu0 0.0
        %705 = vmatpush1.msra.mxu0 %v592
        %706 = vmatprep.subr.mxu0 0.0
        %707 = vmatpush1.msra.mxu0 %v593
        %708 = vmatprep.subr.mxu0 0.0
        %709 = vmatpush1.msra.mxu0 %v594
        %710 = vmatprep.subr.mxu0 0.0
        %711 = vmatpush1.msra.mxu0 %v595
        %712 = vmatprep.subr.mxu0 0.0
        %713 = vmatpush1.msra.mxu0 %v596
        %714 = vmatprep.subr.mxu0 0.0
        %715 = vmatpush1.msra.mxu0 %v597
        %716 = vmatprep.subr.mxu0 0.0
        %717 = vmatpush1.msra.mxu0 %v598
        %718 = vmatprep.subr.mxu0 0.0
        %719 = vmatpush1.msra.mxu0 0.0
        %720 = vmatprep.subr.mxu0 0.0
        %721 = vmatpush1.msra.mxu0 0.0
        %722 = vmatprep.subr.mxu0 0.0
        %723 = vmatpush1.msra.mxu0 0.0
        %724 = vmatprep.subr.mxu0 0.0
        %725 = vmatpush1.msra.mxu0 0.0
        %726 = vmatprep.subr.mxu0 0.0
        %727 = vmatpush1.msra.mxu0 0.0
        %728 = vmatprep.subr.mxu0 0.0
        %729 = vmatpush1.msra.mxu0 0.0
        %730 = vmatprep.subr.mxu0 0.0
        %731 = vmatpush1.msra.mxu0 0.0
        %732 = vmatprep.subr.mxu0 0.0
        %733 = vmatpush1.msra.mxu0 0.0
        %734 = vmatprep.subr.mxu0 0.0
        %735 = vmatpush1.msra.mxu0 0.0
        %736 = vmatprep.subr.mxu0 0.0
        %737 = vmatpush1.msra.mxu0 0.0
        %738 = vmatprep.subr.mxu0 0.0
        %739 = vmatpush1.msra.mxu0 0.0
        %740 = vmatprep.subr.mxu0 0.0
        %741 = vmatpush1.msra.mxu0 0.0
        %742 = vmatprep.subr.mxu0 0.0
        %743 = vmatpush1.msra.mxu0 0.0
        %744 = vmatprep.subr.mxu0 0.0
        %745 = vmatpush1.msra.mxu0 0.0
        %746 = vmatprep.subr.mxu0 0.0
        %747 = vmatpush1.msra.mxu0 0.0
        %748 = vmatprep.subr.mxu0 0.0
        %749 = vmatpush1.msra.mxu0 0.0
        %750 = vmatprep.subr.mxu0 0.0
        %751 = vmatpush1.msra.mxu0 0.0
        %752 = vmatprep.subr.mxu0 0.0
        %753 = vmatpush1.msra.mxu0 0.0
        %754 = vmatprep.subr.mxu0 0.0
        %755 = vmatpush1.msra.mxu0 0.0
        %756 = vmatprep.subr.mxu0 0.0
        %757 = vmatpush1.msra.mxu0 0.0
        %758 = vmatprep.subr.mxu0 0.0
        %759 = vmatpush1.msra.mxu0 0.0
        %760 = vmatprep.subr.mxu0 0.0
        %761 = vmatpush1.msra.mxu0 0.0
        %762 = vmatprep.subr.mxu0 0.0
        %763 = vmatpush1.msra.mxu0 0.0
        %764 = vmatprep.subr.mxu0 0.0
        %765 = vmatpush1.msra.mxu0 0.0
        %766 = vmatprep.mubr.f32.mxu0 0.0
        %767 = vmatmul.mubr.f32.gmra.mrb[0].mxu0 %v696
        %v768 = vpop.f32.mrb[0].mxu0
        %v769 = vadd.f32 %v682, %v768
        %v770 = vpop.f32.mrb[0].mxu0
        %771 = vmatprep.mubr.f32.mxu0 0.0
        %772 = vmatmul.mubr.f32.gmra.mrb[0].mxu0 %v698
        %v773 = vpop.f32.mrb[0].mxu0
        %v774 = vadd.f32 %v687, %v773
        %v775 = vpop.f32.mrb[0].mxu0
        %776 = vmatprep.mubr.f32.mxu0 0.0
        %777 = vmatmul.mubr.f32.gmra.mrb[0].mxu0 %v700
        %v778 = vpop.f32.mrb[0].mxu0
        %v779 = vadd.f32 %v692, %v778
        %v780 = vpop.f32.mrb[0].mxu0
        %781 = vdwg.mxu0
        %s782 = scalar_lea.vmem %s3, 128
        %v783 = vld [vmem:[%s782] sm:$0xff]
        %v784 = vld [vmem:[%s782 + $0x8] sm:$0xff]
        %v785 = vld [vmem:[%s782 + $0x10] sm:$0xff]
        %v786 = vld [vmem:[%s782 + $0x18] sm:$0xff]
        %v787 = vld [vmem:[%s782 + $0x20] sm:$0xff]
        %v788 = vld [vmem:[%s782 + $0x28] sm:$0xff]
        %v789 = vld [vmem:[%s782 + $0x30] sm:$0xff]
        %v790 = vld [vmem:[%s782 + $0x38] sm:$0xff]
        %v791 = vsel %vm608, %v585, 0
        %v793 = vsel %vm608, %v587, 0
        %v796 = vsel %vm608, %v590, 0
        %798 = vmatprep.subr.mxu0 0.0
        %799 = vmatpush1.msra.mxu0 %v783
        %800 = vmatprep.subr.mxu0 0.0
        %801 = vmatpush1.msra.mxu0 %v784
        %802 = vmatprep.subr.mxu0 0.0
        %803 = vmatpush1.msra.mxu0 %v785
        %804 = vmatprep.subr.mxu0 0.0
        %805 = vmatpush1.msra.mxu0 %v786
        %806 = vmatprep.subr.mxu0 0.0
        %807 = vmatpush1.msra.mxu0 %v787
        %808 = vmatprep.subr.mxu0 0.0
        %809 = vmatpush1.msra.mxu0 %v788
        %810 = vmatprep.subr.mxu0 0.0
        %811 = vmatpush1.msra.mxu0 %v789
        %812 = vmatprep.subr.mxu0 0.0
        %813 = vmatpush1.msra.mxu0 %v790
        %814 = vmatprep.subr.mxu0 0.0
        %815 = vmatpush1.msra.mxu0 0.0
        %816 = vmatprep.subr.mxu0 0.0
        %817 = vmatpush1.msra.mxu0 0.0
        %818 = vmatprep.subr.mxu0 0.0
        %819 = vmatpush1.msra.mxu0 0.0
        %820 = vmatprep.subr.mxu0 0.0
        %821 = vmatpush1.msra.mxu0 0.0
        %822 = vmatprep.subr.mxu0 0.0
        %823 = vmatpush1.msra.mxu0 0.0
        %824 = vmatprep.subr.mxu0 0.0
        %825 = vmatpush1.msra.mxu0 0.0
        %826 = vmatprep.subr.mxu0 0.0
        %827 = vmatpush1.msra.mxu0 0.0
        %828 = vmatprep.subr.mxu0 0.0
        %829 = vmatpush1.msra.mxu0 0.0
        %830 = vmatprep.subr.mxu0 0.0
        %831 = vmatpush1.msra.mxu0 0.0
        %832 = vmatprep.subr.mxu0 0.0
        %833 = vmatpush1.msra.mxu0 0.0
        %834 = vmatprep.subr.mxu0 0.0
        %835 = vmatpush1.msra.mxu0 0.0
        %836 = vmatprep.subr.mxu0 0.0
        %837 = vmatpush1.msra.mxu0 0.0
        %838 = vmatprep.subr.mxu0 0.0
        %839 = vmatpush1.msra.mxu0 0.0
        %840 = vmatprep.subr.mxu0 0.0
        %841 = vmatpush1.msra.mxu0 0.0
        %842 = vmatprep.subr.mxu0 0.0
        %843 = vmatpush1.msra.mxu0 0.0
        %844 = vmatprep.subr.mxu0 0.0
        %845 = vmatpush1.msra.mxu0 0.0
        %846 = vmatprep.subr.mxu0 0.0
        %847 = vmatpush1.msra.mxu0 0.0
        %848 = vmatprep.subr.mxu0 0.0
        %849 = vmatpush1.msra.mxu0 0.0
        %850 = vmatprep.subr.mxu0 0.0
        %851 = vmatpush1.msra.mxu0 0.0
        %852 = vmatprep.subr.mxu0 0.0
        %853 = vmatpush1.msra.mxu0 0.0
        %854 = vmatprep.subr.mxu0 0.0
        %855 = vmatpush1.msra.mxu0 0.0
        %856 = vmatprep.subr.mxu0 0.0
        %857 = vmatpush1.msra.mxu0 0.0
        %858 = vmatprep.subr.mxu0 0.0
        %859 = vmatpush1.msra.mxu0 0.0
        %860 = vmatprep.subr.mxu0 0.0
        %861 = vmatpush1.msra.mxu0 0.0
        %862 = vmatprep.mubr.f32.mxu0 0.0
        %863 = vmatmul.mubr.f32.gmra.mrb[0].mxu0 %v791
        %v864 = vpop.f32.mrb[0].mxu0
        %v865 = vadd.f32 0.0, %v864
        %v866 = vpop.f32.mrb[0].mxu0
        %867 = vmatprep.mubr.f32.mxu0 0.0
        %868 = vmatmul.mubr.f32.gmra.mrb[0].mxu0 %v793
        %v869 = vpop.f32.mrb[0].mxu0
        %v870 = vadd.f32 0.0, %v869
        %v871 = vpop.f32.mrb[0].mxu0
        %872 = vmatprep.mubr.f32.mxu0 0.0
        %873 = vmatmul.mubr.f32.gmra.mrb[0].mxu0 %v796
        %v874 = vpop.f32.mrb[0].mxu0
        %v875 = vadd.f32 0.0, %v874
        %v876 = vpop.f32.mrb[0].mxu0
        %877 = vdwg.mxu0
        %v878 = vadd.f32 %v769, %v865
        %v879 = vadd.f32 %v774, %v870
        %v880 = vadd.f32 %v779, %v875
        %v881 = vld [vmem:[%s4] sm:$0x1]
        %v883 = vlaneseq
        %v884 = vshrl.u32 %v883, 7
        %v885 = vsub.s32 0, %v884
        %v886 = vrot.slane %v881, %v885
        %v888 = vadd.f32 %v878, %v886
        %v889 = vadd.f32 %v879, %v886
        %v890 = vadd.f32 %v880, %v886
        %892 = vset.pattern.permute.xlu0 0
        %893 = vperm.xlu0 %892, %v564
        %v894 = vpop.permute.xlu0 %893
        %897 = vset.pattern.permute.xlu0 0
        %898 = vperm.xlu0 %897, %v565
        %v899 = vpop.permute.xlu0 %898
        %902 = vset.pattern.permute.xlu0 0
        %903 = vperm.xlu0 %902, %v566
        %v904 = vpop.permute.xlu0 %903
        %v906 = vmul.f32 %v888, %v894
        %v907 = vmul.f32 %v889, %v899
        %v908 = vmul.f32 %v890, %v904
        %v909 = vmax.f32 %v906, 0.0
        %v910 = vmax.f32 %v907, 0.0
        %v911 = vmax.f32 %v908, 0.0
        %v913 = vrot.slane %v911, 7
        %v917 = vrot.slane %v909, 7
        %v918 = vrot.slane %v910, 7
        %v919 = vsel %vm575, %v917, %v918
        %v920 = vsel %vm575, %v918, %v913
        %v922 = vsel %vm575, %v913, %v917
        %v923 = vrot.slane %v909, 1
        %v924 = vrot.slane %v910, 1
        %v925 = vsel %vm582, %v923, %v924
        %v926 = vrot.slane %v911, 1
        %v927 = vsel %vm582, %v924, %v926
        %v930 = vsel %vm582, %v926, %v923
        %v931 = vld [vmem:[%s5] sm:$0xff]
        %v932 = vld [vmem:[%s5 + $0x8] sm:$0xff]
        %v933 = vld [vmem:[%s5 + $0x10] sm:$0xff]
        %v934 = vld [vmem:[%s5 + $0x18] sm:$0xff]
        %s935 = scalar_lea.vmem %s5, 32
        %v936 = vld [vmem:[%s935] sm:$0xff]
        %v937 = vld [vmem:[%s935 + $0x8] sm:$0xff]
        %v938 = vld [vmem:[%s935 + $0x10] sm:$0xff]
        %v939 = vld [vmem:[%s935 + $0x18] sm:$0xff]
        %vm940 = vcmask 261120
        %v941 = vsel %vm940, %v909, 0
        %v943 = vsel %vm940, %v910, 0
        %v945 = vsel %vm940, %v911, 0
        %947 = vmatprep.subr.mxu0 0.0
        %948 = vmatpush1.msra.mxu0 %v936
        %949 = vmatprep.subr.mxu0 0.0
        %950 = vmatpush1.msra.mxu0 %v937
        %951 = vmatprep.subr.mxu0 0.0
        %952 = vmatpush1.msra.mxu0 %v938
        %953 = vmatprep.subr.mxu0 0.0
        %954 = vmatpush1.msra.mxu0 %v939
        %955 = vmatprep.subr.mxu0 0.0
        %956 = vmatpush1.msra.mxu0 0.0
        %957 = vmatprep.subr.mxu0 0.0
        %958 = vmatpush1.msra.mxu0 0.0
        %959 = vmatprep.subr.mxu0 0.0
        %960 = vmatpush1.msra.mxu0 0.0
        %961 = vmatprep.subr.mxu0 0.0
        %962 = vmatpush1.msra.mxu0 0.0
        %963 = vmatprep.subr.mxu0 0.0
        %964 = vmatpush1.msra.mxu0 0.0
        %965 = vmatprep.subr.mxu0 0.0
        %966 = vmatpush1.msra.mxu0 0.0
        %967 = vmatprep.subr.mxu0 0.0
        %968 = vmatpush1.msra.mxu0 0.0
        %969 = vmatprep.subr.mxu0 0.0
        %970 = vmatpush1.msra.mxu0 0.0
        %971 = vmatprep.subr.mxu0 0.0
        %972 = vmatpush1.msra.mxu0 0.0
        %973 = vmatprep.subr.mxu0 0.0
        %974 = vmatpush1.msra.mxu0 0.0
        %975 = vmatprep.subr.mxu0 0.0
        %976 = vmatpush1.msra.mxu0 0.0
        %977 = vmatprep.subr.mxu0 0.0
        %978 = vmatpush1.msra.mxu0 0.0
        %979 = vmatprep.subr.mxu0 0.0
        %980 = vmatpush1.msra.mxu0 0.0
        %981 = vmatprep.subr.mxu0 0.0
        %982 = vmatpush1.msra.mxu0 0.0
        %983 = vmatprep.subr.mxu0 0.0
        %984 = vmatpush1.msra.mxu0 0.0
        %985 = vmatprep.subr.mxu0 0.0
        %986 = vmatpush1.msra.mxu0 0.0
        %987 = vmatprep.subr.mxu0 0.0
        %988 = vmatpush1.msra.mxu0 0.0
        %989 = vmatprep.subr.mxu0 0.0
        %990 = vmatpush1.msra.mxu0 0.0
        %991 = vmatprep.subr.mxu0 0.0
        %992 = vmatpush1.msra.mxu0 0.0
        %993 = vmatprep.subr.mxu0 0.0
        %994 = vmatpush1.msra.mxu0 0.0
        %995 = vmatprep.subr.mxu0 0.0
        %996 = vmatpush1.msra.mxu0 0.0
        %997 = vmatprep.subr.mxu0 0.0
        %998 = vmatpush1.msra.mxu0 0.0
        %999 = vmatprep.subr.mxu0 0.0
        %1000 = vmatpush1.msra.mxu0 0.0
        %1001 = vmatprep.subr.mxu0 0.0
        %1002 = vmatpush1.msra.mxu0 0.0
        %1003 = vmatprep.subr.mxu0 0.0
        %1004 = vmatpush1.msra.mxu0 0.0
        %1005 = vmatprep.subr.mxu0 0.0
        %1006 = vmatpush1.msra.mxu0 0.0
        %1007 = vmatprep.subr.mxu0 0.0
        %1008 = vmatpush1.msra.mxu0 0.0
        %1009 = vmatprep.subr.mxu0 0.0
        %1010 = vmatpush1.msra.mxu0 0.0
        %1011 = vmatprep.mubr.f32.mxu0 0.0
        %1012 = vmatmul.mubr.f32.gmra.mrb[0].mxu0 %v941
        %v1013 = vpop.f32.mrb[0].mxu0
        %v1014 = vadd.f32 0.0, %v1013
        %v1015 = vpop.f32.mrb[0].mxu0
        %1016 = vmatprep.mubr.f32.mxu0 0.0
        %1017 = vmatmul.mubr.f32.gmra.mrb[0].mxu0 %v943
        %v1018 = vpop.f32.mrb[0].mxu0
        %v1019 = vadd.f32 0.0, %v1018
        %v1020 = vpop.f32.mrb[0].mxu0
        %1021 = vmatprep.mubr.f32.mxu0 0.0
        %1022 = vmatmul.mubr.f32.gmra.mrb[0].mxu0 %v945
        %v1023 = vpop.f32.mrb[0].mxu0
        %v1024 = vadd.f32 0.0, %v1023
        %v1025 = vpop.f32.mrb[0].mxu0
        %1026 = vdwg.mxu0
        %v1028 = vsel %vm940, %v922, 0
        %v1030 = vsel %vm940, %v919, 0
        %v1032 = vsel %vm940, %v920, 0
        %1034 = vmatprep.subr.mxu0 0.0
        %1035 = vmatpush1.msra.mxu0 %v931
        %1036 = vmatprep.subr.mxu0 0.0
        %1037 = vmatpush1.msra.mxu0 %v932
        %1038 = vmatprep.subr.mxu0 0.0
        %1039 = vmatpush1.msra.mxu0 %v933
        %1040 = vmatprep.subr.mxu0 0.0
        %1041 = vmatpush1.msra.mxu0 %v934
        %1042 = vmatprep.subr.mxu0 0.0
        %1043 = vmatpush1.msra.mxu0 0.0
        %1044 = vmatprep.subr.mxu0 0.0
        %1045 = vmatpush1.msra.mxu0 0.0
        %1046 = vmatprep.subr.mxu0 0.0
        %1047 = vmatpush1.msra.mxu0 0.0
        %1048 = vmatprep.subr.mxu0 0.0
        %1049 = vmatpush1.msra.mxu0 0.0
        %1050 = vmatprep.subr.mxu0 0.0
        %1051 = vmatpush1.msra.mxu0 0.0
        %1052 = vmatprep.subr.mxu0 0.0
        %1053 = vmatpush1.msra.mxu0 0.0
        %1054 = vmatprep.subr.mxu0 0.0
        %1055 = vmatpush1.msra.mxu0 0.0
        %1056 = vmatprep.subr.mxu0 0.0
        %1057 = vmatpush1.msra.mxu0 0.0
        %1058 = vmatprep.subr.mxu0 0.0
        %1059 = vmatpush1.msra.mxu0 0.0
        %1060 = vmatprep.subr.mxu0 0.0
        %1061 = vmatpush1.msra.mxu0 0.0
        %1062 = vmatprep.subr.mxu0 0.0
        %1063 = vmatpush1.msra.mxu0 0.0
        %1064 = vmatprep.subr.mxu0 0.0
        %1065 = vmatpush1.msra.mxu0 0.0
        %1066 = vmatprep.subr.mxu0 0.0
        %1067 = vmatpush1.msra.mxu0 0.0
        %1068 = vmatprep.subr.mxu0 0.0
        %1069 = vmatpush1.msra.mxu0 0.0
        %1070 = vmatprep.subr.mxu0 0.0
        %1071 = vmatpush1.msra.mxu0 0.0
        %1072 = vmatprep.subr.mxu0 0.0
        %1073 = vmatpush1.msra.mxu0 0.0
        %1074 = vmatprep.subr.mxu0 0.0
        %1075 = vmatpush1.msra.mxu0 0.0
        %1076 = vmatprep.subr.mxu0 0.0
        %1077 = vmatpush1.msra.mxu0 0.0
        %1078 = vmatprep.subr.mxu0 0.0
        %1079 = vmatpush1.msra.mxu0 0.0
        %1080 = vmatprep.subr.mxu0 0.0
        %1081 = vmatpush1.msra.mxu0 0.0
        %1082 = vmatprep.subr.mxu0 0.0
        %1083 = vmatpush1.msra.mxu0 0.0
        %1084 = vmatprep.subr.mxu0 0.0
        %1085 = vmatpush1.msra.mxu0 0.0
        %1086 = vmatprep.subr.mxu0 0.0
        %1087 = vmatpush1.msra.mxu0 0.0
        %1088 = vmatprep.subr.mxu0 0.0
        %1089 = vmatpush1.msra.mxu0 0.0
        %1090 = vmatprep.subr.mxu0 0.0
        %1091 = vmatpush1.msra.mxu0 0.0
        %1092 = vmatprep.subr.mxu0 0.0
        %1093 = vmatpush1.msra.mxu0 0.0
        %1094 = vmatprep.subr.mxu0 0.0
        %1095 = vmatpush1.msra.mxu0 0.0
        %1096 = vmatprep.subr.mxu0 0.0
        %1097 = vmatpush1.msra.mxu0 0.0
        %1098 = vmatprep.mubr.f32.mxu0 0.0
        %1099 = vmatmul.mubr.f32.gmra.mrb[0].mxu0 %v1028
        %v1100 = vpop.f32.mrb[0].mxu0
        %v1101 = vadd.f32 %v1014, %v1100
        %v1102 = vpop.f32.mrb[0].mxu0
        %1103 = vmatprep.mubr.f32.mxu0 0.0
        %1104 = vmatmul.mubr.f32.gmra.mrb[0].mxu0 %v1030
        %v1105 = vpop.f32.mrb[0].mxu0
        %v1106 = vadd.f32 %v1019, %v1105
        %v1107 = vpop.f32.mrb[0].mxu0
        %1108 = vmatprep.mubr.f32.mxu0 0.0
        %1109 = vmatmul.mubr.f32.gmra.mrb[0].mxu0 %v1032
        %v1110 = vpop.f32.mrb[0].mxu0
        %v1111 = vadd.f32 %v1024, %v1110
        %v1112 = vpop.f32.mrb[0].mxu0
        %1113 = vdwg.mxu0
        %s1114 = scalar_lea.vmem %s5, 64
        %v1115 = vld [vmem:[%s1114] sm:$0xff]
        %v1116 = vld [vmem:[%s1114 + $0x8] sm:$0xff]
        %v1117 = vld [vmem:[%s1114 + $0x10] sm:$0xff]
        %v1118 = vld [vmem:[%s1114 + $0x18] sm:$0xff]
        %v1119 = vsel %vm940, %v925, 0
        %v1121 = vsel %vm940, %v927, 0
        %v1124 = vsel %vm940, %v930, 0
        %1126 = vmatprep.subr.mxu0 0.0
        %1127 = vmatpush1.msra.mxu0 %v1115
        %1128 = vmatprep.subr.mxu0 0.0
        %1129 = vmatpush1.msra.mxu0 %v1116
        %1130 = vmatprep.subr.mxu0 0.0
        %1131 = vmatpush1.msra.mxu0 %v1117
        %1132 = vmatprep.subr.mxu0 0.0
        %1133 = vmatpush1.msra.mxu0 %v1118
        %1134 = vmatprep.subr.mxu0 0.0
        %1135 = vmatpush1.msra.mxu0 0.0
        %1136 = vmatprep.subr.mxu0 0.0
        %1137 = vmatpush1.msra.mxu0 0.0
        %1138 = vmatprep.subr.mxu0 0.0
        %1139 = vmatpush1.msra.mxu0 0.0
        %1140 = vmatprep.subr.mxu0 0.0
        %1141 = vmatpush1.msra.mxu0 0.0
        %1142 = vmatprep.subr.mxu0 0.0
        %1143 = vmatpush1.msra.mxu0 0.0
        %1144 = vmatprep.subr.mxu0 0.0
        %1145 = vmatpush1.msra.mxu0 0.0
        %1146 = vmatprep.subr.mxu0 0.0
        %1147 = vmatpush1.msra.mxu0 0.0
        %1148 = vmatprep.subr.mxu0 0.0
        %1149 = vmatpush1.msra.mxu0 0.0
        %1150 = vmatprep.subr.mxu0 0.0
        %1151 = vmatpush1.msra.mxu0 0.0
        %1152 = vmatprep.subr.mxu0 0.0
        %1153 = vmatpush1.msra.mxu0 0.0
        %1154 = vmatprep.subr.mxu0 0.0
        %1155 = vmatpush1.msra.mxu0 0.0
        %1156 = vmatprep.subr.mxu0 0.0
        %1157 = vmatpush1.msra.mxu0 0.0
        %1158 = vmatprep.subr.mxu0 0.0
        %1159 = vmatpush1.msra.mxu0 0.0
        %1160 = vmatprep.subr.mxu0 0.0
        %1161 = vmatpush1.msra.mxu0 0.0
        %1162 = vmatprep.subr.mxu0 0.0
        %1163 = vmatpush1.msra.mxu0 0.0
        %1164 = vmatprep.subr.mxu0 0.0
        %1165 = vmatpush1.msra.mxu0 0.0
        %1166 = vmatprep.subr.mxu0 0.0
        %1167 = vmatpush1.msra.mxu0 0.0
        %1168 = vmatprep.subr.mxu0 0.0
        %1169 = vmatpush1.msra.mxu0 0.0
        %1170 = vmatprep.subr.mxu0 0.0
        %1171 = vmatpush1.msra.mxu0 0.0
        %1172 = vmatprep.subr.mxu0 0.0
        %1173 = vmatpush1.msra.mxu0 0.0
        %1174 = vmatprep.subr.mxu0 0.0
        %1175 = vmatpush1.msra.mxu0 0.0
        %1176 = vmatprep.subr.mxu0 0.0
        %1177 = vmatpush1.msra.mxu0 0.0
        %1178 = vmatprep.subr.mxu0 0.0
        %1179 = vmatpush1.msra.mxu0 0.0
        %1180 = vmatprep.subr.mxu0 0.0
        %1181 = vmatpush1.msra.mxu0 0.0
        %1182 = vmatprep.subr.mxu0 0.0
        %1183 = vmatpush1.msra.mxu0 0.0
        %1184 = vmatprep.subr.mxu0 0.0
        %1185 = vmatpush1.msra.mxu0 0.0
        %1186 = vmatprep.subr.mxu0 0.0
        %1187 = vmatpush1.msra.mxu0 0.0
        %1188 = vmatprep.subr.mxu0 0.0
        %1189 = vmatpush1.msra.mxu0 0.0
        %1190 = vmatprep.mubr.f32.mxu0 0.0
        %1191 = vmatmul.mubr.f32.gmra.mrb[0].mxu0 %v1119
        %v1192 = vpop.f32.mrb[0].mxu0
        %v1193 = vadd.f32 0.0, %v1192
        %v1194 = vpop.f32.mrb[0].mxu0
        %1195 = vmatprep.mubr.f32.mxu0 0.0
        %1196 = vmatmul.mubr.f32.gmra.mrb[0].mxu0 %v1121
        %v1197 = vpop.f32.mrb[0].mxu0
        %v1198 = vadd.f32 0.0, %v1197
        %v1199 = vpop.f32.mrb[0].mxu0
        %1200 = vmatprep.mubr.f32.mxu0 0.0
        %1201 = vmatmul.mubr.f32.gmra.mrb[0].mxu0 %v1124
        %v1202 = vpop.f32.mrb[0].mxu0
        %v1203 = vadd.f32 0.0, %v1202
        %v1204 = vpop.f32.mrb[0].mxu0
        %1205 = vdwg.mxu0
        %v1206 = vadd.f32 %v1101, %v1193
        %v1207 = vadd.f32 %v1106, %v1198
        %v1208 = vadd.f32 %v1111, %v1203
        %v1209 = vld [vmem:[%s6] sm:$0x1]
        %v1211 = vlaneseq
        %v1212 = vshrl.u32 %v1211, 7
        %v1213 = vsub.s32 0, %v1212
        %v1214 = vrot.slane %v1209, %v1213
        %v1216 = vadd.f32 %v1206, %v1214
        %v1217 = vadd.f32 %v1207, %v1214
        %v1218 = vadd.f32 %v1208, %v1214
        %v1219 = vmul.f32 %v1216, %v894
        %v1220 = vmul.f32 %v1217, %v899
        %v1221 = vmul.f32 %v1218, %v904
        %v1222 = vmax.f32 %v1219, 0.0
        %v1223 = vmax.f32 %v1220, 0.0
        %v1224 = vmax.f32 %v1221, 0.0
        %v1226 = vrot.slane %v1224, 7
        %v1230 = vrot.slane %v1222, 7
        %v1231 = vrot.slane %v1223, 7
        %v1232 = vsel %vm575, %v1230, %v1231
        %v1233 = vsel %vm575, %v1231, %v1226
        %v1235 = vsel %vm575, %v1226, %v1230
        %v1236 = vrot.slane %v1222, 1
        %v1237 = vrot.slane %v1223, 1
        %v1238 = vsel %vm582, %v1236, %v1237
        %v1239 = vrot.slane %v1224, 1
        %v1240 = vsel %vm582, %v1237, %v1239
        %v1243 = vsel %vm582, %v1239, %v1236
        %v1244 = vld [vmem:[%s7] sm:$0xff]
        %v1245 = vld [vmem:[%s7 + $0x8] sm:$0xff]
        %v1246 = vld [vmem:[%s7 + $0x10] sm:$0xff]
        %v1247 = vld [vmem:[%s7 + $0x18] sm:$0xff]
        %s1248 = scalar_lea.vmem %s7, 32
        %v1249 = vld [vmem:[%s1248] sm:$0xff]
        %v1250 = vld [vmem:[%s1248 + $0x8] sm:$0xff]
        %v1251 = vld [vmem:[%s1248 + $0x10] sm:$0xff]
        %v1252 = vld [vmem:[%s1248 + $0x18] sm:$0xff]
        %v1253 = vsel %vm940, %v1222, 0
        %v1255 = vsel %vm940, %v1223, 0
        %v1257 = vsel %vm940, %v1224, 0
        %1259 = vmatprep.subr.mxu0 0.0
        %1260 = vmatpush1.msra.mxu0 %v1249
        %1261 = vmatprep.subr.mxu0 0.0
        %1262 = vmatpush1.msra.mxu0 %v1250
        %1263 = vmatprep.subr.mxu0 0.0
        %1264 = vmatpush1.msra.mxu0 %v1251
        %1265 = vmatprep.subr.mxu0 0.0
        %1266 = vmatpush1.msra.mxu0 %v1252
        %1267 = vmatprep.subr.mxu0 0.0
        %1268 = vmatpush1.msra.mxu0 0.0
        %1269 = vmatprep.subr.mxu0 0.0
        %1270 = vmatpush1.msra.mxu0 0.0
        %1271 = vmatprep.subr.mxu0 0.0
        %1272 = vmatpush1.msra.mxu0 0.0
        %1273 = vmatprep.subr.mxu0 0.0
        %1274 = vmatpush1.msra.mxu0 0.0
        %1275 = vmatprep.subr.mxu0 0.0
        %1276 = vmatpush1.msra.mxu0 0.0
        %1277 = vmatprep.subr.mxu0 0.0
        %1278 = vmatpush1.msra.mxu0 0.0
        %1279 = vmatprep.subr.mxu0 0.0
        %1280 = vmatpush1.msra.mxu0 0.0
        %1281 = vmatprep.subr.mxu0 0.0
        %1282 = vmatpush1.msra.mxu0 0.0
        %1283 = vmatprep.subr.mxu0 0.0
        %1284 = vmatpush1.msra.mxu0 0.0
        %1285 = vmatprep.subr.mxu0 0.0
        %1286 = vmatpush1.msra.mxu0 0.0
        %1287 = vmatprep.subr.mxu0 0.0
        %1288 = vmatpush1.msra.mxu0 0.0
        %1289 = vmatprep.subr.mxu0 0.0
        %1290 = vmatpush1.msra.mxu0 0.0
        %1291 = vmatprep.subr.mxu0 0.0
        %1292 = vmatpush1.msra.mxu0 0.0
        %1293 = vmatprep.subr.mxu0 0.0
        %1294 = vmatpush1.msra.mxu0 0.0
        %1295 = vmatprep.subr.mxu0 0.0
        %1296 = vmatpush1.msra.mxu0 0.0
        %1297 = vmatprep.subr.mxu0 0.0
        %1298 = vmatpush1.msra.mxu0 0.0
        %1299 = vmatprep.subr.mxu0 0.0
        %1300 = vmatpush1.msra.mxu0 0.0
        %1301 = vmatprep.subr.mxu0 0.0
        %1302 = vmatpush1.msra.mxu0 0.0
        %1303 = vmatprep.subr.mxu0 0.0
        %1304 = vmatpush1.msra.mxu0 0.0
        %1305 = vmatprep.subr.mxu0 0.0
        %1306 = vmatpush1.msra.mxu0 0.0
        %1307 = vmatprep.subr.mxu0 0.0
        %1308 = vmatpush1.msra.mxu0 0.0
        %1309 = vmatprep.subr.mxu0 0.0
        %1310 = vmatpush1.msra.mxu0 0.0
        %1311 = vmatprep.subr.mxu0 0.0
        %1312 = vmatpush1.msra.mxu0 0.0
        %1313 = vmatprep.subr.mxu0 0.0
        %1314 = vmatpush1.msra.mxu0 0.0
        %1315 = vmatprep.subr.mxu0 0.0
        %1316 = vmatpush1.msra.mxu0 0.0
        %1317 = vmatprep.subr.mxu0 0.0
        %1318 = vmatpush1.msra.mxu0 0.0
        %1319 = vmatprep.subr.mxu0 0.0
        %1320 = vmatpush1.msra.mxu0 0.0
        %1321 = vmatprep.subr.mxu0 0.0
        %1322 = vmatpush1.msra.mxu0 0.0
        %1323 = vmatprep.mubr.f32.mxu0 0.0
        %1324 = vmatmul.mubr.f32.gmra.mrb[0].mxu0 %v1253
        %v1325 = vpop.f32.mrb[0].mxu0
        %v1326 = vadd.f32 0.0, %v1325
        %v1327 = vpop.f32.mrb[0].mxu0
        %1328 = vmatprep.mubr.f32.mxu0 0.0
        %1329 = vmatmul.mubr.f32.gmra.mrb[0].mxu0 %v1255
        %v1330 = vpop.f32.mrb[0].mxu0
        %v1331 = vadd.f32 0.0, %v1330
        %v1332 = vpop.f32.mrb[0].mxu0
        %1333 = vmatprep.mubr.f32.mxu0 0.0
        %1334 = vmatmul.mubr.f32.gmra.mrb[0].mxu0 %v1257
        %v1335 = vpop.f32.mrb[0].mxu0
        %v1336 = vadd.f32 0.0, %v1335
        %v1337 = vpop.f32.mrb[0].mxu0
        %1338 = vdwg.mxu0
        %v1340 = vsel %vm940, %v1235, 0
        %v1342 = vsel %vm940, %v1232, 0
        %v1344 = vsel %vm940, %v1233, 0
        %1346 = vmatprep.subr.mxu0 0.0
        %1347 = vmatpush1.msra.mxu0 %v1244
        %1348 = vmatprep.subr.mxu0 0.0
        %1349 = vmatpush1.msra.mxu0 %v1245
        %1350 = vmatprep.subr.mxu0 0.0
        %1351 = vmatpush1.msra.mxu0 %v1246
        %1352 = vmatprep.subr.mxu0 0.0
        %1353 = vmatpush1.msra.mxu0 %v1247
        %1354 = vmatprep.subr.mxu0 0.0
        %1355 = vmatpush1.msra.mxu0 0.0
        %1356 = vmatprep.subr.mxu0 0.0
        %1357 = vmatpush1.msra.mxu0 0.0
        %1358 = vmatprep.subr.mxu0 0.0
        %1359 = vmatpush1.msra.mxu0 0.0
        %1360 = vmatprep.subr.mxu0 0.0
        %1361 = vmatpush1.msra.mxu0 0.0
        %1362 = vmatprep.subr.mxu0 0.0
        %1363 = vmatpush1.msra.mxu0 0.0
        %1364 = vmatprep.subr.mxu0 0.0
        %1365 = vmatpush1.msra.mxu0 0.0
        %1366 = vmatprep.subr.mxu0 0.0
        %1367 = vmatpush1.msra.mxu0 0.0
        %1368 = vmatprep.subr.mxu0 0.0
        %1369 = vmatpush1.msra.mxu0 0.0
        %1370 = vmatprep.subr.mxu0 0.0
        %1371 = vmatpush1.msra.mxu0 0.0
        %1372 = vmatprep.subr.mxu0 0.0
        %1373 = vmatpush1.msra.mxu0 0.0
        %1374 = vmatprep.subr.mxu0 0.0
        %1375 = vmatpush1.msra.mxu0 0.0
        %1376 = vmatprep.subr.mxu0 0.0
        %1377 = vmatpush1.msra.mxu0 0.0
        %1378 = vmatprep.subr.mxu0 0.0
        %1379 = vmatpush1.msra.mxu0 0.0
        %1380 = vmatprep.subr.mxu0 0.0
        %1381 = vmatpush1.msra.mxu0 0.0
        %1382 = vmatprep.subr.mxu0 0.0
        %1383 = vmatpush1.msra.mxu0 0.0
        %1384 = vmatprep.subr.mxu0 0.0
        %1385 = vmatpush1.msra.mxu0 0.0
        %1386 = vmatprep.subr.mxu0 0.0
        %1387 = vmatpush1.msra.mxu0 0.0
        %1388 = vmatprep.subr.mxu0 0.0
        %1389 = vmatpush1.msra.mxu0 0.0
        %1390 = vmatprep.subr.mxu0 0.0
        %1391 = vmatpush1.msra.mxu0 0.0
        %1392 = vmatprep.subr.mxu0 0.0
        %1393 = vmatpush1.msra.mxu0 0.0
        %1394 = vmatprep.subr.mxu0 0.0
        %1395 = vmatpush1.msra.mxu0 0.0
        %1396 = vmatprep.subr.mxu0 0.0
        %1397 = vmatpush1.msra.mxu0 0.0
        %1398 = vmatprep.subr.mxu0 0.0
        %1399 = vmatpush1.msra.mxu0 0.0
        %1400 = vmatprep.subr.mxu0 0.0
        %1401 = vmatpush1.msra.mxu0 0.0
        %1402 = vmatprep.subr.mxu0 0.0
        %1403 = vmatpush1.msra.mxu0 0.0
        %1404 = vmatprep.subr.mxu0 0.0
        %1405 = vmatpush1.msra.mxu0 0.0
        %1406 = vmatprep.subr.mxu0 0.0
        %1407 = vmatpush1.msra.mxu0 0.0
        %1408 = vmatprep.subr.mxu0 0.0
        %1409 = vmatpush1.msra.mxu0 0.0
        %1410 = vmatprep.mubr.f32.mxu0 0.0
        %1411 = vmatmul.mubr.f32.gmra.mrb[0].mxu0 %v1340
        %v1412 = vpop.f32.mrb[0].mxu0
        %v1413 = vadd.f32 %v1326, %v1412
        %v1414 = vpop.f32.mrb[0].mxu0
        %1415 = vmatprep.mubr.f32.mxu0 0.0
        %1416 = vmatmul.mubr.f32.gmra.mrb[0].mxu0 %v1342
        %v1417 = vpop.f32.mrb[0].mxu0
        %v1418 = vadd.f32 %v1331, %v1417
        %v1419 = vpop.f32.mrb[0].mxu0
        %1420 = vmatprep.mubr.f32.mxu0 0.0
        %1421 = vmatmul.mubr.f32.gmra.mrb[0].mxu0 %v1344
        %v1422 = vpop.f32.mrb[0].mxu0
        %v1423 = vadd.f32 %v1336, %v1422
        %v1424 = vpop.f32.mrb[0].mxu0
        %1425 = vdwg.mxu0
        %s1426 = scalar_lea.vmem %s7, 64
        %v1427 = vld [vmem:[%s1426] sm:$0xff]
        %v1428 = vld [vmem:[%s1426 + $0x8] sm:$0xff]
        %v1429 = vld [vmem:[%s1426 + $0x10] sm:$0xff]
        %v1430 = vld [vmem:[%s1426 + $0x18] sm:$0xff]
        %v1431 = vsel %vm940, %v1238, 0
        %v1433 = vsel %vm940, %v1240, 0
        %v1436 = vsel %vm940, %v1243, 0
        %1438 = vmatprep.subr.mxu0 0.0
        %1439 = vmatpush1.msra.mxu0 %v1427
        %1440 = vmatprep.subr.mxu0 0.0
        %1441 = vmatpush1.msra.mxu0 %v1428
        %1442 = vmatprep.subr.mxu0 0.0
        %1443 = vmatpush1.msra.mxu0 %v1429
        %1444 = vmatprep.subr.mxu0 0.0
        %1445 = vmatpush1.msra.mxu0 %v1430
        %1446 = vmatprep.subr.mxu0 0.0
        %1447 = vmatpush1.msra.mxu0 0.0
        %1448 = vmatprep.subr.mxu0 0.0
        %1449 = vmatpush1.msra.mxu0 0.0
        %1450 = vmatprep.subr.mxu0 0.0
        %1451 = vmatpush1.msra.mxu0 0.0
        %1452 = vmatprep.subr.mxu0 0.0
        %1453 = vmatpush1.msra.mxu0 0.0
        %1454 = vmatprep.subr.mxu0 0.0
        %1455 = vmatpush1.msra.mxu0 0.0
        %1456 = vmatprep.subr.mxu0 0.0
        %1457 = vmatpush1.msra.mxu0 0.0
        %1458 = vmatprep.subr.mxu0 0.0
        %1459 = vmatpush1.msra.mxu0 0.0
        %1460 = vmatprep.subr.mxu0 0.0
        %1461 = vmatpush1.msra.mxu0 0.0
        %1462 = vmatprep.subr.mxu0 0.0
        %1463 = vmatpush1.msra.mxu0 0.0
        %1464 = vmatprep.subr.mxu0 0.0
        %1465 = vmatpush1.msra.mxu0 0.0
        %1466 = vmatprep.subr.mxu0 0.0
        %1467 = vmatpush1.msra.mxu0 0.0
        %1468 = vmatprep.subr.mxu0 0.0
        %1469 = vmatpush1.msra.mxu0 0.0
        %1470 = vmatprep.subr.mxu0 0.0
        %1471 = vmatpush1.msra.mxu0 0.0
        %1472 = vmatprep.subr.mxu0 0.0
        %1473 = vmatpush1.msra.mxu0 0.0
        %1474 = vmatprep.subr.mxu0 0.0
        %1475 = vmatpush1.msra.mxu0 0.0
        %1476 = vmatprep.subr.mxu0 0.0
        %1477 = vmatpush1.msra.mxu0 0.0
        %1478 = vmatprep.subr.mxu0 0.0
        %1479 = vmatpush1.msra.mxu0 0.0
        %1480 = vmatprep.subr.mxu0 0.0
        %1481 = vmatpush1.msra.mxu0 0.0
        %1482 = vmatprep.subr.mxu0 0.0
        %1483 = vmatpush1.msra.mxu0 0.0
        %1484 = vmatprep.subr.mxu0 0.0
        %1485 = vmatpush1.msra.mxu0 0.0
        %1486 = vmatprep.subr.mxu0 0.0
        %1487 = vmatpush1.msra.mxu0 0.0
        %1488 = vmatprep.subr.mxu0 0.0
        %1489 = vmatpush1.msra.mxu0 0.0
        %1490 = vmatprep.subr.mxu0 0.0
        %1491 = vmatpush1.msra.mxu0 0.0
        %1492 = vmatprep.subr.mxu0 0.0
        %1493 = vmatpush1.msra.mxu0 0.0
        %1494 = vmatprep.subr.mxu0 0.0
        %1495 = vmatpush1.msra.mxu0 0.0
        %1496 = vmatprep.subr.mxu0 0.0
        %1497 = vmatpush1.msra.mxu0 0.0
        %1498 = vmatprep.subr.mxu0 0.0
        %1499 = vmatpush1.msra.mxu0 0.0
        %1500 = vmatprep.subr.mxu0 0.0
        %1501 = vmatpush1.msra.mxu0 0.0
        %1502 = vmatprep.mubr.f32.mxu0 0.0
        %1503 = vmatmul.mubr.f32.gmra.mrb[0].mxu0 %v1431
        %v1504 = vpop.f32.mrb[0].mxu0
        %v1505 = vadd.f32 0.0, %v1504
        %v1506 = vpop.f32.mrb[0].mxu0
        %1507 = vmatprep.mubr.f32.mxu0 0.0
        %1508 = vmatmul.mubr.f32.gmra.mrb[0].mxu0 %v1433
        %v1509 = vpop.f32.mrb[0].mxu0
        %v1510 = vadd.f32 0.0, %v1509
        %v1511 = vpop.f32.mrb[0].mxu0
        %1512 = vmatprep.mubr.f32.mxu0 0.0
        %1513 = vmatmul.mubr.f32.gmra.mrb[0].mxu0 %v1436
        %v1514 = vpop.f32.mrb[0].mxu0
        %v1515 = vadd.f32 0.0, %v1514
        %v1516 = vpop.f32.mrb[0].mxu0
        %1517 = vdwg.mxu0
        %v1518 = vadd.f32 %v1413, %v1505
        %v1519 = vadd.f32 %v1418, %v1510
        %v1520 = vadd.f32 %v1423, %v1515
        %v1521 = vld [vmem:[%s8] sm:$0x1]
        %v1523 = vlaneseq
        %v1524 = vshrl.u32 %v1523, 7
        %v1525 = vsub.s32 0, %v1524
        %v1526 = vrot.slane %v1521, %v1525
        %v1528 = vadd.f32 %v1518, %v1526
        %v1529 = vadd.f32 %v1519, %v1526
        %v1530 = vadd.f32 %v1520, %v1526
        %v1531 = vmul.f32 %v1528, %v894
        %v1532 = vmul.f32 %v1529, %v899
        %v1533 = vmul.f32 %v1530, %v904
        %v1534 = vmul.f32 %v1531, %v1531
        %v1535 = vmul.f32 %v1532, %v1532
        %v1536 = vmul.f32 %v1533, %v1533
        %v1537 = vsel %vm940, %v1534, 0.0
        %1538 = vadd.xlane.f32.xlu0 %v1537
        %v1539 = vpop.xlane.xlu0 %1538
        %v1540 = vsel %vm940, %v1535, 0.0
        %1541 = vadd.xlane.f32.xlu0 %v1540
        %v1542 = vpop.xlane.xlu0 %1541
        %v1543 = vsel %vm940, %v1536, 0.0
        %1544 = vadd.xlane.f32.xlu0 %v1543
        %v1545 = vpop.xlane.xlu0 %1544
        %v1546 = vmax.f32 %v1539, 1e-24
        %v1547 = vmax.f32 %v1542, 1e-24
        %v1548 = vmax.f32 %v1545, 1e-24
        %v1549 = vrsqrt.pop %v1546
        %v1550 = vrsqrt.pop %v1547
        %v1551 = vrsqrt.pop %v1548
        %v1552 = vmul.f32 %v1531, %v1549
        %v1553 = vmul.f32 %v1532, %v1550
        %v1554 = vmul.f32 %v1533, %v1551
        %v1555 = vld [vmem:[%s9] sm:$0xff]
        %v1556 = vld [vmem:[%s9 + $0x8] sm:$0xff]
        %v1557 = vld [vmem:[%s9 + $0x10] sm:$0xff]
        %v1558 = vld [vmem:[%s9 + $0x18] sm:$0xff]
        %v1560 = vsel %vm940, %v1552, 0
        %v1563 = vsel %vm940, %v1553, 0
        %v1566 = vsel %vm940, %v1554, 0
        %1568 = vmatprep.subr.mxu0 0.0
        %1569 = vmatpush1.msra.mxu0 %v1555
        %1570 = vmatprep.subr.mxu0 0.0
        %1571 = vmatpush1.msra.mxu0 %v1556
        %1572 = vmatprep.subr.mxu0 0.0
        %1573 = vmatpush1.msra.mxu0 %v1557
        %1574 = vmatprep.subr.mxu0 0.0
        %1575 = vmatpush1.msra.mxu0 %v1558
        %1576 = vmatprep.subr.mxu0 0.0
        %1577 = vmatpush1.msra.mxu0 0.0
        %1578 = vmatprep.subr.mxu0 0.0
        %1579 = vmatpush1.msra.mxu0 0.0
        %1580 = vmatprep.subr.mxu0 0.0
        %1581 = vmatpush1.msra.mxu0 0.0
        %1582 = vmatprep.subr.mxu0 0.0
        %1583 = vmatpush1.msra.mxu0 0.0
        %1584 = vmatprep.subr.mxu0 0.0
        %1585 = vmatpush1.msra.mxu0 0.0
        %1586 = vmatprep.subr.mxu0 0.0
        %1587 = vmatpush1.msra.mxu0 0.0
        %1588 = vmatprep.subr.mxu0 0.0
        %1589 = vmatpush1.msra.mxu0 0.0
        %1590 = vmatprep.subr.mxu0 0.0
        %1591 = vmatpush1.msra.mxu0 0.0
        %1592 = vmatprep.subr.mxu0 0.0
        %1593 = vmatpush1.msra.mxu0 0.0
        %1594 = vmatprep.subr.mxu0 0.0
        %1595 = vmatpush1.msra.mxu0 0.0
        %1596 = vmatprep.subr.mxu0 0.0
        %1597 = vmatpush1.msra.mxu0 0.0
        %1598 = vmatprep.subr.mxu0 0.0
        %1599 = vmatpush1.msra.mxu0 0.0
        %1600 = vmatprep.subr.mxu0 0.0
        %1601 = vmatpush1.msra.mxu0 0.0
        %1602 = vmatprep.subr.mxu0 0.0
        %1603 = vmatpush1.msra.mxu0 0.0
        %1604 = vmatprep.subr.mxu0 0.0
        %1605 = vmatpush1.msra.mxu0 0.0
        %1606 = vmatprep.subr.mxu0 0.0
        %1607 = vmatpush1.msra.mxu0 0.0
        %1608 = vmatprep.subr.mxu0 0.0
        %1609 = vmatpush1.msra.mxu0 0.0
        %1610 = vmatprep.subr.mxu0 0.0
        %1611 = vmatpush1.msra.mxu0 0.0
        %1612 = vmatprep.subr.mxu0 0.0
        %1613 = vmatpush1.msra.mxu0 0.0
        %1614 = vmatprep.subr.mxu0 0.0
        %1615 = vmatpush1.msra.mxu0 0.0
        %1616 = vmatprep.subr.mxu0 0.0
        %1617 = vmatpush1.msra.mxu0 0.0
        %1618 = vmatprep.subr.mxu0 0.0
        %1619 = vmatpush1.msra.mxu0 0.0
        %1620 = vmatprep.subr.mxu0 0.0
        %1621 = vmatpush1.msra.mxu0 0.0
        %1622 = vmatprep.subr.mxu0 0.0
        %1623 = vmatpush1.msra.mxu0 0.0
        %1624 = vmatprep.subr.mxu0 0.0
        %1625 = vmatpush1.msra.mxu0 0.0
        %1626 = vmatprep.subr.mxu0 0.0
        %1627 = vmatpush1.msra.mxu0 0.0
        %1628 = vmatprep.subr.mxu0 0.0
        %1629 = vmatpush1.msra.mxu0 0.0
        %1630 = vmatprep.subr.mxu0 0.0
        %1631 = vmatpush1.msra.mxu0 0.0
        %1632 = vmatprep.mubr.f32.mxu0 0.0
        %1633 = vmatmul.mubr.f32.gmra.mrb[0].mxu0 %v1560
        %v1634 = vpop.f32.mrb[0].mxu0
        %v1635 = vadd.f32 0.0, %v1634
        %v1636 = vpop.f32.mrb[0].mxu0
        %1637 = vmatprep.mubr.f32.mxu0 0.0
        %1638 = vmatmul.mubr.f32.gmra.mrb[0].mxu0 %v1563
        %v1639 = vpop.f32.mrb[0].mxu0
        %v1640 = vadd.f32 0.0, %v1639
        %v1641 = vpop.f32.mrb[0].mxu0
        %1642 = vmatprep.mubr.f32.mxu0 0.0
        %1643 = vmatmul.mubr.f32.gmra.mrb[0].mxu0 %v1566
        %v1644 = vpop.f32.mrb[0].mxu0
        %v1645 = vadd.f32 0.0, %v1644
        %v1646 = vpop.f32.mrb[0].mxu0
        %1647 = vdwg.mxu0
        %v1648 = vmul.f32 %v1635, %v894
        %v1649 = vmul.f32 %v1640, %v899
        %v1650 = vmul.f32 %v1645, %v904
        %1651 = vst [vmem:[%s542] sm:$0xff] %v1648
        %1652 = vst [vmem:[%s542 + $0x8] sm:$0xff] %v1649
        %1653 = vst [vmem:[%s542 + $0x10] sm:$0xff] %v1650
        %v1654 = vld [vmem:[%s10] sm:$0xff]
        %v1655 = vld [vmem:[%s10 + $0x8] sm:$0xff]
        %v1656 = vld [vmem:[%s10 + $0x10] sm:$0xff]
        %v1657 = vld [vmem:[%s10 + $0x18] sm:$0xff]
        %v1658 = vld [vmem:[%s10 + $0x20] sm:$0xff]
        %v1659 = vld [vmem:[%s10 + $0x28] sm:$0xff]
        %v1660 = vld [vmem:[%s10 + $0x30] sm:$0xff]
        %v1661 = vld [vmem:[%s10 + $0x38] sm:$0xff]
        %s1662 = scalar_lea.vmem %s10, 64
        %v1663 = vld [vmem:[%s1662] sm:$0xff]
        %v1664 = vld [vmem:[%s1662 + $0x8] sm:$0xff]
        %v1665 = vld [vmem:[%s1662 + $0x10] sm:$0xff]
        %v1666 = vld [vmem:[%s1662 + $0x18] sm:$0xff]
        %v1667 = vld [vmem:[%s1662 + $0x20] sm:$0xff]
        %v1668 = vld [vmem:[%s1662 + $0x28] sm:$0xff]
        %v1669 = vld [vmem:[%s1662 + $0x30] sm:$0xff]
        %v1670 = vld [vmem:[%s1662 + $0x38] sm:$0xff]
        %1671 = vmatprep.subr.mxu0 0.0
        %1672 = vmatpush1.msra.mxu0 %v1663
        %1673 = vmatprep.subr.mxu0 0.0
        %1674 = vmatpush1.msra.mxu0 %v1664
        %1675 = vmatprep.subr.mxu0 0.0
        %1676 = vmatpush1.msra.mxu0 %v1665
        %1677 = vmatprep.subr.mxu0 0.0
        %1678 = vmatpush1.msra.mxu0 %v1666
        %1679 = vmatprep.subr.mxu0 0.0
        %1680 = vmatpush1.msra.mxu0 %v1667
        %1681 = vmatprep.subr.mxu0 0.0
        %1682 = vmatpush1.msra.mxu0 %v1668
        %1683 = vmatprep.subr.mxu0 0.0
        %1684 = vmatpush1.msra.mxu0 %v1669
        %1685 = vmatprep.subr.mxu0 0.0
        %1686 = vmatpush1.msra.mxu0 %v1670
        %1687 = vmatprep.subr.mxu0 0.0
        %1688 = vmatpush1.msra.mxu0 0.0
        %1689 = vmatprep.subr.mxu0 0.0
        %1690 = vmatpush1.msra.mxu0 0.0
        %1691 = vmatprep.subr.mxu0 0.0
        %1692 = vmatpush1.msra.mxu0 0.0
        %1693 = vmatprep.subr.mxu0 0.0
        %1694 = vmatpush1.msra.mxu0 0.0
        %1695 = vmatprep.subr.mxu0 0.0
        %1696 = vmatpush1.msra.mxu0 0.0
        %1697 = vmatprep.subr.mxu0 0.0
        %1698 = vmatpush1.msra.mxu0 0.0
        %1699 = vmatprep.subr.mxu0 0.0
        %1700 = vmatpush1.msra.mxu0 0.0
        %1701 = vmatprep.subr.mxu0 0.0
        %1702 = vmatpush1.msra.mxu0 0.0
        %1703 = vmatprep.subr.mxu0 0.0
        %1704 = vmatpush1.msra.mxu0 0.0
        %1705 = vmatprep.subr.mxu0 0.0
        %1706 = vmatpush1.msra.mxu0 0.0
        %1707 = vmatprep.subr.mxu0 0.0
        %1708 = vmatpush1.msra.mxu0 0.0
        %1709 = vmatprep.subr.mxu0 0.0
        %1710 = vmatpush1.msra.mxu0 0.0
        %1711 = vmatprep.subr.mxu0 0.0
        %1712 = vmatpush1.msra.mxu0 0.0
        %1713 = vmatprep.subr.mxu0 0.0
        %1714 = vmatpush1.msra.mxu0 0.0
        %1715 = vmatprep.subr.mxu0 0.0
        %1716 = vmatpush1.msra.mxu0 0.0
        %1717 = vmatprep.subr.mxu0 0.0
        %1718 = vmatpush1.msra.mxu0 0.0
        %1719 = vmatprep.subr.mxu0 0.0
        %1720 = vmatpush1.msra.mxu0 0.0
        %1721 = vmatprep.subr.mxu0 0.0
        %1722 = vmatpush1.msra.mxu0 0.0
        %1723 = vmatprep.subr.mxu0 0.0
        %1724 = vmatpush1.msra.mxu0 0.0
        %1725 = vmatprep.subr.mxu0 0.0
        %1726 = vmatpush1.msra.mxu0 0.0
        %1727 = vmatprep.subr.mxu0 0.0
        %1728 = vmatpush1.msra.mxu0 0.0
        %1729 = vmatprep.subr.mxu0 0.0
        %1730 = vmatpush1.msra.mxu0 0.0
        %1731 = vmatprep.subr.mxu0 0.0
        %1732 = vmatpush1.msra.mxu0 0.0
        %1733 = vmatprep.subr.mxu0 0.0
        %1734 = vmatpush1.msra.mxu0 0.0
        %1735 = vmatprep.mubr.f32.mxu0 0.0
        %1736 = vmatmul.mubr.f32.gmra.mrb[0].mxu0 %v609
        %v1737 = vpop.f32.mrb[0].mxu0
        %v1738 = vadd.f32 0.0, %v1737
        %v1739 = vpop.f32.mrb[0].mxu0
        %1740 = vmatprep.mubr.f32.mxu0 0.0
        %1741 = vmatmul.mubr.f32.gmra.mrb[0].mxu0 %v611
        %v1742 = vpop.f32.mrb[0].mxu0
        %v1743 = vadd.f32 0.0, %v1742
        %v1744 = vpop.f32.mrb[0].mxu0
        %1745 = vmatprep.mubr.f32.mxu0 0.0
        %1746 = vmatmul.mubr.f32.gmra.mrb[0].mxu0 %v613
        %v1747 = vpop.f32.mrb[0].mxu0
        %v1748 = vadd.f32 0.0, %v1747
        %v1749 = vpop.f32.mrb[0].mxu0
        %1750 = vdwg.mxu0
        %1751 = vmatprep.subr.mxu0 0.0
        %1752 = vmatpush1.msra.mxu0 %v1654
        %1753 = vmatprep.subr.mxu0 0.0
        %1754 = vmatpush1.msra.mxu0 %v1655
        %1755 = vmatprep.subr.mxu0 0.0
        %1756 = vmatpush1.msra.mxu0 %v1656
        %1757 = vmatprep.subr.mxu0 0.0
        %1758 = vmatpush1.msra.mxu0 %v1657
        %1759 = vmatprep.subr.mxu0 0.0
        %1760 = vmatpush1.msra.mxu0 %v1658
        %1761 = vmatprep.subr.mxu0 0.0
        %1762 = vmatpush1.msra.mxu0 %v1659
        %1763 = vmatprep.subr.mxu0 0.0
        %1764 = vmatpush1.msra.mxu0 %v1660
        %1765 = vmatprep.subr.mxu0 0.0
        %1766 = vmatpush1.msra.mxu0 %v1661
        %1767 = vmatprep.subr.mxu0 0.0
        %1768 = vmatpush1.msra.mxu0 0.0
        %1769 = vmatprep.subr.mxu0 0.0
        %1770 = vmatpush1.msra.mxu0 0.0
        %1771 = vmatprep.subr.mxu0 0.0
        %1772 = vmatpush1.msra.mxu0 0.0
        %1773 = vmatprep.subr.mxu0 0.0
        %1774 = vmatpush1.msra.mxu0 0.0
        %1775 = vmatprep.subr.mxu0 0.0
        %1776 = vmatpush1.msra.mxu0 0.0
        %1777 = vmatprep.subr.mxu0 0.0
        %1778 = vmatpush1.msra.mxu0 0.0
        %1779 = vmatprep.subr.mxu0 0.0
        %1780 = vmatpush1.msra.mxu0 0.0
        %1781 = vmatprep.subr.mxu0 0.0
        %1782 = vmatpush1.msra.mxu0 0.0
        %1783 = vmatprep.subr.mxu0 0.0
        %1784 = vmatpush1.msra.mxu0 0.0
        %1785 = vmatprep.subr.mxu0 0.0
        %1786 = vmatpush1.msra.mxu0 0.0
        %1787 = vmatprep.subr.mxu0 0.0
        %1788 = vmatpush1.msra.mxu0 0.0
        %1789 = vmatprep.subr.mxu0 0.0
        %1790 = vmatpush1.msra.mxu0 0.0
        %1791 = vmatprep.subr.mxu0 0.0
        %1792 = vmatpush1.msra.mxu0 0.0
        %1793 = vmatprep.subr.mxu0 0.0
        %1794 = vmatpush1.msra.mxu0 0.0
        %1795 = vmatprep.subr.mxu0 0.0
        %1796 = vmatpush1.msra.mxu0 0.0
        %1797 = vmatprep.subr.mxu0 0.0
        %1798 = vmatpush1.msra.mxu0 0.0
        %1799 = vmatprep.subr.mxu0 0.0
        %1800 = vmatpush1.msra.mxu0 0.0
        %1801 = vmatprep.subr.mxu0 0.0
        %1802 = vmatpush1.msra.mxu0 0.0
        %1803 = vmatprep.subr.mxu0 0.0
        %1804 = vmatpush1.msra.mxu0 0.0
        %1805 = vmatprep.subr.mxu0 0.0
        %1806 = vmatpush1.msra.mxu0 0.0
        %1807 = vmatprep.subr.mxu0 0.0
        %1808 = vmatpush1.msra.mxu0 0.0
        %1809 = vmatprep.subr.mxu0 0.0
        %1810 = vmatpush1.msra.mxu0 0.0
        %1811 = vmatprep.subr.mxu0 0.0
        %1812 = vmatpush1.msra.mxu0 0.0
        %1813 = vmatprep.subr.mxu0 0.0
        %1814 = vmatpush1.msra.mxu0 0.0
        %1815 = vmatprep.mubr.f32.mxu0 0.0
        %1816 = vmatmul.mubr.f32.gmra.mrb[0].mxu0 %v696
        %v1817 = vpop.f32.mrb[0].mxu0
        %v1818 = vadd.f32 %v1738, %v1817
        %v1819 = vpop.f32.mrb[0].mxu0
        %1820 = vmatprep.mubr.f32.mxu0 0.0
        %1821 = vmatmul.mubr.f32.gmra.mrb[0].mxu0 %v698
        %v1822 = vpop.f32.mrb[0].mxu0
        %v1823 = vadd.f32 %v1743, %v1822
        %v1824 = vpop.f32.mrb[0].mxu0
        %1825 = vmatprep.mubr.f32.mxu0 0.0
        %1826 = vmatmul.mubr.f32.gmra.mrb[0].mxu0 %v700
        %v1827 = vpop.f32.mrb[0].mxu0
        %v1828 = vadd.f32 %v1748, %v1827
        %v1829 = vpop.f32.mrb[0].mxu0
        %1830 = vdwg.mxu0
        %s1831 = scalar_lea.vmem %s10, 128
        %v1832 = vld [vmem:[%s1831] sm:$0xff]
        %v1833 = vld [vmem:[%s1831 + $0x8] sm:$0xff]
        %v1834 = vld [vmem:[%s1831 + $0x10] sm:$0xff]
        %v1835 = vld [vmem:[%s1831 + $0x18] sm:$0xff]
        %v1836 = vld [vmem:[%s1831 + $0x20] sm:$0xff]
        %v1837 = vld [vmem:[%s1831 + $0x28] sm:$0xff]
        %v1838 = vld [vmem:[%s1831 + $0x30] sm:$0xff]
        %v1839 = vld [vmem:[%s1831 + $0x38] sm:$0xff]
        %1840 = vmatprep.subr.mxu0 0.0
        %1841 = vmatpush1.msra.mxu0 %v1832
        %1842 = vmatprep.subr.mxu0 0.0
        %1843 = vmatpush1.msra.mxu0 %v1833
        %1844 = vmatprep.subr.mxu0 0.0
        %1845 = vmatpush1.msra.mxu0 %v1834
        %1846 = vmatprep.subr.mxu0 0.0
        %1847 = vmatpush1.msra.mxu0 %v1835
        %1848 = vmatprep.subr.mxu0 0.0
        %1849 = vmatpush1.msra.mxu0 %v1836
        %1850 = vmatprep.subr.mxu0 0.0
        %1851 = vmatpush1.msra.mxu0 %v1837
        %1852 = vmatprep.subr.mxu0 0.0
        %1853 = vmatpush1.msra.mxu0 %v1838
        %1854 = vmatprep.subr.mxu0 0.0
        %1855 = vmatpush1.msra.mxu0 %v1839
        %1856 = vmatprep.subr.mxu0 0.0
        %1857 = vmatpush1.msra.mxu0 0.0
        %1858 = vmatprep.subr.mxu0 0.0
        %1859 = vmatpush1.msra.mxu0 0.0
        %1860 = vmatprep.subr.mxu0 0.0
        %1861 = vmatpush1.msra.mxu0 0.0
        %1862 = vmatprep.subr.mxu0 0.0
        %1863 = vmatpush1.msra.mxu0 0.0
        %1864 = vmatprep.subr.mxu0 0.0
        %1865 = vmatpush1.msra.mxu0 0.0
        %1866 = vmatprep.subr.mxu0 0.0
        %1867 = vmatpush1.msra.mxu0 0.0
        %1868 = vmatprep.subr.mxu0 0.0
        %1869 = vmatpush1.msra.mxu0 0.0
        %1870 = vmatprep.subr.mxu0 0.0
        %1871 = vmatpush1.msra.mxu0 0.0
        %1872 = vmatprep.subr.mxu0 0.0
        %1873 = vmatpush1.msra.mxu0 0.0
        %1874 = vmatprep.subr.mxu0 0.0
        %1875 = vmatpush1.msra.mxu0 0.0
        %1876 = vmatprep.subr.mxu0 0.0
        %1877 = vmatpush1.msra.mxu0 0.0
        %1878 = vmatprep.subr.mxu0 0.0
        %1879 = vmatpush1.msra.mxu0 0.0
        %1880 = vmatprep.subr.mxu0 0.0
        %1881 = vmatpush1.msra.mxu0 0.0
        %1882 = vmatprep.subr.mxu0 0.0
        %1883 = vmatpush1.msra.mxu0 0.0
        %1884 = vmatprep.subr.mxu0 0.0
        %1885 = vmatpush1.msra.mxu0 0.0
        %1886 = vmatprep.subr.mxu0 0.0
        %1887 = vmatpush1.msra.mxu0 0.0
        %1888 = vmatprep.subr.mxu0 0.0
        %1889 = vmatpush1.msra.mxu0 0.0
        %1890 = vmatprep.subr.mxu0 0.0
        %1891 = vmatpush1.msra.mxu0 0.0
        %1892 = vmatprep.subr.mxu0 0.0
        %1893 = vmatpush1.msra.mxu0 0.0
        %1894 = vmatprep.subr.mxu0 0.0
        %1895 = vmatpush1.msra.mxu0 0.0
        %1896 = vmatprep.subr.mxu0 0.0
        %1897 = vmatpush1.msra.mxu0 0.0
        %1898 = vmatprep.subr.mxu0 0.0
        %1899 = vmatpush1.msra.mxu0 0.0
        %1900 = vmatprep.subr.mxu0 0.0
        %1901 = vmatpush1.msra.mxu0 0.0
        %1902 = vmatprep.subr.mxu0 0.0
        %1903 = vmatpush1.msra.mxu0 0.0
        %1904 = vmatprep.mubr.f32.mxu0 0.0
        %1905 = vmatmul.mubr.f32.gmra.mrb[0].mxu0 %v791
        %v1906 = vpop.f32.mrb[0].mxu0
        %v1907 = vadd.f32 0.0, %v1906
        %v1908 = vpop.f32.mrb[0].mxu0
        %1909 = vmatprep.mubr.f32.mxu0 0.0
        %1910 = vmatmul.mubr.f32.gmra.mrb[0].mxu0 %v793
        %v1911 = vpop.f32.mrb[0].mxu0
        %v1912 = vadd.f32 0.0, %v1911
        %v1913 = vpop.f32.mrb[0].mxu0
        %1914 = vmatprep.mubr.f32.mxu0 0.0
        %1915 = vmatmul.mubr.f32.gmra.mrb[0].mxu0 %v796
        %v1916 = vpop.f32.mrb[0].mxu0
        %v1917 = vadd.f32 0.0, %v1916
        %v1918 = vpop.f32.mrb[0].mxu0
        %1919 = vdwg.mxu0
        %v1920 = vadd.f32 %v1818, %v1907
        %v1921 = vadd.f32 %v1823, %v1912
        %v1922 = vadd.f32 %v1828, %v1917
        %v1923 = vld [vmem:[%s11] sm:$0x1]
        %v1925 = vlaneseq
        %v1926 = vshrl.u32 %v1925, 7
        %v1927 = vsub.s32 0, %v1926
        %v1928 = vrot.slane %v1923, %v1927
        %v1930 = vadd.f32 %v1920, %v1928
        %v1931 = vadd.f32 %v1921, %v1928
        %v1932 = vadd.f32 %v1922, %v1928
        %v1933 = vmul.f32 %v1930, %v894
        %v1934 = vmul.f32 %v1931, %v899
        %v1935 = vmul.f32 %v1932, %v904
        %v1936 = vmax.f32 %v1933, 0.0
        %v1937 = vmax.f32 %v1934, 0.0
        %v1938 = vmax.f32 %v1935, 0.0
        %v1940 = vrot.slane %v1938, 7
        %v1944 = vrot.slane %v1936, 7
        %v1945 = vrot.slane %v1937, 7
        %v1946 = vsel %vm575, %v1944, %v1945
        %v1947 = vsel %vm575, %v1945, %v1940
        %v1949 = vsel %vm575, %v1940, %v1944
        %v1950 = vrot.slane %v1936, 1
        %v1951 = vrot.slane %v1937, 1
        %v1952 = vsel %vm582, %v1950, %v1951
        %v1953 = vrot.slane %v1938, 1
        %v1954 = vsel %vm582, %v1951, %v1953
        %v1957 = vsel %vm582, %v1953, %v1950
        %v1958 = vld [vmem:[%s12] sm:$0xff]
        %v1959 = vld [vmem:[%s12 + $0x8] sm:$0xff]
        %v1960 = vld [vmem:[%s12 + $0x10] sm:$0xff]
        %v1961 = vld [vmem:[%s12 + $0x18] sm:$0xff]
        %s1962 = scalar_lea.vmem %s12, 32
        %v1963 = vld [vmem:[%s1962] sm:$0xff]
        %v1964 = vld [vmem:[%s1962 + $0x8] sm:$0xff]
        %v1965 = vld [vmem:[%s1962 + $0x10] sm:$0xff]
        %v1966 = vld [vmem:[%s1962 + $0x18] sm:$0xff]
        %v1967 = vsel %vm940, %v1936, 0
        %v1969 = vsel %vm940, %v1937, 0
        %v1971 = vsel %vm940, %v1938, 0
        %1973 = vmatprep.subr.mxu0 0.0
        %1974 = vmatpush1.msra.mxu0 %v1963
        %1975 = vmatprep.subr.mxu0 0.0
        %1976 = vmatpush1.msra.mxu0 %v1964
        %1977 = vmatprep.subr.mxu0 0.0
        %1978 = vmatpush1.msra.mxu0 %v1965
        %1979 = vmatprep.subr.mxu0 0.0
        %1980 = vmatpush1.msra.mxu0 %v1966
        %1981 = vmatprep.subr.mxu0 0.0
        %1982 = vmatpush1.msra.mxu0 0.0
        %1983 = vmatprep.subr.mxu0 0.0
        %1984 = vmatpush1.msra.mxu0 0.0
        %1985 = vmatprep.subr.mxu0 0.0
        %1986 = vmatpush1.msra.mxu0 0.0
        %1987 = vmatprep.subr.mxu0 0.0
        %1988 = vmatpush1.msra.mxu0 0.0
        %1989 = vmatprep.subr.mxu0 0.0
        %1990 = vmatpush1.msra.mxu0 0.0
        %1991 = vmatprep.subr.mxu0 0.0
        %1992 = vmatpush1.msra.mxu0 0.0
        %1993 = vmatprep.subr.mxu0 0.0
        %1994 = vmatpush1.msra.mxu0 0.0
        %1995 = vmatprep.subr.mxu0 0.0
        %1996 = vmatpush1.msra.mxu0 0.0
        %1997 = vmatprep.subr.mxu0 0.0
        %1998 = vmatpush1.msra.mxu0 0.0
        %1999 = vmatprep.subr.mxu0 0.0
        %2000 = vmatpush1.msra.mxu0 0.0
        %2001 = vmatprep.subr.mxu0 0.0
        %2002 = vmatpush1.msra.mxu0 0.0
        %2003 = vmatprep.subr.mxu0 0.0
        %2004 = vmatpush1.msra.mxu0 0.0
        %2005 = vmatprep.subr.mxu0 0.0
        %2006 = vmatpush1.msra.mxu0 0.0
        %2007 = vmatprep.subr.mxu0 0.0
        %2008 = vmatpush1.msra.mxu0 0.0
        %2009 = vmatprep.subr.mxu0 0.0
        %2010 = vmatpush1.msra.mxu0 0.0
        %2011 = vmatprep.subr.mxu0 0.0
        %2012 = vmatpush1.msra.mxu0 0.0
        %2013 = vmatprep.subr.mxu0 0.0
        %2014 = vmatpush1.msra.mxu0 0.0
        %2015 = vmatprep.subr.mxu0 0.0
        %2016 = vmatpush1.msra.mxu0 0.0
        %2017 = vmatprep.subr.mxu0 0.0
        %2018 = vmatpush1.msra.mxu0 0.0
        %2019 = vmatprep.subr.mxu0 0.0
        %2020 = vmatpush1.msra.mxu0 0.0
        %2021 = vmatprep.subr.mxu0 0.0
        %2022 = vmatpush1.msra.mxu0 0.0
        %2023 = vmatprep.subr.mxu0 0.0
        %2024 = vmatpush1.msra.mxu0 0.0
        %2025 = vmatprep.subr.mxu0 0.0
        %2026 = vmatpush1.msra.mxu0 0.0
        %2027 = vmatprep.subr.mxu0 0.0
        %2028 = vmatpush1.msra.mxu0 0.0
        %2029 = vmatprep.subr.mxu0 0.0
        %2030 = vmatpush1.msra.mxu0 0.0
        %2031 = vmatprep.subr.mxu0 0.0
        %2032 = vmatpush1.msra.mxu0 0.0
        %2033 = vmatprep.subr.mxu0 0.0
        %2034 = vmatpush1.msra.mxu0 0.0
        %2035 = vmatprep.subr.mxu0 0.0
        %2036 = vmatpush1.msra.mxu0 0.0
        %2037 = vmatprep.mubr.f32.mxu0 0.0
        %2038 = vmatmul.mubr.f32.gmra.mrb[0].mxu0 %v1967
        %v2039 = vpop.f32.mrb[0].mxu0
        %v2040 = vadd.f32 0.0, %v2039
        %v2041 = vpop.f32.mrb[0].mxu0
        %2042 = vmatprep.mubr.f32.mxu0 0.0
        %2043 = vmatmul.mubr.f32.gmra.mrb[0].mxu0 %v1969
        %v2044 = vpop.f32.mrb[0].mxu0
        %v2045 = vadd.f32 0.0, %v2044
        %v2046 = vpop.f32.mrb[0].mxu0
        %2047 = vmatprep.mubr.f32.mxu0 0.0
        %2048 = vmatmul.mubr.f32.gmra.mrb[0].mxu0 %v1971
        %v2049 = vpop.f32.mrb[0].mxu0
        %v2050 = vadd.f32 0.0, %v2049
        %v2051 = vpop.f32.mrb[0].mxu0
        %2052 = vdwg.mxu0
        %v2054 = vsel %vm940, %v1949, 0
        %v2056 = vsel %vm940, %v1946, 0
        %v2058 = vsel %vm940, %v1947, 0
        %2060 = vmatprep.subr.mxu0 0.0
        %2061 = vmatpush1.msra.mxu0 %v1958
        %2062 = vmatprep.subr.mxu0 0.0
        %2063 = vmatpush1.msra.mxu0 %v1959
        %2064 = vmatprep.subr.mxu0 0.0
        %2065 = vmatpush1.msra.mxu0 %v1960
        %2066 = vmatprep.subr.mxu0 0.0
        %2067 = vmatpush1.msra.mxu0 %v1961
        %2068 = vmatprep.subr.mxu0 0.0
        %2069 = vmatpush1.msra.mxu0 0.0
        %2070 = vmatprep.subr.mxu0 0.0
        %2071 = vmatpush1.msra.mxu0 0.0
        %2072 = vmatprep.subr.mxu0 0.0
        %2073 = vmatpush1.msra.mxu0 0.0
        %2074 = vmatprep.subr.mxu0 0.0
        %2075 = vmatpush1.msra.mxu0 0.0
        %2076 = vmatprep.subr.mxu0 0.0
        %2077 = vmatpush1.msra.mxu0 0.0
        %2078 = vmatprep.subr.mxu0 0.0
        %2079 = vmatpush1.msra.mxu0 0.0
        %2080 = vmatprep.subr.mxu0 0.0
        %2081 = vmatpush1.msra.mxu0 0.0
        %2082 = vmatprep.subr.mxu0 0.0
        %2083 = vmatpush1.msra.mxu0 0.0
        %2084 = vmatprep.subr.mxu0 0.0
        %2085 = vmatpush1.msra.mxu0 0.0
        %2086 = vmatprep.subr.mxu0 0.0
        %2087 = vmatpush1.msra.mxu0 0.0
        %2088 = vmatprep.subr.mxu0 0.0
        %2089 = vmatpush1.msra.mxu0 0.0
        %2090 = vmatprep.subr.mxu0 0.0
        %2091 = vmatpush1.msra.mxu0 0.0
        %2092 = vmatprep.subr.mxu0 0.0
        %2093 = vmatpush1.msra.mxu0 0.0
        %2094 = vmatprep.subr.mxu0 0.0
        %2095 = vmatpush1.msra.mxu0 0.0
        %2096 = vmatprep.subr.mxu0 0.0
        %2097 = vmatpush1.msra.mxu0 0.0
        %2098 = vmatprep.subr.mxu0 0.0
        %2099 = vmatpush1.msra.mxu0 0.0
        %2100 = vmatprep.subr.mxu0 0.0
        %2101 = vmatpush1.msra.mxu0 0.0
        %2102 = vmatprep.subr.mxu0 0.0
        %2103 = vmatpush1.msra.mxu0 0.0
        %2104 = vmatprep.subr.mxu0 0.0
        %2105 = vmatpush1.msra.mxu0 0.0
        %2106 = vmatprep.subr.mxu0 0.0
        %2107 = vmatpush1.msra.mxu0 0.0
        %2108 = vmatprep.subr.mxu0 0.0
        %2109 = vmatpush1.msra.mxu0 0.0
        %2110 = vmatprep.subr.mxu0 0.0
        %2111 = vmatpush1.msra.mxu0 0.0
        %2112 = vmatprep.subr.mxu0 0.0
        %2113 = vmatpush1.msra.mxu0 0.0
        %2114 = vmatprep.subr.mxu0 0.0
        %2115 = vmatpush1.msra.mxu0 0.0
        %2116 = vmatprep.subr.mxu0 0.0
        %2117 = vmatpush1.msra.mxu0 0.0
        %2118 = vmatprep.subr.mxu0 0.0
        %2119 = vmatpush1.msra.mxu0 0.0
        %2120 = vmatprep.subr.mxu0 0.0
        %2121 = vmatpush1.msra.mxu0 0.0
        %2122 = vmatprep.subr.mxu0 0.0
        %2123 = vmatpush1.msra.mxu0 0.0
        %2124 = vmatprep.mubr.f32.mxu0 0.0
        %2125 = vmatmul.mubr.f32.gmra.mrb[0].mxu0 %v2054
        %v2126 = vpop.f32.mrb[0].mxu0
        %v2127 = vadd.f32 %v2040, %v2126
        %v2128 = vpop.f32.mrb[0].mxu0
        %2129 = vmatprep.mubr.f32.mxu0 0.0
        %2130 = vmatmul.mubr.f32.gmra.mrb[0].mxu0 %v2056
        %v2131 = vpop.f32.mrb[0].mxu0
        %v2132 = vadd.f32 %v2045, %v2131
        %v2133 = vpop.f32.mrb[0].mxu0
        %2134 = vmatprep.mubr.f32.mxu0 0.0
        %2135 = vmatmul.mubr.f32.gmra.mrb[0].mxu0 %v2058
        %v2136 = vpop.f32.mrb[0].mxu0
        %v2137 = vadd.f32 %v2050, %v2136
        %v2138 = vpop.f32.mrb[0].mxu0
        %2139 = vdwg.mxu0
        %s2140 = scalar_lea.vmem %s12, 64
        %v2141 = vld [vmem:[%s2140] sm:$0xff]
        %v2142 = vld [vmem:[%s2140 + $0x8] sm:$0xff]
        %v2143 = vld [vmem:[%s2140 + $0x10] sm:$0xff]
        %v2144 = vld [vmem:[%s2140 + $0x18] sm:$0xff]
        %v2145 = vsel %vm940, %v1952, 0
        %v2147 = vsel %vm940, %v1954, 0
        %v2150 = vsel %vm940, %v1957, 0
        %2152 = vmatprep.subr.mxu0 0.0
        %2153 = vmatpush1.msra.mxu0 %v2141
        %2154 = vmatprep.subr.mxu0 0.0
        %2155 = vmatpush1.msra.mxu0 %v2142
        %2156 = vmatprep.subr.mxu0 0.0
        %2157 = vmatpush1.msra.mxu0 %v2143
        %2158 = vmatprep.subr.mxu0 0.0
        %2159 = vmatpush1.msra.mxu0 %v2144
        %2160 = vmatprep.subr.mxu0 0.0
        %2161 = vmatpush1.msra.mxu0 0.0
        %2162 = vmatprep.subr.mxu0 0.0
        %2163 = vmatpush1.msra.mxu0 0.0
        %2164 = vmatprep.subr.mxu0 0.0
        %2165 = vmatpush1.msra.mxu0 0.0
        %2166 = vmatprep.subr.mxu0 0.0
        %2167 = vmatpush1.msra.mxu0 0.0
        %2168 = vmatprep.subr.mxu0 0.0
        %2169 = vmatpush1.msra.mxu0 0.0
        %2170 = vmatprep.subr.mxu0 0.0
        %2171 = vmatpush1.msra.mxu0 0.0
        %2172 = vmatprep.subr.mxu0 0.0
        %2173 = vmatpush1.msra.mxu0 0.0
        %2174 = vmatprep.subr.mxu0 0.0
        %2175 = vmatpush1.msra.mxu0 0.0
        %2176 = vmatprep.subr.mxu0 0.0
        %2177 = vmatpush1.msra.mxu0 0.0
        %2178 = vmatprep.subr.mxu0 0.0
        %2179 = vmatpush1.msra.mxu0 0.0
        %2180 = vmatprep.subr.mxu0 0.0
        %2181 = vmatpush1.msra.mxu0 0.0
        %2182 = vmatprep.subr.mxu0 0.0
        %2183 = vmatpush1.msra.mxu0 0.0
        %2184 = vmatprep.subr.mxu0 0.0
        %2185 = vmatpush1.msra.mxu0 0.0
        %2186 = vmatprep.subr.mxu0 0.0
        %2187 = vmatpush1.msra.mxu0 0.0
        %2188 = vmatprep.subr.mxu0 0.0
        %2189 = vmatpush1.msra.mxu0 0.0
        %2190 = vmatprep.subr.mxu0 0.0
        %2191 = vmatpush1.msra.mxu0 0.0
        %2192 = vmatprep.subr.mxu0 0.0
        %2193 = vmatpush1.msra.mxu0 0.0
        %2194 = vmatprep.subr.mxu0 0.0
        %2195 = vmatpush1.msra.mxu0 0.0
        %2196 = vmatprep.subr.mxu0 0.0
        %2197 = vmatpush1.msra.mxu0 0.0
        %2198 = vmatprep.subr.mxu0 0.0
        %2199 = vmatpush1.msra.mxu0 0.0
        %2200 = vmatprep.subr.mxu0 0.0
        %2201 = vmatpush1.msra.mxu0 0.0
        %2202 = vmatprep.subr.mxu0 0.0
        %2203 = vmatpush1.msra.mxu0 0.0
        %2204 = vmatprep.subr.mxu0 0.0
        %2205 = vmatpush1.msra.mxu0 0.0
        %2206 = vmatprep.subr.mxu0 0.0
        %2207 = vmatpush1.msra.mxu0 0.0
        %2208 = vmatprep.subr.mxu0 0.0
        %2209 = vmatpush1.msra.mxu0 0.0
        %2210 = vmatprep.subr.mxu0 0.0
        %2211 = vmatpush1.msra.mxu0 0.0
        %2212 = vmatprep.subr.mxu0 0.0
        %2213 = vmatpush1.msra.mxu0 0.0
        %2214 = vmatprep.subr.mxu0 0.0
        %2215 = vmatpush1.msra.mxu0 0.0
        %2216 = vmatprep.mubr.f32.mxu0 0.0
        %2217 = vmatmul.mubr.f32.gmra.mrb[0].mxu0 %v2145
        %v2218 = vpop.f32.mrb[0].mxu0
        %v2219 = vadd.f32 0.0, %v2218
        %v2220 = vpop.f32.mrb[0].mxu0
        %2221 = vmatprep.mubr.f32.mxu0 0.0
        %2222 = vmatmul.mubr.f32.gmra.mrb[0].mxu0 %v2147
        %v2223 = vpop.f32.mrb[0].mxu0
        %v2224 = vadd.f32 0.0, %v2223
        %v2225 = vpop.f32.mrb[0].mxu0
        %2226 = vmatprep.mubr.f32.mxu0 0.0
        %2227 = vmatmul.mubr.f32.gmra.mrb[0].mxu0 %v2150
        %v2228 = vpop.f32.mrb[0].mxu0
        %v2229 = vadd.f32 0.0, %v2228
        %v2230 = vpop.f32.mrb[0].mxu0
        %2231 = vdwg.mxu0
        %v2232 = vadd.f32 %v2127, %v2219
        %v2233 = vadd.f32 %v2132, %v2224
        %v2234 = vadd.f32 %v2137, %v2229
        %v2235 = vld [vmem:[%s13] sm:$0x1]
        %v2237 = vlaneseq
        %v2238 = vshrl.u32 %v2237, 7
        %v2239 = vsub.s32 0, %v2238
        %v2240 = vrot.slane %v2235, %v2239
        %v2242 = vadd.f32 %v2232, %v2240
        %v2243 = vadd.f32 %v2233, %v2240
        %v2244 = vadd.f32 %v2234, %v2240
        %v2245 = vmul.f32 %v2242, %v894
        %v2246 = vmul.f32 %v2243, %v899
        %v2247 = vmul.f32 %v2244, %v904
        %v2248 = vmax.f32 %v2245, 0.0
        %v2249 = vmax.f32 %v2246, 0.0
        %v2250 = vmax.f32 %v2247, 0.0
        %v2252 = vrot.slane %v2250, 7
        %v2256 = vrot.slane %v2248, 7
        %v2257 = vrot.slane %v2249, 7
        %v2258 = vsel %vm575, %v2256, %v2257
        %v2259 = vsel %vm575, %v2257, %v2252
        %v2261 = vsel %vm575, %v2252, %v2256
        %v2262 = vrot.slane %v2248, 1
        %v2263 = vrot.slane %v2249, 1
        %v2264 = vsel %vm582, %v2262, %v2263
        %v2265 = vrot.slane %v2250, 1
        %v2266 = vsel %vm582, %v2263, %v2265
        %v2269 = vsel %vm582, %v2265, %v2262
        %v2270 = vld [vmem:[%s14] sm:$0xff]
        %v2271 = vld [vmem:[%s14 + $0x8] sm:$0xff]
        %v2272 = vld [vmem:[%s14 + $0x10] sm:$0xff]
        %v2273 = vld [vmem:[%s14 + $0x18] sm:$0xff]
        %s2274 = scalar_lea.vmem %s14, 32
        %v2275 = vld [vmem:[%s2274] sm:$0xff]
        %v2276 = vld [vmem:[%s2274 + $0x8] sm:$0xff]
        %v2277 = vld [vmem:[%s2274 + $0x10] sm:$0xff]
        %v2278 = vld [vmem:[%s2274 + $0x18] sm:$0xff]
        %v2279 = vsel %vm940, %v2248, 0
        %v2281 = vsel %vm940, %v2249, 0
        %v2283 = vsel %vm940, %v2250, 0
        %2285 = vmatprep.subr.mxu0 0.0
        %2286 = vmatpush1.msra.mxu0 %v2275
        %2287 = vmatprep.subr.mxu0 0.0
        %2288 = vmatpush1.msra.mxu0 %v2276
        %2289 = vmatprep.subr.mxu0 0.0
        %2290 = vmatpush1.msra.mxu0 %v2277
        %2291 = vmatprep.subr.mxu0 0.0
        %2292 = vmatpush1.msra.mxu0 %v2278
        %2293 = vmatprep.subr.mxu0 0.0
        %2294 = vmatpush1.msra.mxu0 0.0
        %2295 = vmatprep.subr.mxu0 0.0
        %2296 = vmatpush1.msra.mxu0 0.0
        %2297 = vmatprep.subr.mxu0 0.0
        %2298 = vmatpush1.msra.mxu0 0.0
        %2299 = vmatprep.subr.mxu0 0.0
        %2300 = vmatpush1.msra.mxu0 0.0
        %2301 = vmatprep.subr.mxu0 0.0
        %2302 = vmatpush1.msra.mxu0 0.0
        %2303 = vmatprep.subr.mxu0 0.0
        %2304 = vmatpush1.msra.mxu0 0.0
        %2305 = vmatprep.subr.mxu0 0.0
        %2306 = vmatpush1.msra.mxu0 0.0
        %2307 = vmatprep.subr.mxu0 0.0
        %2308 = vmatpush1.msra.mxu0 0.0
        %2309 = vmatprep.subr.mxu0 0.0
        %2310 = vmatpush1.msra.mxu0 0.0
        %2311 = vmatprep.subr.mxu0 0.0
        %2312 = vmatpush1.msra.mxu0 0.0
        %2313 = vmatprep.subr.mxu0 0.0
        %2314 = vmatpush1.msra.mxu0 0.0
        %2315 = vmatprep.subr.mxu0 0.0
        %2316 = vmatpush1.msra.mxu0 0.0
        %2317 = vmatprep.subr.mxu0 0.0
        %2318 = vmatpush1.msra.mxu0 0.0
        %2319 = vmatprep.subr.mxu0 0.0
        %2320 = vmatpush1.msra.mxu0 0.0
        %2321 = vmatprep.subr.mxu0 0.0
        %2322 = vmatpush1.msra.mxu0 0.0
        %2323 = vmatprep.subr.mxu0 0.0
        %2324 = vmatpush1.msra.mxu0 0.0
        %2325 = vmatprep.subr.mxu0 0.0
        %2326 = vmatpush1.msra.mxu0 0.0
        %2327 = vmatprep.subr.mxu0 0.0
        %2328 = vmatpush1.msra.mxu0 0.0
        %2329 = vmatprep.subr.mxu0 0.0
        %2330 = vmatpush1.msra.mxu0 0.0
        %2331 = vmatprep.subr.mxu0 0.0
        %2332 = vmatpush1.msra.mxu0 0.0
        %2333 = vmatprep.subr.mxu0 0.0
        %2334 = vmatpush1.msra.mxu0 0.0
        %2335 = vmatprep.subr.mxu0 0.0
        %2336 = vmatpush1.msra.mxu0 0.0
        %2337 = vmatprep.subr.mxu0 0.0
        %2338 = vmatpush1.msra.mxu0 0.0
        %2339 = vmatprep.subr.mxu0 0.0
        %2340 = vmatpush1.msra.mxu0 0.0
        %2341 = vmatprep.subr.mxu0 0.0
        %2342 = vmatpush1.msra.mxu0 0.0
        %2343 = vmatprep.subr.mxu0 0.0
        %2344 = vmatpush1.msra.mxu0 0.0
        %2345 = vmatprep.subr.mxu0 0.0
        %2346 = vmatpush1.msra.mxu0 0.0
        %2347 = vmatprep.subr.mxu0 0.0
        %2348 = vmatpush1.msra.mxu0 0.0
        %2349 = vmatprep.mubr.f32.mxu0 0.0
        %2350 = vmatmul.mubr.f32.gmra.mrb[0].mxu0 %v2279
        %v2351 = vpop.f32.mrb[0].mxu0
        %v2352 = vadd.f32 0.0, %v2351
        %v2353 = vpop.f32.mrb[0].mxu0
        %2354 = vmatprep.mubr.f32.mxu0 0.0
        %2355 = vmatmul.mubr.f32.gmra.mrb[0].mxu0 %v2281
        %v2356 = vpop.f32.mrb[0].mxu0
        %v2357 = vadd.f32 0.0, %v2356
        %v2358 = vpop.f32.mrb[0].mxu0
        %2359 = vmatprep.mubr.f32.mxu0 0.0
        %2360 = vmatmul.mubr.f32.gmra.mrb[0].mxu0 %v2283
        %v2361 = vpop.f32.mrb[0].mxu0
        %v2362 = vadd.f32 0.0, %v2361
        %v2363 = vpop.f32.mrb[0].mxu0
        %2364 = vdwg.mxu0
        %v2366 = vsel %vm940, %v2261, 0
        %v2368 = vsel %vm940, %v2258, 0
        %v2370 = vsel %vm940, %v2259, 0
        %2372 = vmatprep.subr.mxu0 0.0
        %2373 = vmatpush1.msra.mxu0 %v2270
        %2374 = vmatprep.subr.mxu0 0.0
        %2375 = vmatpush1.msra.mxu0 %v2271
        %2376 = vmatprep.subr.mxu0 0.0
        %2377 = vmatpush1.msra.mxu0 %v2272
        %2378 = vmatprep.subr.mxu0 0.0
        %2379 = vmatpush1.msra.mxu0 %v2273
        %2380 = vmatprep.subr.mxu0 0.0
        %2381 = vmatpush1.msra.mxu0 0.0
        %2382 = vmatprep.subr.mxu0 0.0
        %2383 = vmatpush1.msra.mxu0 0.0
        %2384 = vmatprep.subr.mxu0 0.0
        %2385 = vmatpush1.msra.mxu0 0.0
        %2386 = vmatprep.subr.mxu0 0.0
        %2387 = vmatpush1.msra.mxu0 0.0
        %2388 = vmatprep.subr.mxu0 0.0
        %2389 = vmatpush1.msra.mxu0 0.0
        %2390 = vmatprep.subr.mxu0 0.0
        %2391 = vmatpush1.msra.mxu0 0.0
        %2392 = vmatprep.subr.mxu0 0.0
        %2393 = vmatpush1.msra.mxu0 0.0
        %2394 = vmatprep.subr.mxu0 0.0
        %2395 = vmatpush1.msra.mxu0 0.0
        %2396 = vmatprep.subr.mxu0 0.0
        %2397 = vmatpush1.msra.mxu0 0.0
        %2398 = vmatprep.subr.mxu0 0.0
        %2399 = vmatpush1.msra.mxu0 0.0
        %2400 = vmatprep.subr.mxu0 0.0
        %2401 = vmatpush1.msra.mxu0 0.0
        %2402 = vmatprep.subr.mxu0 0.0
        %2403 = vmatpush1.msra.mxu0 0.0
        %2404 = vmatprep.subr.mxu0 0.0
        %2405 = vmatpush1.msra.mxu0 0.0
        %2406 = vmatprep.subr.mxu0 0.0
        %2407 = vmatpush1.msra.mxu0 0.0
        %2408 = vmatprep.subr.mxu0 0.0
        %2409 = vmatpush1.msra.mxu0 0.0
        %2410 = vmatprep.subr.mxu0 0.0
        %2411 = vmatpush1.msra.mxu0 0.0
        %2412 = vmatprep.subr.mxu0 0.0
        %2413 = vmatpush1.msra.mxu0 0.0
        %2414 = vmatprep.subr.mxu0 0.0
        %2415 = vmatpush1.msra.mxu0 0.0
        %2416 = vmatprep.subr.mxu0 0.0
        %2417 = vmatpush1.msra.mxu0 0.0
        %2418 = vmatprep.subr.mxu0 0.0
        %2419 = vmatpush1.msra.mxu0 0.0
        %2420 = vmatprep.subr.mxu0 0.0
        %2421 = vmatpush1.msra.mxu0 0.0
        %2422 = vmatprep.subr.mxu0 0.0
        %2423 = vmatpush1.msra.mxu0 0.0
        %2424 = vmatprep.subr.mxu0 0.0
        %2425 = vmatpush1.msra.mxu0 0.0
        %2426 = vmatprep.subr.mxu0 0.0
        %2427 = vmatpush1.msra.mxu0 0.0
        %2428 = vmatprep.subr.mxu0 0.0
        %2429 = vmatpush1.msra.mxu0 0.0
        %2430 = vmatprep.subr.mxu0 0.0
        %2431 = vmatpush1.msra.mxu0 0.0
        %2432 = vmatprep.subr.mxu0 0.0
        %2433 = vmatpush1.msra.mxu0 0.0
        %2434 = vmatprep.subr.mxu0 0.0
        %2435 = vmatpush1.msra.mxu0 0.0
        %2436 = vmatprep.mubr.f32.mxu0 0.0
        %2437 = vmatmul.mubr.f32.gmra.mrb[0].mxu0 %v2366
        %v2438 = vpop.f32.mrb[0].mxu0
        %v2439 = vadd.f32 %v2352, %v2438
        %v2440 = vpop.f32.mrb[0].mxu0
        %2441 = vmatprep.mubr.f32.mxu0 0.0
        %2442 = vmatmul.mubr.f32.gmra.mrb[0].mxu0 %v2368
        %v2443 = vpop.f32.mrb[0].mxu0
        %v2444 = vadd.f32 %v2357, %v2443
        %v2445 = vpop.f32.mrb[0].mxu0
        %2446 = vmatprep.mubr.f32.mxu0 0.0
        %2447 = vmatmul.mubr.f32.gmra.mrb[0].mxu0 %v2370
        %v2448 = vpop.f32.mrb[0].mxu0
        %v2449 = vadd.f32 %v2362, %v2448
        %v2450 = vpop.f32.mrb[0].mxu0
        %2451 = vdwg.mxu0
        %s2452 = scalar_lea.vmem %s14, 64
        %v2453 = vld [vmem:[%s2452] sm:$0xff]
        %v2454 = vld [vmem:[%s2452 + $0x8] sm:$0xff]
        %v2455 = vld [vmem:[%s2452 + $0x10] sm:$0xff]
        %v2456 = vld [vmem:[%s2452 + $0x18] sm:$0xff]
        %v2457 = vsel %vm940, %v2264, 0
        %v2459 = vsel %vm940, %v2266, 0
        %v2462 = vsel %vm940, %v2269, 0
        %2464 = vmatprep.subr.mxu0 0.0
        %2465 = vmatpush1.msra.mxu0 %v2453
        %2466 = vmatprep.subr.mxu0 0.0
        %2467 = vmatpush1.msra.mxu0 %v2454
        %2468 = vmatprep.subr.mxu0 0.0
        %2469 = vmatpush1.msra.mxu0 %v2455
        %2470 = vmatprep.subr.mxu0 0.0
        %2471 = vmatpush1.msra.mxu0 %v2456
        %2472 = vmatprep.subr.mxu0 0.0
        %2473 = vmatpush1.msra.mxu0 0.0
        %2474 = vmatprep.subr.mxu0 0.0
        %2475 = vmatpush1.msra.mxu0 0.0
        %2476 = vmatprep.subr.mxu0 0.0
        %2477 = vmatpush1.msra.mxu0 0.0
        %2478 = vmatprep.subr.mxu0 0.0
        %2479 = vmatpush1.msra.mxu0 0.0
        %2480 = vmatprep.subr.mxu0 0.0
        %2481 = vmatpush1.msra.mxu0 0.0
        %2482 = vmatprep.subr.mxu0 0.0
        %2483 = vmatpush1.msra.mxu0 0.0
        %2484 = vmatprep.subr.mxu0 0.0
        %2485 = vmatpush1.msra.mxu0 0.0
        %2486 = vmatprep.subr.mxu0 0.0
        %2487 = vmatpush1.msra.mxu0 0.0
        %2488 = vmatprep.subr.mxu0 0.0
        %2489 = vmatpush1.msra.mxu0 0.0
        %2490 = vmatprep.subr.mxu0 0.0
        %2491 = vmatpush1.msra.mxu0 0.0
        %2492 = vmatprep.subr.mxu0 0.0
        %2493 = vmatpush1.msra.mxu0 0.0
        %2494 = vmatprep.subr.mxu0 0.0
        %2495 = vmatpush1.msra.mxu0 0.0
        %2496 = vmatprep.subr.mxu0 0.0
        %2497 = vmatpush1.msra.mxu0 0.0
        %2498 = vmatprep.subr.mxu0 0.0
        %2499 = vmatpush1.msra.mxu0 0.0
        %2500 = vmatprep.subr.mxu0 0.0
        %2501 = vmatpush1.msra.mxu0 0.0
        %2502 = vmatprep.subr.mxu0 0.0
        %2503 = vmatpush1.msra.mxu0 0.0
        %2504 = vmatprep.subr.mxu0 0.0
        %2505 = vmatpush1.msra.mxu0 0.0
        %2506 = vmatprep.subr.mxu0 0.0
        %2507 = vmatpush1.msra.mxu0 0.0
        %2508 = vmatprep.subr.mxu0 0.0
        %2509 = vmatpush1.msra.mxu0 0.0
        %2510 = vmatprep.subr.mxu0 0.0
        %2511 = vmatpush1.msra.mxu0 0.0
        %2512 = vmatprep.subr.mxu0 0.0
        %2513 = vmatpush1.msra.mxu0 0.0
        %2514 = vmatprep.subr.mxu0 0.0
        %2515 = vmatpush1.msra.mxu0 0.0
        %2516 = vmatprep.subr.mxu0 0.0
        %2517 = vmatpush1.msra.mxu0 0.0
        %2518 = vmatprep.subr.mxu0 0.0
        %2519 = vmatpush1.msra.mxu0 0.0
        %2520 = vmatprep.subr.mxu0 0.0
        %2521 = vmatpush1.msra.mxu0 0.0
        %2522 = vmatprep.subr.mxu0 0.0
        %2523 = vmatpush1.msra.mxu0 0.0
        %2524 = vmatprep.subr.mxu0 0.0
        %2525 = vmatpush1.msra.mxu0 0.0
        %2526 = vmatprep.subr.mxu0 0.0
        %2527 = vmatpush1.msra.mxu0 0.0
        %2528 = vmatprep.mubr.f32.mxu0 0.0
        %2529 = vmatmul.mubr.f32.gmra.mrb[0].mxu0 %v2457
        %v2530 = vpop.f32.mrb[0].mxu0
        %v2531 = vadd.f32 0.0, %v2530
        %v2532 = vpop.f32.mrb[0].mxu0
        %2533 = vmatprep.mubr.f32.mxu0 0.0
        %2534 = vmatmul.mubr.f32.gmra.mrb[0].mxu0 %v2459
        %v2535 = vpop.f32.mrb[0].mxu0
        %v2536 = vadd.f32 0.0, %v2535
        %v2537 = vpop.f32.mrb[0].mxu0
        %2538 = vmatprep.mubr.f32.mxu0 0.0
        %2539 = vmatmul.mubr.f32.gmra.mrb[0].mxu0 %v2462
        %v2540 = vpop.f32.mrb[0].mxu0
        %v2541 = vadd.f32 0.0, %v2540
        %v2542 = vpop.f32.mrb[0].mxu0
        %2543 = vdwg.mxu0
        %v2544 = vadd.f32 %v2439, %v2531
        %v2545 = vadd.f32 %v2444, %v2536
        %v2546 = vadd.f32 %v2449, %v2541
        %v2547 = vld [vmem:[%s15] sm:$0x1]
        %v2549 = vlaneseq
        %v2550 = vshrl.u32 %v2549, 7
        %v2551 = vsub.s32 0, %v2550
        %v2552 = vrot.slane %v2547, %v2551
        %v2554 = vadd.f32 %v2544, %v2552
        %v2555 = vadd.f32 %v2545, %v2552
        %v2556 = vadd.f32 %v2546, %v2552
        %v2557 = vmul.f32 %v2554, %v894
        %v2558 = vmul.f32 %v2555, %v899
        %v2559 = vmul.f32 %v2556, %v904
        %s2560 = sld [smem:[#allocation3 + %s41]]
        %v2561 = vstv %s2560
        %v2562 = vmul.f32 %v2557, %v2561
        %v2563 = vmul.f32 %v2558, %v2561
        %v2564 = vmul.f32 %v2559, %v2561
        %v2565 = vmax.f32 %v2562, 0.0
        %v2566 = vmax.f32 %v2563, 0.0
        %v2567 = vmax.f32 %v2564, 0.0
        %2568 = vst [vmem:[%s549] sm:$0xff] %v2565
        %2569 = vst [vmem:[%s549 + $0x8] sm:$0xff] %v2566
        %2570 = vst [vmem:[%s549 + $0x10] sm:$0xff] %v2567
        %s2571 = sand.u32 %s374, 1
        %s2572 = scalar_lea.sflag [#allocation5], %s2571
        %s2573 = sand.u32 %s374, 1
        %s2574 = smul.addr %s2573, 24
        %s2575 = scalar_lea.vmem [#allocation4], %s2574
        %s2576 = sand.u32 %s400, 1
        %s2577 = scalar_lea.sflag [#allocation7], %s2576
        %s2578 = sand.u32 %s400, 1
        %s2579 = smul.addr %s2578, 24
        %s2580 = scalar_lea.vmem [#allocation6], %s2579
        // Predicated region
        $region81: #{tpu_custom_call.1} parent=79 // pred_check
          %p2581 = pneg %p384
        $region82: #{tpu_custom_call.1} parent=79 // pred_check_branch
          %2583 = sbr.rel (%p2581) target = $region84
        $region83: #{tpu_custom_call.1} parent=79 // pred_region
          %s2584 = smul.u32 3, %s41
          %s2586 = ssub.s32 384, 384
          %2587 = vsyncadd %s2572, %s2586
          %s2588 = smul.addr %s2584, 128
          %s2589 = scalar_lea.hbm %s16, %s2588
          %s2590 = sshll.u32 %s2575, 4
          %s2591 = int_to_ptr.vmem [resolvable:$true] %s2590
          %2596 = dma.vmem_to_hbm [thread:$0]  %s2591, 384, %s2589, %s2572, 128, 128, 8
        $region84: #{tpu_custom_call.1} parent=79 // pred_fallthru
          _
        // Predicated region
        $region85: #{tpu_custom_call.1} parent=79 // pred_check
          %p2597 = pneg %p410
        $region86: #{tpu_custom_call.1} parent=79 // pred_check_branch
          %2599 = sbr.rel (%p2597) target = $region88
        $region87: #{tpu_custom_call.1} parent=79 // pred_region
          %s2600 = smul.u32 3, %s41
          %s2602 = ssub.s32 384, 384
          %2603 = vsyncadd %s2577, %s2602
          %s2604 = smul.addr %s2600, 128
          %s2605 = scalar_lea.hbm %s17, %s2604
          %s2606 = sshll.u32 %s2580, 4
          %s2607 = int_to_ptr.vmem [resolvable:$true] %s2606
          %2612 = dma.vmem_to_hbm [thread:$0]  %s2607, 384, %s2605, %s2577, 128, 128, 8
        $region88: #{tpu_custom_call.1} parent=79 // pred_fallthru
          _
      $region80: #{tpu_custom_call.1} parent=5 // pred_fallthru
        _
      %p2613 = scmp.le.s32.totalorder 2, %s36
      // Predicated region
      $region89: #{tpu_custom_call.1} parent=5 // pred_check
        %p2614 = pneg %p2613
      $region90: #{tpu_custom_call.1} parent=5 // pred_check_branch
        %2616 = sbr.rel (%p2614) target = $region92
      $region91: #{tpu_custom_call.1} parent=5 // pred_region
        %s2617 = ssub.s32 %s36, 2
        // Predicated region
        $region93: #{tpu_custom_call.1} parent=91 // pred_check
          %p2618 = pneg %p390
        $region94: #{tpu_custom_call.1} parent=91 // pred_check_branch
          %2620 = sbr.rel (%p2618) target = $region96
        $region95: #{tpu_custom_call.1} parent=91 // pred_region
          %s2621 = sand.u32 %s375, 1
          %s2622 = scalar_lea.sflag [#allocation5], %s2621
          %s2623 = sand.u32 %s375, 1
          %s2624 = smul.addr %s2623, 24
          %s2625 = scalar_lea.vmem [#allocation4], %s2624
          %2626 = dma.done %s2622, 384
        $region96: #{tpu_custom_call.1} parent=91 // pred_fallthru
          _
        // Predicated region
        $region97: #{tpu_custom_call.1} parent=91 // pred_check
          %p2627 = pneg %p416
        $region98: #{tpu_custom_call.1} parent=91 // pred_check_branch
          %2629 = sbr.rel (%p2627) target = $region100
        $region99: #{tpu_custom_call.1} parent=91 // pred_region
          %s2630 = sand.u32 %s401, 1
          %s2631 = scalar_lea.sflag [#allocation7], %s2630
          %s2632 = sand.u32 %s401, 1
          %s2633 = smul.addr %s2632, 24
          %s2634 = scalar_lea.vmem [#allocation6], %s2633
          %2635 = dma.done %s2631, 384
        $region100: #{tpu_custom_call.1} parent=91 // pred_fallthru
          _
      $region92: #{tpu_custom_call.1} parent=5 // pred_fallthru
        _
    $region6: #{tpu_custom_call.1} parent=1 // loop_footer
      %s40 = sadd.s32 1, %s36
    $region7: #{tpu_custom_call.1} parent=1 // loop_footer_branch
      %35 = sbr.rel target = $region3
    $region8: #{tpu_custom_call.1} parent=1 // loop_exit
      _
    %2636 = vsyncpa [#allocation5], 1
    %s2637 = scalar_lea.sflag [#allocation5], 1
    %2638 = vsyncpa %s2637, 1
    %2639 = vsyncpa [#allocation7], 1
    %s2640 = scalar_lea.sflag [#allocation7], 1
    %2641 = vsyncpa %s2640, 1

</llo_original>
